<compile_context>
chip_gen: v7x
topology: tpu7x:2x2x1
jax: 0.10.0
libtpu: 0.0.40
codegen_flags: <defaults>
</compile_context>

<pallas_src>
import functools

import jax
import jax.numpy as jnp
from jax.experimental import pallas as pl
from jax.experimental.pallas import tpu as pltpu

C = 8.0  # class attribute `c` of the PyTorch module


def _rglru_kernel(x_ref, w_ref, b_ref, decay_ref, y_ref, h_ref):
    """One (batch-block, time-chunk) tile of the RG-LRU (time-major layout).

    x_ref    : (TB, BB, D)  input chunk (time-major)
    w_ref    : (D, 2H)      fused [Wa^T | Wx^T]      (mxu dtype)
    b_ref    : (1, 2H)      fused [ba | bx]          (f32)
    decay_ref: (1, H)       c * softplus(-Lambda)    (f32, time-invariant)
    y_ref    : (TB, BB, H)  output chunk (time-major)
    h_ref    : (BB, H)      VMEM scratch: recurrent state carried across time chunks
    """
    t = pl.program_id(1)

    # Correctness of the state carry relies on: time grid axis innermost
    # (fastest-varying) AND marked "arbitrary" (never split across cores).
    @pl.when(t == 0)
    def _():
        h_ref[...] = jnp.zeros_like(h_ref)

    TB, BB, D = x_ref.shape
    H = decay_ref.shape[-1]

    # ---- gate precompute for the whole chunk: one fused MXU matmul ----
    x2d = x_ref[...].reshape(TB * BB, D)      # contiguous collapse (BB % 8 == 0 typical)
    gates = jnp.dot(x2d.astype(w_ref.dtype), w_ref[...],
                    preferred_element_type=jnp.float32) + b_ref[...]      # (TB*BB, 2H)
    # one fused sigmoid over both gate halves; tanh form = 1 EUP op per element
    sig = 0.5 * (jnp.tanh(0.5 * gates) + 1.0)
    rt = sig[:, :H]
    it = sig[:, H:]
    log_a = -decay_ref[...] * rt              # strictly negative
    a = jnp.exp(log_a)                        # per-step decay a_t in (0, 1]
    # literal torch form sqrt(1 - a_t**2); a <= 1 so max() only guards rounding
    s = jnp.sqrt(jnp.maximum(1.0 - a * a, 0.0))
    b = s * (it * x2d)                        # drive b_t   (requires H == D)

    a = a.reshape(TB, BB, H)
    b = b.reshape(TB, BB, H)

    # ---- recurrence: log2(TB)-depth inclusive associative scan over time ----
    # after the scan: a[k] = prod_{j<=k} a_j ; b[k] = h_k assuming h_(-1) = 0
    shift = 1
    while shift < TB:
        ones = jnp.ones((shift, BB, H), jnp.float32)
        zeros = jnp.zeros((shift, BB, H), jnp.float32)
        a_prev = jnp.concatenate([ones, a[:-shift]], axis=0)
        b_prev = jnp.concatenate([zeros, b[:-shift]], axis=0)
        a, b = a * a_prev, a * b_prev + b     # RHS uses the pre-update a (tuple eval)
        shift *= 2

    h_prev = h_ref[...]                       # (BB, H) state carried from prev chunk
    y = a * h_prev[None, :, :] + b            # (TB, BB, H)
    y_ref[...] = y
    h_ref[...] = y[TB - 1]


def _pick_time_block(T, cap=128):
    """Largest divisor of T that is <= cap (time chunk length per grid step)."""
    for cand in range(min(cap, T), 0, -1):
        if T % cand == 0:
            return cand
    return 1


def _pick_batch_block(B, cap=64):
    """Batch block: multiple of 8 (sublane aligned) when possible, <= cap, preferring
    >= 2 programs on the parallel grid axis (v7x megacore) when batch permits."""
    if B % 8 != 0:
        return B  # block dim == full array dim is always a legal BlockSpec
    best = 8
    for cand in range(8, min(cap, B) + 1, 8):
        if B % cand == 0:
            best = cand
    if best == B and B >= 16 and (B // 2) % 8 == 0:
        best = B // 2  # keep the "parallel" axis length >= 2 for megacore
    return best


@functools.partial(jax.jit, static_argnames=("mxu_dtype",))
def rglru_forward(x, Wa, Wx, ba, bx, Lambda, *, mxu_dtype=jnp.float32):
    """RG-LRU forward. x: (B, T, D) f32 -> y: (B, T, H) f32 (H == D, see NOTE)."""
    B, T, D = x.shape
    H = Wa.shape[0]
    # TODO(synk): expansion_factor > 1 needs a defined projection of xt to H; the
    # PyTorch forward's `it * xt` broadcast only works for hidden_dim == D.
    assert H == D, "forward's `it * xt` broadcast requires hidden_dim == D"

    tb = _pick_time_block(T)
    bb = _pick_batch_block(B)

    # Fused gate weights/biases; decay is time-invariant so softplus is hoisted here.
    w_fused = jnp.concatenate([Wa.T, Wx.T], axis=1).astype(mxu_dtype)      # (D, 2H)
    b_fused = jnp.concatenate([ba, bx]).reshape(1, 2 * H).astype(jnp.float32)
    decay = (C * jax.nn.softplus(-Lambda)).reshape(1, H).astype(jnp.float32)

    # Time-major layout: each timestep inside a chunk is one contiguous (bb, H) slab.
    x_tm = jnp.transpose(x, (1, 0, 2))                                     # (T, B, D)

    # ---- explicit VMEM budget: double-buffered blocks + weights + chunk temporaries ----
    f32b = 4
    x_blk = tb * bb * D * f32b
    y_blk = tb * bb * H * f32b
    w_b = D * 2 * H * jnp.dtype(mxu_dtype).itemsize
    temps = 10 * tb * bb * max(D, H) * f32b      # gates + a/b + scan temporaries
    vmem_limit = int(min(max(2 * x_blk + 2 * y_blk + 2 * w_b + temps + (2 << 20),
                             32 << 20), 100 << 20))

    grid = (B // bb, T // tb)  # batch outer ("parallel"), time inner ("arbitrary")
    y_tm = pl.pallas_call(
        _rglru_kernel,
        out_shape=jax.ShapeDtypeStruct((T, B, H), jnp.float32),
        grid_spec=pltpu.PrefetchScalarGridSpec(
            num_scalar_prefetch=0,
            grid=grid,
            in_specs=[
                pl.BlockSpec((tb, bb, D), lambda b, t: (t, b, 0)),   # x chunk
                # NOTE: for production-size D/H add pipeline_mode=pl.Buffered(1) (or
                # bf16 weights, which mxu_dtype already gives) so the resident weight
                # slab is not double-buffered on v7x's 64 MiB VMEM.
                pl.BlockSpec((D, 2 * H), lambda b, t: (0, 0)),       # fused weights
                pl.BlockSpec((1, 2 * H), lambda b, t: (0, 0)),       # fused biases
                pl.BlockSpec((1, H), lambda b, t: (0, 0)),           # decay
            ],
            out_specs=pl.BlockSpec((tb, bb, H), lambda b, t: (t, b, 0)),
            scratch_shapes=[
                pltpu.VMEM((bb, H), jnp.float32),                    # recurrent state
            ],
        ),
        compiler_params=pltpu.CompilerParams(
            dimension_semantics=("parallel", "arbitrary"),
            vmem_limit_bytes=vmem_limit,
        ),
    )(x_tm, w_fused, b_fused, decay)
    return jnp.transpose(y_tm, (1, 0, 2))


def _reference(x, Wa, Wx, ba, bx, Lambda):
    """Pure-JAX mirror of the PyTorch forward loop (f32, highest matmul precision)."""
    decay = C * jax.nn.softplus(-Lambda)
    hp = jax.lax.Precision.HIGHEST

    def step(h, xt):
        rt = jax.nn.sigmoid(jnp.dot(xt, Wa.T, precision=hp) + ba)
        it = jax.nn.sigmoid(jnp.dot(xt, Wx.T, precision=hp) + bx)
        at = jnp.exp(-decay * rt)
        h = at * h + jnp.sqrt(1.0 - at ** 2) * (it * xt)
        return h, h

    h0 = jnp.zeros((x.shape[0], Wa.shape[0]), jnp.float32)
    _, ys = jax.lax.scan(step, h0, jnp.transpose(x, (1, 0, 2)))
    return jnp.transpose(ys, (1, 0, 2))


if __name__ == "__main__":
    # Module config with expansion_factor = 1 so hidden_dim == D (see NOTE above).
    B, T, D = 8, 64, 128
    H = D

    key = jax.random.PRNGKey(0)
    kx, kwa, kwx, kba, kbx, klam = jax.random.split(key, 6)

    x = jax.random.normal(kx, (B, T, D), dtype=jnp.float32)

    # Deterministic parameter init mirroring reset_parameters():
    Wa = jax.random.normal(kwa, (H, D), dtype=jnp.float32) / jnp.sqrt(jnp.float32(D))
    Wx = jax.random.normal(kwx, (H, D), dtype=jnp.float32) / jnp.sqrt(jnp.float32(D))
    # ba/bx are torch.empty (never re-initialized) in the original; use small normals.
    ba = 0.1 * jax.random.normal(kba, (H,), dtype=jnp.float32)
    bx = 0.1 * jax.random.normal(kbx, (H,), dtype=jnp.float32)
    lam_u = jax.random.uniform(klam, (H,), minval=0.9, maxval=0.999, dtype=jnp.float32)
    Lambda = -jnp.log(lam_u ** (-1.0 / C) - 1.0)

    y_ref = jax.block_until_ready(_reference(x, Wa, Wx, ba, bx, Lambda))

    # f32 MXU path (faithful gate math).
    y32 = jax.block_until_ready(
        rglru_forward(x, Wa, Wx, ba, bx, Lambda, mxu_dtype=jnp.float32))
    assert y32.shape == (B, T, H), y32.shape
    err32 = float(jnp.max(jnp.abs(y32 - y_ref)))
    assert jnp.allclose(y32, y_ref, atol=2e-3, rtol=2e-3), err32

    # bf16-staged MXU path (performance option); everything after the dot stays f32.
    y16 = jax.block_until_ready(
        rglru_forward(x, Wa, Wx, ba, bx, Lambda, mxu_dtype=jnp.bfloat16))
    err16 = float(jnp.max(jnp.abs(y16 - y_ref)))
    assert jnp.allclose(y16, y_ref, atol=5e-2, rtol=5e-2), err16

    print("KERNEL_OK")
</pallas_src>

<mosaic_0001>
module attributes {stable_mosaic.version = 11 : i64} {
  func.func @_rglru_kernel(%arg0: i32, %arg1: i32, %arg2: memref<64x8x128xf32, #tpu.memory_space<vmem>>, %arg3: memref<128x256xf32, #tpu.memory_space<vmem>>, %arg4: memref<1x256xf32, #tpu.memory_space<vmem>>, %arg5: memref<1x128xf32, #tpu.memory_space<vmem>>, %arg6: memref<64x8x128xf32, #tpu.memory_space<vmem>>, %arg7: memref<8x128xf32, #tpu.memory_space<vmem>>) attributes {dimension_semantics = [#tpu.dimension_semantics<parallel>, #tpu.dimension_semantics<arbitrary>], iteration_bounds = array<i64: 1, 1>, scalar_prefetch = 0 : i64, scratch_operands = 1 : i64, tpu.core_type = #tpu.core_type<tc>, window_params = [{transform_indices = @transform_0, window_bounds = array<i64: 64, 8, 128>}, {pipeline_mode = #tpu.pipeline_mode<synchronous>, transform_indices = @transform_1, window_bounds = array<i64: 128, 256>}, {pipeline_mode = #tpu.pipeline_mode<synchronous>, transform_indices = @transform_2, window_bounds = array<i64: 1, 256>}, {pipeline_mode = #tpu.pipeline_mode<synchronous>, transform_indices = @transform_3, window_bounds = array<i64: 1, 128>}, {transform_indices = @transform_4, window_bounds = array<i64: 64, 8, 128>}]} {
    %c0_i32 = arith.constant 0 : i32
    %0 = arith.cmpi eq, %arg1, %c0_i32 : i32
    %1 = arith.extui %0 : i1 to i32
    %c0_i32_0 = arith.constant 0 : i32
    %2 = arith.cmpi ne, %1, %c0_i32_0 : i32
    scf.if %2 {
      %cst_34 = arith.constant 0.000000e+00 : f32
      %98 = vector.broadcast %cst_34 : f32 to vector<8x128xf32>
      %c0_35 = arith.constant 0 : index
      %c0_36 = arith.constant 0 : index
      %99 = vector.load %arg7[%c0_35, %c0_36] : memref<8x128xf32, #tpu.memory_space<vmem>>, vector<8x128xf32>
      tpu.vector_store %arg7[%c0_35, %c0_36], %98 {strides = array<i32>} : memref<8x128xf32, #tpu.memory_space<vmem>>, vector<8x128xf32>,
    } else {
    }
    %c0 = arith.constant 0 : index
    %c0_1 = arith.constant 0 : index
    %c0_2 = arith.constant 0 : index
    %3 = vector.load %arg2[%c0, %c0_1, %c0_2] : memref<64x8x128xf32, #tpu.memory_space<vmem>>, vector<64x8x128xf32>
    %4 = vector.shape_cast %3 : vector<64x8x128xf32> to vector<512x128xf32>
    %c0_3 = arith.constant 0 : index
    %c0_4 = arith.constant 0 : index
    %5 = vector.load %arg3[%c0_3, %c0_4] : memref<128x256xf32, #tpu.memory_space<vmem>>, vector<128x256xf32>
    %cst = arith.constant dense<0.000000e+00> : vector<512x256xf32>
    %6 = tpu.matmul %4, %5, %cst {dimension_numbers = #tpu.dot_dimension_numbers<[1], [0], [0], [1], [0, 0, 1, 1], [], []>} : vector<512x128xf32>, vector<128x256xf32>, vector<512x256xf32> -> vector<512x256xf32>
    %c0_5 = arith.constant 0 : index
    %c0_6 = arith.constant 0 : index
    %7 = vector.load %arg4[%c0_5, %c0_6] : memref<1x256xf32, #tpu.memory_space<vmem>>, vector<1x256xf32>
    %8 = vector.broadcast %7 : vector<1x256xf32> to vector<512x256xf32>
    %9 = arith.addf %6, %8 : vector<512x256xf32>
    %cst_7 = arith.constant 5.000000e-01 : f32
    %10 = vector.broadcast %cst_7 : f32 to vector<512x256xf32>
    %11 = arith.mulf %10, %9 : vector<512x256xf32>
    %12 = math.tanh %11 : vector<512x256xf32>
    %cst_8 = arith.constant 1.000000e+00 : f32
    %13 = vector.broadcast %cst_8 : f32 to vector<512x256xf32>
    %14 = arith.addf %12, %13 : vector<512x256xf32>
    %cst_9 = arith.constant 5.000000e-01 : f32
    %15 = vector.broadcast %cst_9 : f32 to vector<512x256xf32>
    %16 = arith.mulf %15, %14 : vector<512x256xf32>
    %17 = vector.extract_strided_slice %16 {offsets = [0, 0], sizes = [512, 128], strides = [1, 1]} : vector<512x256xf32> to vector<512x128xf32>
    %18 = vector.extract_strided_slice %16 {offsets = [0, 128], sizes = [512, 128], strides = [1, 1]} : vector<512x256xf32> to vector<512x128xf32>
    %c0_10 = arith.constant 0 : index
    %c0_11 = arith.constant 0 : index
    %19 = vector.load %arg5[%c0_10, %c0_11] : memref<1x128xf32, #tpu.memory_space<vmem>>, vector<1x128xf32>
    %cst_12 = arith.constant 0.000000e+00 : f32
    %20 = vector.broadcast %cst_12 : f32 to vector<1x128xf32>
    %21 = arith.subf %20, %19 : vector<1x128xf32>
    %22 = vector.broadcast %21 : vector<1x128xf32> to vector<512x128xf32>
    %23 = arith.mulf %22, %17 : vector<512x128xf32>
    %24 = math.exp %23 : vector<512x128xf32>
    %25 = arith.mulf %24, %24 : vector<512x128xf32>
    %cst_13 = arith.constant 1.000000e+00 : f32
    %26 = vector.broadcast %cst_13 : f32 to vector<512x128xf32>
    %27 = arith.subf %26, %25 : vector<512x128xf32>
    %cst_14 = arith.constant 0.000000e+00 : f32
    %28 = vector.broadcast %cst_14 : f32 to vector<512x128xf32>
    %29 = arith.maximumf %27, %28 : vector<512x128xf32>
    %30 = math.sqrt %29 : vector<512x128xf32>
    %31 = arith.mulf %18, %4 : vector<512x128xf32>
    %32 = arith.mulf %30, %31 : vector<512x128xf32>
    %33 = vector.shape_cast %24 : vector<512x128xf32> to vector<64x8x128xf32>
    %34 = vector.shape_cast %32 : vector<512x128xf32> to vector<64x8x128xf32>
    %cst_15 = arith.constant 1.000000e+00 : f32
    %35 = vector.broadcast %cst_15 : f32 to vector<1x8x128xf32>
    %cst_16 = arith.constant 0.000000e+00 : f32
    %36 = vector.broadcast %cst_16 : f32 to vector<1x8x128xf32>
    %37 = vector.extract_strided_slice %33 {offsets = [0, 0, 0], sizes = [63, 8, 128], strides = [1, 1, 1]} : vector<64x8x128xf32> to vector<63x8x128xf32>
    %38 = tpu.concatenate %35, %37 in 0 : vector<1x8x128xf32>, vector<63x8x128xf32> -> vector<64x8x128xf32>
    %39 = vector.extract_strided_slice %34 {offsets = [0, 0, 0], sizes = [63, 8, 128], strides = [1, 1, 1]} : vector<64x8x128xf32> to vector<63x8x128xf32>
    %40 = tpu.concatenate %36, %39 in 0 : vector<1x8x128xf32>, vector<63x8x128xf32> -> vector<64x8x128xf32>
    %41 = arith.mulf %33, %38 : vector<64x8x128xf32>
    %42 = arith.mulf %33, %40 : vector<64x8x128xf32>
    %43 = arith.addf %42, %34 : vector<64x8x128xf32>
    %cst_17 = arith.constant 1.000000e+00 : f32
    %44 = vector.broadcast %cst_17 : f32 to vector<2x8x128xf32>
    %cst_18 = arith.constant 0.000000e+00 : f32
    %45 = vector.broadcast %cst_18 : f32 to vector<2x8x128xf32>
    %46 = vector.extract_strided_slice %41 {offsets = [0, 0, 0], sizes = [62, 8, 128], strides = [1, 1, 1]} : vector<64x8x128xf32> to vector<62x8x128xf32>
    %47 = tpu.concatenate %44, %46 in 0 : vector<2x8x128xf32>, vector<62x8x128xf32> -> vector<64x8x128xf32>
    %48 = vector.extract_strided_slice %43 {offsets = [0, 0, 0], sizes = [62, 8, 128], strides = [1, 1, 1]} : vector<64x8x128xf32> to vector<62x8x128xf32>
    %49 = tpu.concatenate %45, %48 in 0 : vector<2x8x128xf32>, vector<62x8x128xf32> -> vector<64x8x128xf32>
    %50 = arith.mulf %41, %47 : vector<64x8x128xf32>
    %51 = arith.mulf %41, %49 : vector<64x8x128xf32>
    %52 = arith.addf %51, %43 : vector<64x8x128xf32>
    %cst_19 = arith.constant 1.000000e+00 : f32
    %53 = vector.broadcast %cst_19 : f32 to vector<4x8x128xf32>
    %cst_20 = arith.constant 0.000000e+00 : f32
    %54 = vector.broadcast %cst_20 : f32 to vector<4x8x128xf32>
    %55 = vector.extract_strided_slice %50 {offsets = [0, 0, 0], sizes = [60, 8, 128], strides = [1, 1, 1]} : vector<64x8x128xf32> to vector<60x8x128xf32>
    %56 = tpu.concatenate %53, %55 in 0 : vector<4x8x128xf32>, vector<60x8x128xf32> -> vector<64x8x128xf32>
    %57 = vector.extract_strided_slice %52 {offsets = [0, 0, 0], sizes = [60, 8, 128], strides = [1, 1, 1]} : vector<64x8x128xf32> to vector<60x8x128xf32>
    %58 = tpu.concatenate %54, %57 in 0 : vector<4x8x128xf32>, vector<60x8x128xf32> -> vector<64x8x128xf32>
    %59 = arith.mulf %50, %56 : vector<64x8x128xf32>
    %60 = arith.mulf %50, %58 : vector<64x8x128xf32>
    %61 = arith.addf %60, %52 : vector<64x8x128xf32>
    %cst_21 = arith.constant 1.000000e+00 : f32
    %62 = vector.broadcast %cst_21 : f32 to vector<8x8x128xf32>
    %cst_22 = arith.constant 0.000000e+00 : f32
    %63 = vector.broadcast %cst_22 : f32 to vector<8x8x128xf32>
    %64 = vector.extract_strided_slice %59 {offsets = [0, 0, 0], sizes = [56, 8, 128], strides = [1, 1, 1]} : vector<64x8x128xf32> to vector<56x8x128xf32>
    %65 = tpu.concatenate %62, %64 in 0 : vector<8x8x128xf32>, vector<56x8x128xf32> -> vector<64x8x128xf32>
    %66 = vector.extract_strided_slice %61 {offsets = [0, 0, 0], sizes = [56, 8, 128], strides = [1, 1, 1]} : vector<64x8x128xf32> to vector<56x8x128xf32>
    %67 = tpu.concatenate %63, %66 in 0 : vector<8x8x128xf32>, vector<56x8x128xf32> -> vector<64x8x128xf32>
    %68 = arith.mulf %59, %65 : vector<64x8x128xf32>
    %69 = arith.mulf %59, %67 : vector<64x8x128xf32>
    %70 = arith.addf %69, %61 : vector<64x8x128xf32>
    %cst_23 = arith.constant 1.000000e+00 : f32
    %71 = vector.broadcast %cst_23 : f32 to vector<16x8x128xf32>
    %cst_24 = arith.constant 0.000000e+00 : f32
    %72 = vector.broadcast %cst_24 : f32 to vector<16x8x128xf32>
    %73 = vector.extract_strided_slice %68 {offsets = [0, 0, 0], sizes = [48, 8, 128], strides = [1, 1, 1]} : vector<64x8x128xf32> to vector<48x8x128xf32>
    %74 = tpu.concatenate %71, %73 in 0 : vector<16x8x128xf32>, vector<48x8x128xf32> -> vector<64x8x128xf32>
    %75 = vector.extract_strided_slice %70 {offsets = [0, 0, 0], sizes = [48, 8, 128], strides = [1, 1, 1]} : vector<64x8x128xf32> to vector<48x8x128xf32>
    %76 = tpu.concatenate %72, %75 in 0 : vector<16x8x128xf32>, vector<48x8x128xf32> -> vector<64x8x128xf32>
    %77 = arith.mulf %68, %74 : vector<64x8x128xf32>
    %78 = arith.mulf %68, %76 : vector<64x8x128xf32>
    %79 = arith.addf %78, %70 : vector<64x8x128xf32>
    %cst_25 = arith.constant 1.000000e+00 : f32
    %80 = vector.broadcast %cst_25 : f32 to vector<32x8x128xf32>
    %cst_26 = arith.constant 0.000000e+00 : f32
    %81 = vector.broadcast %cst_26 : f32 to vector<32x8x128xf32>
    %82 = vector.extract_strided_slice %77 {offsets = [0, 0, 0], sizes = [32, 8, 128], strides = [1, 1, 1]} : vector<64x8x128xf32> to vector<32x8x128xf32>
    %83 = tpu.concatenate %80, %82 in 0 : vector<32x8x128xf32>, vector<32x8x128xf32> -> vector<64x8x128xf32>
    %84 = vector.extract_strided_slice %79 {offsets = [0, 0, 0], sizes = [32, 8, 128], strides = [1, 1, 1]} : vector<64x8x128xf32> to vector<32x8x128xf32>
    %85 = tpu.concatenate %81, %84 in 0 : vector<32x8x128xf32>, vector<32x8x128xf32> -> vector<64x8x128xf32>
    %86 = arith.mulf %77, %83 : vector<64x8x128xf32>
    %87 = arith.mulf %77, %85 : vector<64x8x128xf32>
    %88 = arith.addf %87, %79 : vector<64x8x128xf32>
    %c0_27 = arith.constant 0 : index
    %c0_28 = arith.constant 0 : index
    %89 = vector.load %arg7[%c0_27, %c0_28] : memref<8x128xf32, #tpu.memory_space<vmem>>, vector<8x128xf32>
    %90 = vector.shape_cast %89 : vector<8x128xf32> to vector<1x8x128xf32>
    %91 = vector.broadcast %90 : vector<1x8x128xf32> to vector<64x8x128xf32>
    %92 = arith.mulf %86, %91 : vector<64x8x128xf32>
    %93 = arith.addf %92, %88 : vector<64x8x128xf32>
    %c0_29 = arith.constant 0 : index
    %c0_30 = arith.constant 0 : index
    %c0_31 = arith.constant 0 : index
    %94 = vector.load %arg6[%c0_29, %c0_30, %c0_31] : memref<64x8x128xf32, #tpu.memory_space<vmem>>, vector<64x8x128xf32>
    tpu.vector_store %arg6[%c0_29, %c0_30, %c0_31], %93 {strides = array<i32>} : memref<64x8x128xf32, #tpu.memory_space<vmem>>, vector<64x8x128xf32>,
    %95 = vector.extract_strided_slice %93 {offsets = [63, 0, 0], sizes = [1, 8, 128], strides = [1, 1, 1]} : vector<64x8x128xf32> to vector<1x8x128xf32>
    %96 = vector.shape_cast %95 : vector<1x8x128xf32> to vector<8x128xf32>
    %c0_32 = arith.constant 0 : index
    %c0_33 = arith.constant 0 : index
    %97 = vector.load %arg7[%c0_32, %c0_33] : memref<8x128xf32, #tpu.memory_space<vmem>>, vector<8x128xf32>
    tpu.vector_store %arg7[%c0_32, %c0_33], %96 {strides = array<i32>} : memref<8x128xf32, #tpu.memory_space<vmem>>, vector<8x128xf32>,
    return
  }
  func.func @transform_0(%arg0: i32, %arg1: i32) -> (i32, i32, i32) {
    %c0_i32 = arith.constant 0 : i32
    %c0_i32_0 = arith.constant 0 : i32
    return %arg1, %arg0, %c0_i32 : i32, i32, i32
  }
  func.func @transform_1(%arg0: i32, %arg1: i32) -> (i32, i32) {
    %c0_i32 = arith.constant 0 : i32
    %c0_i32_0 = arith.constant 0 : i32
    %c0_i32_1 = arith.constant 0 : i32
    return %c0_i32, %c0_i32_0 : i32, i32
  }
  func.func @transform_2(%arg0: i32, %arg1: i32) -> (i32, i32) {
    %c0_i32 = arith.constant 0 : i32
    %c0_i32_0 = arith.constant 0 : i32
    %c0_i32_1 = arith.constant 0 : i32
    return %c0_i32, %c0_i32_0 : i32, i32
  }
  func.func @transform_3(%arg0: i32, %arg1: i32) -> (i32, i32) {
    %c0_i32 = arith.constant 0 : i32
    %c0_i32_0 = arith.constant 0 : i32
    %c0_i32_1 = arith.constant 0 : i32
    return %c0_i32, %c0_i32_0 : i32, i32
  }
  func.func @transform_4(%arg0: i32, %arg1: i32) -> (i32, i32, i32) {
    %c0_i32 = arith.constant 0 : i32
    %c0_i32_0 = arith.constant 0 : i32
    return %arg1, %arg0, %c0_i32 : i32, i32, i32
  }
}

</mosaic_0001>

<llo_original>
// kernel: rglru_forward.1
$region0: #{rglru_forward.1}
  #allocation0 [shape = 'u32[]', space=smem, size = 0x4, offset = 0x4, fixed_abs, tag = 'smem constant byte address 0x4 - core index']
  #allocation1 [shape = 'u32[144,128]{1,0:T(1,128)}', space=vmem, size = 0x12000, scoped, tag = 'internal scratch']
  #allocation2 [shape = 'f32[8,128]{1,0:T(8,128)}', space=vmem, size = 0x1000, scoped, tag = 'scratch operand']
  %s0 = inlined_call_operand.vmem [shape: f32[64,8,128], index: 0, kind: input, shape index: {}]
  %s1 = inlined_call_operand.vmem [shape: f32[128,256], index: 1, kind: input, shape index: {}]
  %s2 = inlined_call_operand.vmem [shape: f32[1,256], index: 2, kind: input, shape index: {}]
  %s3 = inlined_call_operand.vmem [shape: f32[1,128], index: 3, kind: input, shape index: {}]
  %s4 = inlined_call_operand.vmem [shape: f32[64,8,128], index: 4, kind: output, shape index: {}]
  %s5 = sld [smem:[#allocation0]]
  $region30: #{rglru_forward.1} parent=0
    _
  %s7 = ssub.s32 1, %s5
  %s8 = scalar_select 0, %s7, %s5
  // Predicated region
  $region2: #{rglru_forward.1} parent=0 // pred_check
    _
  $region3: #{rglru_forward.1} parent=0 // pred_check_branch
    %10 = sbr.rel (0) target = $region5
  $region4: #{rglru_forward.1} parent=0 // pred_region
    _
  $region5: #{rglru_forward.1} parent=0 // pred_fallthru
    _
  // Predicated region
  $region6: #{rglru_forward.1} parent=0 // pred_check
    _
  $region7: #{rglru_forward.1} parent=0 // pred_check_branch
    %12 = sbr.rel (0) target = $region9
  $region8: #{rglru_forward.1} parent=0 // pred_region
    _
  $region9: #{rglru_forward.1} parent=0 // pred_fallthru
    _
  // Predicated region
  $region10: #{rglru_forward.1} parent=0 // pred_check
    _
  $region11: #{rglru_forward.1} parent=0 // pred_check_branch
    %14 = sbr.rel (0) target = $region13
  $region12: #{rglru_forward.1} parent=0 // pred_region
    _
  $region13: #{rglru_forward.1} parent=0 // pred_fallthru
    _
  // Predicated region
  $region14: #{rglru_forward.1} parent=0 // pred_check
    _
  $region15: #{rglru_forward.1} parent=0 // pred_check_branch
    %16 = sbr.rel (0) target = $region17
  $region16: #{rglru_forward.1} parent=0 // pred_region
    _
  $region17: #{rglru_forward.1} parent=0 // pred_fallthru
    _
  %p17 = scmp.eq.s32.totalorder 0, 0
  // Predicated region
  $region18: #{rglru_forward.1} parent=0 // pred_check
    %p18 = pneg %p17
  $region19: #{rglru_forward.1} parent=0 // pred_check_branch
    %20 = sbr.rel (%p18) target = $region21
  $region20: #{rglru_forward.1} parent=0 // pred_region
    %21 = vst [vmem:[#allocation2] sm:$0xff] 0.0
  $region21: #{rglru_forward.1} parent=0 // pred_fallthru
    _
  %v22 = vld [vmem:[%s0] sm:$0xff]
  %v23 = vld [vmem:[%s0 + $0x8] sm:$0xff]
  %v24 = vld [vmem:[%s0 + $0x10] sm:$0xff]
  %v25 = vld [vmem:[%s0 + $0x18] sm:$0xff]
  %v26 = vld [vmem:[%s0 + $0x20] sm:$0xff]
  %v27 = vld [vmem:[%s0 + $0x28] sm:$0xff]
  %v28 = vld [vmem:[%s0 + $0x30] sm:$0xff]
  %v29 = vld [vmem:[%s0 + $0x38] sm:$0xff]
  %v30 = vld [vmem:[%s0 + $0x40] sm:$0xff]
  %v31 = vld [vmem:[%s0 + $0x48] sm:$0xff]
  %v32 = vld [vmem:[%s0 + $0x50] sm:$0xff]
  %v33 = vld [vmem:[%s0 + $0x58] sm:$0xff]
  %v34 = vld [vmem:[%s0 + $0x60] sm:$0xff]
  %v35 = vld [vmem:[%s0 + $0x68] sm:$0xff]
  %v36 = vld [vmem:[%s0 + $0x70] sm:$0xff]
  %v37 = vld [vmem:[%s0 + $0x78] sm:$0xff]
  %v38 = vld [vmem:[%s0 + $0x80] sm:$0xff]
  %v39 = vld [vmem:[%s0 + $0x88] sm:$0xff]
  %v40 = vld [vmem:[%s0 + $0x90] sm:$0xff]
  %v41 = vld [vmem:[%s0 + $0x98] sm:$0xff]
  %v42 = vld [vmem:[%s0 + $0xa0] sm:$0xff]
  %v43 = vld [vmem:[%s0 + $0xa8] sm:$0xff]
  %v44 = vld [vmem:[%s0 + $0xb0] sm:$0xff]
  %v45 = vld [vmem:[%s0 + $0xb8] sm:$0xff]
  %v46 = vld [vmem:[%s0 + $0xc0] sm:$0xff]
  %v47 = vld [vmem:[%s0 + $0xc8] sm:$0xff]
  %v48 = vld [vmem:[%s0 + $0xd0] sm:$0xff]
  %v49 = vld [vmem:[%s0 + $0xd8] sm:$0xff]
  %v50 = vld [vmem:[%s0 + $0xe0] sm:$0xff]
  %v51 = vld [vmem:[%s0 + $0xe8] sm:$0xff]
  %v52 = vld [vmem:[%s0 + $0xf0] sm:$0xff]
  %v53 = vld [vmem:[%s0 + $0xf8] sm:$0xff]
  %v54 = vld [vmem:[%s0 + $0x100] sm:$0xff]
  %v55 = vld [vmem:[%s0 + $0x108] sm:$0xff]
  %v56 = vld [vmem:[%s0 + $0x110] sm:$0xff]
  %v57 = vld [vmem:[%s0 + $0x118] sm:$0xff]
  %v58 = vld [vmem:[%s0 + $0x120] sm:$0xff]
  %v59 = vld [vmem:[%s0 + $0x128] sm:$0xff]
  %v60 = vld [vmem:[%s0 + $0x130] sm:$0xff]
  %v61 = vld [vmem:[%s0 + $0x138] sm:$0xff]
  %v62 = vld [vmem:[%s0 + $0x140] sm:$0xff]
  %v63 = vld [vmem:[%s0 + $0x148] sm:$0xff]
  %v64 = vld [vmem:[%s0 + $0x150] sm:$0xff]
  %v65 = vld [vmem:[%s0 + $0x158] sm:$0xff]
  %v66 = vld [vmem:[%s0 + $0x160] sm:$0xff]
  %v67 = vld [vmem:[%s0 + $0x168] sm:$0xff]
  %v68 = vld [vmem:[%s0 + $0x170] sm:$0xff]
  %v69 = vld [vmem:[%s0 + $0x178] sm:$0xff]
  %v70 = vld [vmem:[%s0 + $0x180] sm:$0xff]
  %v71 = vld [vmem:[%s0 + $0x188] sm:$0xff]
  %v72 = vld [vmem:[%s0 + $0x190] sm:$0xff]
  %v73 = vld [vmem:[%s0 + $0x198] sm:$0xff]
  %v74 = vld [vmem:[%s0 + $0x1a0] sm:$0xff]
  %v75 = vld [vmem:[%s0 + $0x1a8] sm:$0xff]
  %v76 = vld [vmem:[%s0 + $0x1b0] sm:$0xff]
  %v77 = vld [vmem:[%s0 + $0x1b8] sm:$0xff]
  %v78 = vld [vmem:[%s0 + $0x1c0] sm:$0xff]
  %v79 = vld [vmem:[%s0 + $0x1c8] sm:$0xff]
  %v80 = vld [vmem:[%s0 + $0x1d0] sm:$0xff]
  %v81 = vld [vmem:[%s0 + $0x1d8] sm:$0xff]
  %v82 = vld [vmem:[%s0 + $0x1e0] sm:$0xff]
  %v83 = vld [vmem:[%s0 + $0x1e8] sm:$0xff]
  %v84 = vld [vmem:[%s0 + $0x1f0] sm:$0xff]
  %v85 = vld [vmem:[%s0 + $0x1f8] sm:$0xff]
  %v86 = vld [vmem:[%s1] sm:$0xff]
  %v87 = vld [vmem:[%s1 + $0x8] sm:$0xff]
  %v88 = vld [vmem:[%s1 + $0x10] sm:$0xff]
  %v89 = vld [vmem:[%s1 + $0x18] sm:$0xff]
  %v90 = vld [vmem:[%s1 + $0x20] sm:$0xff]
  %v91 = vld [vmem:[%s1 + $0x28] sm:$0xff]
  %v92 = vld [vmem:[%s1 + $0x30] sm:$0xff]
  %v93 = vld [vmem:[%s1 + $0x38] sm:$0xff]
  %v94 = vld [vmem:[%s1 + $0x40] sm:$0xff]
  %v95 = vld [vmem:[%s1 + $0x48] sm:$0xff]
  %v96 = vld [vmem:[%s1 + $0x50] sm:$0xff]
  %v97 = vld [vmem:[%s1 + $0x58] sm:$0xff]
  %v98 = vld [vmem:[%s1 + $0x60] sm:$0xff]
  %v99 = vld [vmem:[%s1 + $0x68] sm:$0xff]
  %v100 = vld [vmem:[%s1 + $0x70] sm:$0xff]
  %v101 = vld [vmem:[%s1 + $0x78] sm:$0xff]
  %v102 = vld [vmem:[%s1 + $0x80] sm:$0xff]
  %v103 = vld [vmem:[%s1 + $0x88] sm:$0xff]
  %v104 = vld [vmem:[%s1 + $0x90] sm:$0xff]
  %v105 = vld [vmem:[%s1 + $0x98] sm:$0xff]
  %v106 = vld [vmem:[%s1 + $0xa0] sm:$0xff]
  %v107 = vld [vmem:[%s1 + $0xa8] sm:$0xff]
  %v108 = vld [vmem:[%s1 + $0xb0] sm:$0xff]
  %v109 = vld [vmem:[%s1 + $0xb8] sm:$0xff]
  %v110 = vld [vmem:[%s1 + $0xc0] sm:$0xff]
  %v111 = vld [vmem:[%s1 + $0xc8] sm:$0xff]
  %v112 = vld [vmem:[%s1 + $0xd0] sm:$0xff]
  %v113 = vld [vmem:[%s1 + $0xd8] sm:$0xff]
  %v114 = vld [vmem:[%s1 + $0xe0] sm:$0xff]
  %v115 = vld [vmem:[%s1 + $0xe8] sm:$0xff]
  %v116 = vld [vmem:[%s1 + $0xf0] sm:$0xff]
  %v117 = vld [vmem:[%s1 + $0xf8] sm:$0xff]
  %v118 = vld [vmem:[%s2] sm:$0x3]
  %v120 = vlaneseq
  %v121 = vshrl.u32 %v120, 7
  %v122 = vsub.s32 0, %v121
  %v123 = vrot.slane %v118, %v122
  %v124 = vlaneseq
  %v125 = vshrl.u32 %v124, 7
  %v126 = vsub.s32 1, %v125
  %v127 = vrot.slane %v118, %v126
  %130 = vmatprep.subr.mxu0 %v87
  %131 = vmatpush1.msra.mxu0 %v86
  %132 = vmatprep.subr.mxu0 %v89
  %133 = vmatpush1.msra.mxu0 %v88
  %134 = vmatprep.subr.mxu0 %v91
  %135 = vmatpush1.msra.mxu0 %v90
  %136 = vmatprep.subr.mxu0 %v93
  %137 = vmatpush1.msra.mxu0 %v92
  %138 = vmatprep.subr.mxu0 %v95
  %139 = vmatpush1.msra.mxu0 %v94
  %140 = vmatprep.subr.mxu0 %v97
  %141 = vmatpush1.msra.mxu0 %v96
  %142 = vmatprep.subr.mxu0 %v99
  %143 = vmatpush1.msra.mxu0 %v98
  %144 = vmatprep.subr.mxu0 %v101
  %145 = vmatpush1.msra.mxu0 %v100
  %146 = vmatprep.subr.mxu0 %v103
  %147 = vmatpush1.msra.mxu0 %v102
  %148 = vmatprep.subr.mxu0 %v105
  %149 = vmatpush1.msra.mxu0 %v104
  %150 = vmatprep.subr.mxu0 %v107
  %151 = vmatpush1.msra.mxu0 %v106
  %152 = vmatprep.subr.mxu0 %v109
  %153 = vmatpush1.msra.mxu0 %v108
  %154 = vmatprep.subr.mxu0 %v111
  %155 = vmatpush1.msra.mxu0 %v110
  %156 = vmatprep.subr.mxu0 %v113
  %157 = vmatpush1.msra.mxu0 %v112
  %158 = vmatprep.subr.mxu0 %v115
  %159 = vmatpush1.msra.mxu0 %v114
  %160 = vmatprep.subr.mxu0 %v117
  %161 = vmatpush1.msra.mxu0 %v116
  %162 = vmatprep.subr.mxu0 0.0
  %163 = vmatpush1.msra.mxu0 0.0
  %164 = vmatprep.subr.mxu0 0.0
  %165 = vmatpush1.msra.mxu0 0.0
  %166 = vmatprep.subr.mxu0 0.0
  %167 = vmatpush1.msra.mxu0 0.0
  %168 = vmatprep.subr.mxu0 0.0
  %169 = vmatpush1.msra.mxu0 0.0
  %170 = vmatprep.subr.mxu0 0.0
  %171 = vmatpush1.msra.mxu0 0.0
  %172 = vmatprep.subr.mxu0 0.0
  %173 = vmatpush1.msra.mxu0 0.0
  %174 = vmatprep.subr.mxu0 0.0
  %175 = vmatpush1.msra.mxu0 0.0
  %176 = vmatprep.subr.mxu0 0.0
  %177 = vmatpush1.msra.mxu0 0.0
  %178 = vmatprep.subr.mxu0 0.0
  %179 = vmatpush1.msra.mxu0 0.0
  %180 = vmatprep.subr.mxu0 0.0
  %181 = vmatpush1.msra.mxu0 0.0
  %182 = vmatprep.subr.mxu0 0.0
  %183 = vmatpush1.msra.mxu0 0.0
  %184 = vmatprep.subr.mxu0 0.0
  %185 = vmatpush1.msra.mxu0 0.0
  %186 = vmatprep.subr.mxu0 0.0
  %187 = vmatpush1.msra.mxu0 0.0
  %188 = vmatprep.subr.mxu0 0.0
  %189 = vmatpush1.msra.mxu0 0.0
  %190 = vmatprep.subr.mxu0 0.0
  %191 = vmatpush1.msra.mxu0 0.0
  %192 = vmatprep.subr.mxu0 0.0
  %193 = vmatpush1.msra.mxu0 0.0
  %194 = vmatprep.mubr.f32.mxu0 0.0
  %195 = vmatmul.mubr.f32.gmra.mrb[0].mxu0 %v22
  %v196 = vpop.f32.mrb[0].mxu0
  %v197 = vadd.f32 %v123, %v196
  %v198 = vpop.f32.mrb[0].mxu0
  %v199 = vadd.f32 %v127, %v198
  %200 = vmatprep.mubr.f32.mxu0 0.0
  %201 = vmatmul.mubr.f32.gmra.mrb[0].mxu0 %v23
  %v202 = vpop.f32.mrb[0].mxu0
  %v203 = vadd.f32 %v123, %v202
  %v204 = vpop.f32.mrb[0].mxu0
  %v205 = vadd.f32 %v127, %v204
  %206 = vmatprep.mubr.f32.mxu0 0.0
  %207 = vmatmul.mubr.f32.gmra.mrb[0].mxu0 %v24
  %v208 = vpop.f32.mrb[0].mxu0
  %v209 = vadd.f32 %v123, %v208
  %v210 = vpop.f32.mrb[0].mxu0
  %v211 = vadd.f32 %v127, %v210
  %212 = vmatprep.mubr.f32.mxu0 0.0
  %213 = vmatmul.mubr.f32.gmra.mrb[0].mxu0 %v25
  %v214 = vpop.f32.mrb[0].mxu0
  %v215 = vadd.f32 %v123, %v214
  %v216 = vpop.f32.mrb[0].mxu0
  %v217 = vadd.f32 %v127, %v216
  %218 = vmatprep.mubr.f32.mxu0 0.0
  %219 = vmatmul.mubr.f32.gmra.mrb[0].mxu0 %v26
  %v220 = vpop.f32.mrb[0].mxu0
  %v221 = vadd.f32 %v123, %v220
  %v222 = vpop.f32.mrb[0].mxu0
  %v223 = vadd.f32 %v127, %v222
  %224 = vmatprep.mubr.f32.mxu0 0.0
  %225 = vmatmul.mubr.f32.gmra.mrb[0].mxu0 %v27
  %v226 = vpop.f32.mrb[0].mxu0
  %v227 = vadd.f32 %v123, %v226
  %v228 = vpop.f32.mrb[0].mxu0
  %v229 = vadd.f32 %v127, %v228
  %230 = vmatprep.mubr.f32.mxu0 0.0
  %231 = vmatmul.mubr.f32.gmra.mrb[0].mxu0 %v28
  %v232 = vpop.f32.mrb[0].mxu0
  %v233 = vadd.f32 %v123, %v232
  %v234 = vpop.f32.mrb[0].mxu0
  %v235 = vadd.f32 %v127, %v234
  %236 = vmatprep.mubr.f32.mxu0 0.0
  %237 = vmatmul.mubr.f32.gmra.mrb[0].mxu0 %v29
  %v238 = vpop.f32.mrb[0].mxu0
  %v239 = vadd.f32 %v123, %v238
  %v240 = vpop.f32.mrb[0].mxu0
  %v241 = vadd.f32 %v127, %v240
  %242 = vmatprep.mubr.f32.mxu0 0.0
  %243 = vmatmul.mubr.f32.gmra.mrb[0].mxu0 %v30
  %v244 = vpop.f32.mrb[0].mxu0
  %v245 = vadd.f32 %v123, %v244
  %v246 = vpop.f32.mrb[0].mxu0
  %v247 = vadd.f32 %v127, %v246
  %248 = vmatprep.mubr.f32.mxu0 0.0
  %249 = vmatmul.mubr.f32.gmra.mrb[0].mxu0 %v31
  %v250 = vpop.f32.mrb[0].mxu0
  %v251 = vadd.f32 %v123, %v250
  %v252 = vpop.f32.mrb[0].mxu0
  %v253 = vadd.f32 %v127, %v252
  %254 = vmatprep.mubr.f32.mxu0 0.0
  %255 = vmatmul.mubr.f32.gmra.mrb[0].mxu0 %v32
  %v256 = vpop.f32.mrb[0].mxu0
  %v257 = vadd.f32 %v123, %v256
  %v258 = vpop.f32.mrb[0].mxu0
  %v259 = vadd.f32 %v127, %v258
  %260 = vmatprep.mubr.f32.mxu0 0.0
  %261 = vmatmul.mubr.f32.gmra.mrb[0].mxu0 %v33
  %v262 = vpop.f32.mrb[0].mxu0
  %v263 = vadd.f32 %v123, %v262
  %v264 = vpop.f32.mrb[0].mxu0
  %v265 = vadd.f32 %v127, %v264
  %266 = vmatprep.mubr.f32.mxu0 0.0
  %267 = vmatmul.mubr.f32.gmra.mrb[0].mxu0 %v34
  %v268 = vpop.f32.mrb[0].mxu0
  %v269 = vadd.f32 %v123, %v268
  %v270 = vpop.f32.mrb[0].mxu0
  %v271 = vadd.f32 %v127, %v270
  %272 = vmatprep.mubr.f32.mxu0 0.0
  %273 = vmatmul.mubr.f32.gmra.mrb[0].mxu0 %v35
  %v274 = vpop.f32.mrb[0].mxu0
  %v275 = vadd.f32 %v123, %v274
  %v276 = vpop.f32.mrb[0].mxu0
  %v277 = vadd.f32 %v127, %v276
  %278 = vmatprep.mubr.f32.mxu0 0.0
  %279 = vmatmul.mubr.f32.gmra.mrb[0].mxu0 %v36
  %v280 = vpop.f32.mrb[0].mxu0
  %v281 = vadd.f32 %v123, %v280
  %v282 = vpop.f32.mrb[0].mxu0
  %v283 = vadd.f32 %v127, %v282
  %284 = vmatprep.mubr.f32.mxu0 0.0
  %285 = vmatmul.mubr.f32.gmra.mrb[0].mxu0 %v37
  %v286 = vpop.f32.mrb[0].mxu0
  %v287 = vadd.f32 %v123, %v286
  %v288 = vpop.f32.mrb[0].mxu0
  %v289 = vadd.f32 %v127, %v288
  %290 = vmatprep.mubr.f32.mxu0 0.0
  %291 = vmatmul.mubr.f32.gmra.mrb[0].mxu0 %v38
  %v292 = vpop.f32.mrb[0].mxu0
  %v293 = vadd.f32 %v123, %v292
  %v294 = vpop.f32.mrb[0].mxu0
  %v295 = vadd.f32 %v127, %v294
  %296 = vmatprep.mubr.f32.mxu0 0.0
  %297 = vmatmul.mubr.f32.gmra.mrb[0].mxu0 %v39
  %v298 = vpop.f32.mrb[0].mxu0
  %v299 = vadd.f32 %v123, %v298
  %v300 = vpop.f32.mrb[0].mxu0
  %v301 = vadd.f32 %v127, %v300
  %302 = vmatprep.mubr.f32.mxu0 0.0
  %303 = vmatmul.mubr.f32.gmra.mrb[0].mxu0 %v40
  %v304 = vpop.f32.mrb[0].mxu0
  %v305 = vadd.f32 %v123, %v304
  %v306 = vpop.f32.mrb[0].mxu0
  %v307 = vadd.f32 %v127, %v306
  %308 = vmatprep.mubr.f32.mxu0 0.0
  %309 = vmatmul.mubr.f32.gmra.mrb[0].mxu0 %v41
  %v310 = vpop.f32.mrb[0].mxu0
  %v311 = vadd.f32 %v123, %v310
  %v312 = vpop.f32.mrb[0].mxu0
  %v313 = vadd.f32 %v127, %v312
  %314 = vmatprep.mubr.f32.mxu0 0.0
  %315 = vmatmul.mubr.f32.gmra.mrb[0].mxu0 %v42
  %v316 = vpop.f32.mrb[0].mxu0
  %v317 = vadd.f32 %v123, %v316
  %v318 = vpop.f32.mrb[0].mxu0
  %v319 = vadd.f32 %v127, %v318
  %320 = vmatprep.mubr.f32.mxu0 0.0
  %321 = vmatmul.mubr.f32.gmra.mrb[0].mxu0 %v43
  %v322 = vpop.f32.mrb[0].mxu0
  %v323 = vadd.f32 %v123, %v322
  %v324 = vpop.f32.mrb[0].mxu0
  %v325 = vadd.f32 %v127, %v324
  %326 = vmatprep.mubr.f32.mxu0 0.0
  %327 = vmatmul.mubr.f32.gmra.mrb[0].mxu0 %v44
  %v328 = vpop.f32.mrb[0].mxu0
  %v329 = vadd.f32 %v123, %v328
  %v330 = vpop.f32.mrb[0].mxu0
  %v331 = vadd.f32 %v127, %v330
  %332 = vmatprep.mubr.f32.mxu0 0.0
  %333 = vmatmul.mubr.f32.gmra.mrb[0].mxu0 %v45
  %v334 = vpop.f32.mrb[0].mxu0
  %v335 = vadd.f32 %v123, %v334
  %v336 = vpop.f32.mrb[0].mxu0
  %v337 = vadd.f32 %v127, %v336
  %338 = vmatprep.mubr.f32.mxu0 0.0
  %339 = vmatmul.mubr.f32.gmra.mrb[0].mxu0 %v46
  %v340 = vpop.f32.mrb[0].mxu0
  %v341 = vadd.f32 %v123, %v340
  %v342 = vpop.f32.mrb[0].mxu0
  %v343 = vadd.f32 %v127, %v342
  %344 = vmatprep.mubr.f32.mxu0 0.0
  %345 = vmatmul.mubr.f32.gmra.mrb[0].mxu0 %v47
  %v346 = vpop.f32.mrb[0].mxu0
  %v347 = vadd.f32 %v123, %v346
  %v348 = vpop.f32.mrb[0].mxu0
  %v349 = vadd.f32 %v127, %v348
  %350 = vmatprep.mubr.f32.mxu0 0.0
  %351 = vmatmul.mubr.f32.gmra.mrb[0].mxu0 %v48
  %v352 = vpop.f32.mrb[0].mxu0
  %v353 = vadd.f32 %v123, %v352
  %v354 = vpop.f32.mrb[0].mxu0
  %v355 = vadd.f32 %v127, %v354
  %356 = vmatprep.mubr.f32.mxu0 0.0
  %357 = vmatmul.mubr.f32.gmra.mrb[0].mxu0 %v49
  %v358 = vpop.f32.mrb[0].mxu0
  %v359 = vadd.f32 %v123, %v358
  %v360 = vpop.f32.mrb[0].mxu0
  %v361 = vadd.f32 %v127, %v360
  %362 = vmatprep.mubr.f32.mxu0 0.0
  %363 = vmatmul.mubr.f32.gmra.mrb[0].mxu0 %v50
  %v364 = vpop.f32.mrb[0].mxu0
  %v365 = vadd.f32 %v123, %v364
  %v366 = vpop.f32.mrb[0].mxu0
  %v367 = vadd.f32 %v127, %v366
  %368 = vmatprep.mubr.f32.mxu0 0.0
  %369 = vmatmul.mubr.f32.gmra.mrb[0].mxu0 %v51
  %v370 = vpop.f32.mrb[0].mxu0
  %v371 = vadd.f32 %v123, %v370
  %v372 = vpop.f32.mrb[0].mxu0
  %v373 = vadd.f32 %v127, %v372
  %374 = vmatprep.mubr.f32.mxu0 0.0
  %375 = vmatmul.mubr.f32.gmra.mrb[0].mxu0 %v52
  %v376 = vpop.f32.mrb[0].mxu0
  %v377 = vadd.f32 %v123, %v376
  %v378 = vpop.f32.mrb[0].mxu0
  %v379 = vadd.f32 %v127, %v378
  %380 = vmatprep.mubr.f32.mxu0 0.0
  %381 = vmatmul.mubr.f32.gmra.mrb[0].mxu0 %v53
  %v382 = vpop.f32.mrb[0].mxu0
  %v383 = vadd.f32 %v123, %v382
  %v384 = vpop.f32.mrb[0].mxu0
  %v385 = vadd.f32 %v127, %v384
  %386 = vmatprep.mubr.f32.mxu0 0.0
  %387 = vmatmul.mubr.f32.gmra.mrb[0].mxu0 %v54
  %v388 = vpop.f32.mrb[0].mxu0
  %v389 = vadd.f32 %v123, %v388
  %v390 = vpop.f32.mrb[0].mxu0
  %v391 = vadd.f32 %v127, %v390
  %392 = vmatprep.mubr.f32.mxu0 0.0
  %393 = vmatmul.mubr.f32.gmra.mrb[0].mxu0 %v55
  %v394 = vpop.f32.mrb[0].mxu0
  %v395 = vadd.f32 %v123, %v394
  %v396 = vpop.f32.mrb[0].mxu0
  %v397 = vadd.f32 %v127, %v396
  %398 = vmatprep.mubr.f32.mxu0 0.0
  %399 = vmatmul.mubr.f32.gmra.mrb[0].mxu0 %v56
  %v400 = vpop.f32.mrb[0].mxu0
  %v401 = vadd.f32 %v123, %v400
  %v402 = vpop.f32.mrb[0].mxu0
  %v403 = vadd.f32 %v127, %v402
  %404 = vmatprep.mubr.f32.mxu0 0.0
  %405 = vmatmul.mubr.f32.gmra.mrb[0].mxu0 %v57
  %v406 = vpop.f32.mrb[0].mxu0
  %v407 = vadd.f32 %v123, %v406
  %v408 = vpop.f32.mrb[0].mxu0
  %v409 = vadd.f32 %v127, %v408
  %410 = vmatprep.mubr.f32.mxu0 0.0
  %411 = vmatmul.mubr.f32.gmra.mrb[0].mxu0 %v58
  %v412 = vpop.f32.mrb[0].mxu0
  %v413 = vadd.f32 %v123, %v412
  %v414 = vpop.f32.mrb[0].mxu0
  %v415 = vadd.f32 %v127, %v414
  %416 = vmatprep.mubr.f32.mxu0 0.0
  %417 = vmatmul.mubr.f32.gmra.mrb[0].mxu0 %v59
  %v418 = vpop.f32.mrb[0].mxu0
  %v419 = vadd.f32 %v123, %v418
  %v420 = vpop.f32.mrb[0].mxu0
  %v421 = vadd.f32 %v127, %v420
  %422 = vmatprep.mubr.f32.mxu0 0.0
  %423 = vmatmul.mubr.f32.gmra.mrb[0].mxu0 %v60
  %v424 = vpop.f32.mrb[0].mxu0
  %v425 = vadd.f32 %v123, %v424
  %v426 = vpop.f32.mrb[0].mxu0
  %v427 = vadd.f32 %v127, %v426
  %428 = vmatprep.mubr.f32.mxu0 0.0
  %429 = vmatmul.mubr.f32.gmra.mrb[0].mxu0 %v61
  %v430 = vpop.f32.mrb[0].mxu0
  %v431 = vadd.f32 %v123, %v430
  %v432 = vpop.f32.mrb[0].mxu0
  %v433 = vadd.f32 %v127, %v432
  %434 = vmatprep.mubr.f32.mxu0 0.0
  %435 = vmatmul.mubr.f32.gmra.mrb[0].mxu0 %v62
  %v436 = vpop.f32.mrb[0].mxu0
  %v437 = vadd.f32 %v123, %v436
  %v438 = vpop.f32.mrb[0].mxu0
  %v439 = vadd.f32 %v127, %v438
  %440 = vmatprep.mubr.f32.mxu0 0.0
  %441 = vmatmul.mubr.f32.gmra.mrb[0].mxu0 %v63
  %v442 = vpop.f32.mrb[0].mxu0
  %v443 = vadd.f32 %v123, %v442
  %v444 = vpop.f32.mrb[0].mxu0
  %v445 = vadd.f32 %v127, %v444
  %446 = vmatprep.mubr.f32.mxu0 0.0
  %447 = vmatmul.mubr.f32.gmra.mrb[0].mxu0 %v64
  %v448 = vpop.f32.mrb[0].mxu0
  %v449 = vadd.f32 %v123, %v448
  %v450 = vpop.f32.mrb[0].mxu0
  %v451 = vadd.f32 %v127, %v450
  %452 = vmatprep.mubr.f32.mxu0 0.0
  %453 = vmatmul.mubr.f32.gmra.mrb[0].mxu0 %v65
  %v454 = vpop.f32.mrb[0].mxu0
  %v455 = vadd.f32 %v123, %v454
  %v456 = vpop.f32.mrb[0].mxu0
  %v457 = vadd.f32 %v127, %v456
  %458 = vmatprep.mubr.f32.mxu0 0.0
  %459 = vmatmul.mubr.f32.gmra.mrb[0].mxu0 %v66
  %v460 = vpop.f32.mrb[0].mxu0
  %v461 = vadd.f32 %v123, %v460
  %v462 = vpop.f32.mrb[0].mxu0
  %v463 = vadd.f32 %v127, %v462
  %464 = vmatprep.mubr.f32.mxu0 0.0
  %465 = vmatmul.mubr.f32.gmra.mrb[0].mxu0 %v67
  %v466 = vpop.f32.mrb[0].mxu0
  %v467 = vadd.f32 %v123, %v466
  %v468 = vpop.f32.mrb[0].mxu0
  %v469 = vadd.f32 %v127, %v468
  %470 = vmatprep.mubr.f32.mxu0 0.0
  %471 = vmatmul.mubr.f32.gmra.mrb[0].mxu0 %v68
  %v472 = vpop.f32.mrb[0].mxu0
  %v473 = vadd.f32 %v123, %v472
  %v474 = vpop.f32.mrb[0].mxu0
  %v475 = vadd.f32 %v127, %v474
  %476 = vmatprep.mubr.f32.mxu0 0.0
  %477 = vmatmul.mubr.f32.gmra.mrb[0].mxu0 %v69
  %v478 = vpop.f32.mrb[0].mxu0
  %v479 = vadd.f32 %v123, %v478
  %v480 = vpop.f32.mrb[0].mxu0
  %v481 = vadd.f32 %v127, %v480
  %482 = vmatprep.mubr.f32.mxu0 0.0
  %483 = vmatmul.mubr.f32.gmra.mrb[0].mxu0 %v70
  %v484 = vpop.f32.mrb[0].mxu0
  %v485 = vadd.f32 %v123, %v484
  %v486 = vpop.f32.mrb[0].mxu0
  %v487 = vadd.f32 %v127, %v486
  %488 = vmatprep.mubr.f32.mxu0 0.0
  %489 = vmatmul.mubr.f32.gmra.mrb[0].mxu0 %v71
  %v490 = vpop.f32.mrb[0].mxu0
  %v491 = vadd.f32 %v123, %v490
  %v492 = vpop.f32.mrb[0].mxu0
  %v493 = vadd.f32 %v127, %v492
  %494 = vmatprep.mubr.f32.mxu0 0.0
  %495 = vmatmul.mubr.f32.gmra.mrb[0].mxu0 %v72
  %v496 = vpop.f32.mrb[0].mxu0
  %v497 = vadd.f32 %v123, %v496
  %v498 = vpop.f32.mrb[0].mxu0
  %v499 = vadd.f32 %v127, %v498
  %500 = vmatprep.mubr.f32.mxu0 0.0
  %501 = vmatmul.mubr.f32.gmra.mrb[0].mxu0 %v73
  %v502 = vpop.f32.mrb[0].mxu0
  %v503 = vadd.f32 %v123, %v502
  %v504 = vpop.f32.mrb[0].mxu0
  %v505 = vadd.f32 %v127, %v504
  %506 = vmatprep.mubr.f32.mxu0 0.0
  %507 = vmatmul.mubr.f32.gmra.mrb[0].mxu0 %v74
  %v508 = vpop.f32.mrb[0].mxu0
  %v509 = vadd.f32 %v123, %v508
  %v510 = vpop.f32.mrb[0].mxu0
  %v511 = vadd.f32 %v127, %v510
  %512 = vmatprep.mubr.f32.mxu0 0.0
  %513 = vmatmul.mubr.f32.gmra.mrb[0].mxu0 %v75
  %v514 = vpop.f32.mrb[0].mxu0
  %v515 = vadd.f32 %v123, %v514
  %v516 = vpop.f32.mrb[0].mxu0
  %v517 = vadd.f32 %v127, %v516
  %518 = vmatprep.mubr.f32.mxu0 0.0
  %519 = vmatmul.mubr.f32.gmra.mrb[0].mxu0 %v76
  %v520 = vpop.f32.mrb[0].mxu0
  %v521 = vadd.f32 %v123, %v520
  %v522 = vpop.f32.mrb[0].mxu0
  %v523 = vadd.f32 %v127, %v522
  %524 = vmatprep.mubr.f32.mxu0 0.0
  %525 = vmatmul.mubr.f32.gmra.mrb[0].mxu0 %v77
  %v526 = vpop.f32.mrb[0].mxu0
  %v527 = vadd.f32 %v123, %v526
  %v528 = vpop.f32.mrb[0].mxu0
  %v529 = vadd.f32 %v127, %v528
  %530 = vmatprep.mubr.f32.mxu0 0.0
  %531 = vmatmul.mubr.f32.gmra.mrb[0].mxu0 %v78
  %v532 = vpop.f32.mrb[0].mxu0
  %v533 = vadd.f32 %v123, %v532
  %v534 = vpop.f32.mrb[0].mxu0
  %v535 = vadd.f32 %v127, %v534
  %536 = vmatprep.mubr.f32.mxu0 0.0
  %537 = vmatmul.mubr.f32.gmra.mrb[0].mxu0 %v79
  %v538 = vpop.f32.mrb[0].mxu0
  %v539 = vadd.f32 %v123, %v538
  %v540 = vpop.f32.mrb[0].mxu0
  %v541 = vadd.f32 %v127, %v540
  %542 = vmatprep.mubr.f32.mxu0 0.0
  %543 = vmatmul.mubr.f32.gmra.mrb[0].mxu0 %v80
  %v544 = vpop.f32.mrb[0].mxu0
  %v545 = vadd.f32 %v123, %v544
  %v546 = vpop.f32.mrb[0].mxu0
  %v547 = vadd.f32 %v127, %v546
  %548 = vmatprep.mubr.f32.mxu0 0.0
  %549 = vmatmul.mubr.f32.gmra.mrb[0].mxu0 %v81
  %v550 = vpop.f32.mrb[0].mxu0
  %v551 = vadd.f32 %v123, %v550
  %v552 = vpop.f32.mrb[0].mxu0
  %v553 = vadd.f32 %v127, %v552
  %554 = vmatprep.mubr.f32.mxu0 0.0
  %555 = vmatmul.mubr.f32.gmra.mrb[0].mxu0 %v82
  %v556 = vpop.f32.mrb[0].mxu0
  %v557 = vadd.f32 %v123, %v556
  %v558 = vpop.f32.mrb[0].mxu0
  %v559 = vadd.f32 %v127, %v558
  %560 = vmatprep.mubr.f32.mxu0 0.0
  %561 = vmatmul.mubr.f32.gmra.mrb[0].mxu0 %v83
  %v562 = vpop.f32.mrb[0].mxu0
  %v563 = vadd.f32 %v123, %v562
  %v564 = vpop.f32.mrb[0].mxu0
  %v565 = vadd.f32 %v127, %v564
  %566 = vmatprep.mubr.f32.mxu0 0.0
  %567 = vmatmul.mubr.f32.gmra.mrb[0].mxu0 %v84
  %v568 = vpop.f32.mrb[0].mxu0
  %v569 = vadd.f32 %v123, %v568
  %v570 = vpop.f32.mrb[0].mxu0
  %v571 = vadd.f32 %v127, %v570
  %572 = vmatprep.mubr.f32.mxu0 0.0
  %573 = vmatmul.mubr.f32.gmra.mrb[0].mxu0 %v85
  %v574 = vpop.f32.mrb[0].mxu0
  %v575 = vadd.f32 %v123, %v574
  %v576 = vpop.f32.mrb[0].mxu0
  %v577 = vadd.f32 %v127, %v576
  %578 = vdwg.mxu0
  %v579 = vmul.f32 %v197, 0.5
  %v580 = vmul.f32 %v199, 0.5
  %v581 = vmul.f32 %v203, 0.5
  %v582 = vmul.f32 %v205, 0.5
  %v583 = vmul.f32 %v209, 0.5
  %v584 = vmul.f32 %v211, 0.5
  %v585 = vmul.f32 %v215, 0.5
  %v586 = vmul.f32 %v217, 0.5
  %v587 = vmul.f32 %v221, 0.5
  %v588 = vmul.f32 %v223, 0.5
  %v589 = vmul.f32 %v227, 0.5
  %v590 = vmul.f32 %v229, 0.5
  %v591 = vmul.f32 %v233, 0.5
  %v592 = vmul.f32 %v235, 0.5
  %v593 = vmul.f32 %v239, 0.5
  %v594 = vmul.f32 %v241, 0.5
  %v595 = vmul.f32 %v245, 0.5
  %v596 = vmul.f32 %v247, 0.5
  %v597 = vmul.f32 %v251, 0.5
  %v598 = vmul.f32 %v253, 0.5
  %v599 = vmul.f32 %v257, 0.5
  %v600 = vmul.f32 %v259, 0.5
  %v601 = vmul.f32 %v263, 0.5
  %v602 = vmul.f32 %v265, 0.5
  %v603 = vmul.f32 %v269, 0.5
  %v604 = vmul.f32 %v271, 0.5
  %v605 = vmul.f32 %v275, 0.5
  %v606 = vmul.f32 %v277, 0.5
  %v607 = vmul.f32 %v281, 0.5
  %v608 = vmul.f32 %v283, 0.5
  %v609 = vmul.f32 %v287, 0.5
  %v610 = vmul.f32 %v289, 0.5
  %v611 = vmul.f32 %v293, 0.5
  %v612 = vmul.f32 %v295, 0.5
  %v613 = vmul.f32 %v299, 0.5
  %v614 = vmul.f32 %v301, 0.5
  %v615 = vmul.f32 %v305, 0.5
  %v616 = vmul.f32 %v307, 0.5
  %v617 = vmul.f32 %v311, 0.5
  %v618 = vmul.f32 %v313, 0.5
  %v619 = vmul.f32 %v317, 0.5
  %v620 = vmul.f32 %v319, 0.5
  %v621 = vmul.f32 %v323, 0.5
  %v622 = vmul.f32 %v325, 0.5
  %v623 = vmul.f32 %v329, 0.5
  %v624 = vmul.f32 %v331, 0.5
  %v625 = vmul.f32 %v335, 0.5
  %v626 = vmul.f32 %v337, 0.5
  %v627 = vmul.f32 %v341, 0.5
  %v628 = vmul.f32 %v343, 0.5
  %v629 = vmul.f32 %v347, 0.5
  %v630 = vmul.f32 %v349, 0.5
  %v631 = vmul.f32 %v353, 0.5
  %v632 = vmul.f32 %v355, 0.5
  %v633 = vmul.f32 %v359, 0.5
  %v634 = vmul.f32 %v361, 0.5
  %v635 = vmul.f32 %v365, 0.5
  %v636 = vmul.f32 %v367, 0.5
  %v637 = vmul.f32 %v371, 0.5
  %v638 = vmul.f32 %v373, 0.5
  %v639 = vmul.f32 %v377, 0.5
  %v640 = vmul.f32 %v379, 0.5
  %v641 = vmul.f32 %v383, 0.5
  %v642 = vmul.f32 %v385, 0.5
  %v643 = vmul.f32 %v389, 0.5
  %v644 = vmul.f32 %v391, 0.5
  %v645 = vmul.f32 %v395, 0.5
  %v646 = vmul.f32 %v397, 0.5
  %v647 = vmul.f32 %v401, 0.5
  %v648 = vmul.f32 %v403, 0.5
  %v649 = vmul.f32 %v407, 0.5
  %v650 = vmul.f32 %v409, 0.5
  %v651 = vmul.f32 %v413, 0.5
  %v652 = vmul.f32 %v415, 0.5
  %v653 = vmul.f32 %v419, 0.5
  %v654 = vmul.f32 %v421, 0.5
  %v655 = vmul.f32 %v425, 0.5
  %v656 = vmul.f32 %v427, 0.5
  %v657 = vmul.f32 %v431, 0.5
  %v658 = vmul.f32 %v433, 0.5
  %v659 = vmul.f32 %v437, 0.5
  %v660 = vmul.f32 %v439, 0.5
  %v661 = vmul.f32 %v443, 0.5
  %v662 = vmul.f32 %v445, 0.5
  %v663 = vmul.f32 %v449, 0.5
  %v664 = vmul.f32 %v451, 0.5
  %v665 = vmul.f32 %v455, 0.5
  %v666 = vmul.f32 %v457, 0.5
  %v667 = vmul.f32 %v461, 0.5
  %v668 = vmul.f32 %v463, 0.5
  %v669 = vmul.f32 %v467, 0.5
  %v670 = vmul.f32 %v469, 0.5
  %v671 = vmul.f32 %v473, 0.5
  %v672 = vmul.f32 %v475, 0.5
  %v673 = vmul.f32 %v479, 0.5
  %v674 = vmul.f32 %v481, 0.5
  %v675 = vmul.f32 %v485, 0.5
  %v676 = vmul.f32 %v487, 0.5
  %v677 = vmul.f32 %v491, 0.5
  %v678 = vmul.f32 %v493, 0.5
  %v679 = vmul.f32 %v497, 0.5
  %v680 = vmul.f32 %v499, 0.5
  %v681 = vmul.f32 %v503, 0.5
  %v682 = vmul.f32 %v505, 0.5
  %v683 = vmul.f32 %v509, 0.5
  %v684 = vmul.f32 %v511, 0.5
  %v685 = vmul.f32 %v515, 0.5
  %v686 = vmul.f32 %v517, 0.5
  %v687 = vmul.f32 %v521, 0.5
  %v688 = vmul.f32 %v523, 0.5
  %v689 = vmul.f32 %v527, 0.5
  %v690 = vmul.f32 %v529, 0.5
  %v691 = vmul.f32 %v533, 0.5
  %v692 = vmul.f32 %v535, 0.5
  %v693 = vmul.f32 %v539, 0.5
  %v694 = vmul.f32 %v541, 0.5
  %v695 = vmul.f32 %v545, 0.5
  %v696 = vmul.f32 %v547, 0.5
  %v697 = vmul.f32 %v551, 0.5
  %v698 = vmul.f32 %v553, 0.5
  %v699 = vmul.f32 %v557, 0.5
  %v700 = vmul.f32 %v559, 0.5
  %v701 = vmul.f32 %v563, 0.5
  %v702 = vmul.f32 %v565, 0.5
  %v703 = vmul.f32 %v569, 0.5
  %v704 = vmul.f32 %v571, 0.5
  %v705 = vmul.f32 %v575, 0.5
  %v706 = vmul.f32 %v577, 0.5
  %v707 = vtanh.pop %v579
  %v708 = vtanh.pop %v580
  %v709 = vtanh.pop %v581
  %v710 = vtanh.pop %v582
  %v711 = vtanh.pop %v583
  %v712 = vtanh.pop %v584
  %v713 = vtanh.pop %v585
  %v714 = vtanh.pop %v586
  %v715 = vtanh.pop %v587
  %v716 = vtanh.pop %v588
  %v717 = vtanh.pop %v589
  %v718 = vtanh.pop %v590
  %v719 = vtanh.pop %v591
  %v720 = vtanh.pop %v592
  %v721 = vtanh.pop %v593
  %v722 = vtanh.pop %v594
  %v723 = vtanh.pop %v595
  %v724 = vtanh.pop %v596
  %v725 = vtanh.pop %v597
  %v726 = vtanh.pop %v598
  %v727 = vtanh.pop %v599
  %v728 = vtanh.pop %v600
  %v729 = vtanh.pop %v601
  %v730 = vtanh.pop %v602
  %v731 = vtanh.pop %v603
  %v732 = vtanh.pop %v604
  %v733 = vtanh.pop %v605
  %v734 = vtanh.pop %v606
  %v735 = vtanh.pop %v607
  %v736 = vtanh.pop %v608
  %v737 = vtanh.pop %v609
  %v738 = vtanh.pop %v610
  %v739 = vtanh.pop %v611
  %v740 = vtanh.pop %v612
  %v741 = vtanh.pop %v613
  %v742 = vtanh.pop %v614
  %v743 = vtanh.pop %v615
  %v744 = vtanh.pop %v616
  %v745 = vtanh.pop %v617
  %v746 = vtanh.pop %v618
  %v747 = vtanh.pop %v619
  %v748 = vtanh.pop %v620
  %v749 = vtanh.pop %v621
  %v750 = vtanh.pop %v622
  %v751 = vtanh.pop %v623
  %v752 = vtanh.pop %v624
  %v753 = vtanh.pop %v625
  %v754 = vtanh.pop %v626
  %v755 = vtanh.pop %v627
  %v756 = vtanh.pop %v628
  %v757 = vtanh.pop %v629
  %v758 = vtanh.pop %v630
  %v759 = vtanh.pop %v631
  %v760 = vtanh.pop %v632
  %v761 = vtanh.pop %v633
  %v762 = vtanh.pop %v634
  %v763 = vtanh.pop %v635
  %v764 = vtanh.pop %v636
  %v765 = vtanh.pop %v637
  %v766 = vtanh.pop %v638
  %v767 = vtanh.pop %v639
  %v768 = vtanh.pop %v640
  %v769 = vtanh.pop %v641
  %v770 = vtanh.pop %v642
  %v771 = vtanh.pop %v643
  %v772 = vtanh.pop %v644
  %v773 = vtanh.pop %v645
  %v774 = vtanh.pop %v646
  %v775 = vtanh.pop %v647
  %v776 = vtanh.pop %v648
  %v777 = vtanh.pop %v649
  %v778 = vtanh.pop %v650
  %v779 = vtanh.pop %v651
  %v780 = vtanh.pop %v652
  %v781 = vtanh.pop %v653
  %v782 = vtanh.pop %v654
  %v783 = vtanh.pop %v655
  %v784 = vtanh.pop %v656
  %v785 = vtanh.pop %v657
  %v786 = vtanh.pop %v658
  %v787 = vtanh.pop %v659
  %v788 = vtanh.pop %v660
  %v789 = vtanh.pop %v661
  %v790 = vtanh.pop %v662
  %v791 = vtanh.pop %v663
  %v792 = vtanh.pop %v664
  %v793 = vtanh.pop %v665
  %v794 = vtanh.pop %v666
  %v795 = vtanh.pop %v667
  %v796 = vtanh.pop %v668
  %v797 = vtanh.pop %v669
  %v798 = vtanh.pop %v670
  %v799 = vtanh.pop %v671
  %v800 = vtanh.pop %v672
  %v801 = vtanh.pop %v673
  %v802 = vtanh.pop %v674
  %v803 = vtanh.pop %v675
  %v804 = vtanh.pop %v676
  %v805 = vtanh.pop %v677
  %v806 = vtanh.pop %v678
  %v807 = vtanh.pop %v679
  %v808 = vtanh.pop %v680
  %v809 = vtanh.pop %v681
  %v810 = vtanh.pop %v682
  %v811 = vtanh.pop %v683
  %v812 = vtanh.pop %v684
  %v813 = vtanh.pop %v685
  %v814 = vtanh.pop %v686
  %v815 = vtanh.pop %v687
  %v816 = vtanh.pop %v688
  %v817 = vtanh.pop %v689
  %v818 = vtanh.pop %v690
  %v819 = vtanh.pop %v691
  %v820 = vtanh.pop %v692
  %v821 = vtanh.pop %v693
  %v822 = vtanh.pop %v694
  %v823 = vtanh.pop %v695
  %v824 = vtanh.pop %v696
  %v825 = vtanh.pop %v697
  %v826 = vtanh.pop %v698
  %v827 = vtanh.pop %v699
  %v828 = vtanh.pop %v700
  %v829 = vtanh.pop %v701
  %v830 = vtanh.pop %v702
  %v831 = vtanh.pop %v703
  %v832 = vtanh.pop %v704
  %v833 = vtanh.pop %v705
  %v834 = vtanh.pop %v706
  %v835 = vadd.f32 %v707, 1.0
  %v836 = vadd.f32 %v708, 1.0
  %v837 = vadd.f32 %v709, 1.0
  %v838 = vadd.f32 %v710, 1.0
  %v839 = vadd.f32 %v711, 1.0
  %v840 = vadd.f32 %v712, 1.0
  %v841 = vadd.f32 %v713, 1.0
  %v842 = vadd.f32 %v714, 1.0
  %v843 = vadd.f32 %v715, 1.0
  %v844 = vadd.f32 %v716, 1.0
  %v845 = vadd.f32 %v717, 1.0
  %v846 = vadd.f32 %v718, 1.0
  %v847 = vadd.f32 %v719, 1.0
  %v848 = vadd.f32 %v720, 1.0
  %v849 = vadd.f32 %v721, 1.0
  %v850 = vadd.f32 %v722, 1.0
  %v851 = vadd.f32 %v723, 1.0
  %v852 = vadd.f32 %v724, 1.0
  %v853 = vadd.f32 %v725, 1.0
  %v854 = vadd.f32 %v726, 1.0
  %v855 = vadd.f32 %v727, 1.0
  %v856 = vadd.f32 %v728, 1.0
  %v857 = vadd.f32 %v729, 1.0
  %v858 = vadd.f32 %v730, 1.0
  %v859 = vadd.f32 %v731, 1.0
  %v860 = vadd.f32 %v732, 1.0
  %v861 = vadd.f32 %v733, 1.0
  %v862 = vadd.f32 %v734, 1.0
  %v863 = vadd.f32 %v735, 1.0
  %v864 = vadd.f32 %v736, 1.0
  %v865 = vadd.f32 %v737, 1.0
  %v866 = vadd.f32 %v738, 1.0
  %v867 = vadd.f32 %v739, 1.0
  %v868 = vadd.f32 %v740, 1.0
  %v869 = vadd.f32 %v741, 1.0
  %v870 = vadd.f32 %v742, 1.0
  %v871 = vadd.f32 %v743, 1.0
  %v872 = vadd.f32 %v744, 1.0
  %v873 = vadd.f32 %v745, 1.0
  %v874 = vadd.f32 %v746, 1.0
  %v875 = vadd.f32 %v747, 1.0
  %v876 = vadd.f32 %v748, 1.0
  %v877 = vadd.f32 %v749, 1.0
  %v878 = vadd.f32 %v750, 1.0
  %v879 = vadd.f32 %v751, 1.0
  %v880 = vadd.f32 %v752, 1.0
  %v881 = vadd.f32 %v753, 1.0
  %v882 = vadd.f32 %v754, 1.0
  %v883 = vadd.f32 %v755, 1.0
  %v884 = vadd.f32 %v756, 1.0
  %v885 = vadd.f32 %v757, 1.0
  %v886 = vadd.f32 %v758, 1.0
  %v887 = vadd.f32 %v759, 1.0
  %v888 = vadd.f32 %v760, 1.0
  %v889 = vadd.f32 %v761, 1.0
  %v890 = vadd.f32 %v762, 1.0
  %v891 = vadd.f32 %v763, 1.0
  %v892 = vadd.f32 %v764, 1.0
  %v893 = vadd.f32 %v765, 1.0
  %v894 = vadd.f32 %v766, 1.0
  %v895 = vadd.f32 %v767, 1.0
  %v896 = vadd.f32 %v768, 1.0
  %v897 = vadd.f32 %v769, 1.0
  %v898 = vadd.f32 %v770, 1.0
  %v899 = vadd.f32 %v771, 1.0
  %v900 = vadd.f32 %v772, 1.0
  %v901 = vadd.f32 %v773, 1.0
  %v902 = vadd.f32 %v774, 1.0
  %v903 = vadd.f32 %v775, 1.0
  %v904 = vadd.f32 %v776, 1.0
  %v905 = vadd.f32 %v777, 1.0
  %v906 = vadd.f32 %v778, 1.0
  %v907 = vadd.f32 %v779, 1.0
  %v908 = vadd.f32 %v780, 1.0
  %v909 = vadd.f32 %v781, 1.0
  %v910 = vadd.f32 %v782, 1.0
  %v911 = vadd.f32 %v783, 1.0
  %v912 = vadd.f32 %v784, 1.0
  %v913 = vadd.f32 %v785, 1.0
  %v914 = vadd.f32 %v786, 1.0
  %v915 = vadd.f32 %v787, 1.0
  %v916 = vadd.f32 %v788, 1.0
  %v917 = vadd.f32 %v789, 1.0
  %v918 = vadd.f32 %v790, 1.0
  %v919 = vadd.f32 %v791, 1.0
  %v920 = vadd.f32 %v792, 1.0
  %v921 = vadd.f32 %v793, 1.0
  %v922 = vadd.f32 %v794, 1.0
  %v923 = vadd.f32 %v795, 1.0
  %v924 = vadd.f32 %v796, 1.0
  %v925 = vadd.f32 %v797, 1.0
  %v926 = vadd.f32 %v798, 1.0
  %v927 = vadd.f32 %v799, 1.0
  %v928 = vadd.f32 %v800, 1.0
  %v929 = vadd.f32 %v801, 1.0
  %v930 = vadd.f32 %v802, 1.0
  %v931 = vadd.f32 %v803, 1.0
  %v932 = vadd.f32 %v804, 1.0
  %v933 = vadd.f32 %v805, 1.0
  %v934 = vadd.f32 %v806, 1.0
  %v935 = vadd.f32 %v807, 1.0
  %v936 = vadd.f32 %v808, 1.0
  %v937 = vadd.f32 %v809, 1.0
  %v938 = vadd.f32 %v810, 1.0
  %v939 = vadd.f32 %v811, 1.0
  %v940 = vadd.f32 %v812, 1.0
  %v941 = vadd.f32 %v813, 1.0
  %v942 = vadd.f32 %v814, 1.0
  %v943 = vadd.f32 %v815, 1.0
  %v944 = vadd.f32 %v816, 1.0
  %v945 = vadd.f32 %v817, 1.0
  %v946 = vadd.f32 %v818, 1.0
  %v947 = vadd.f32 %v819, 1.0
  %v948 = vadd.f32 %v820, 1.0
  %v949 = vadd.f32 %v821, 1.0
  %v950 = vadd.f32 %v822, 1.0
  %v951 = vadd.f32 %v823, 1.0
  %v952 = vadd.f32 %v824, 1.0
  %v953 = vadd.f32 %v825, 1.0
  %v954 = vadd.f32 %v826, 1.0
  %v955 = vadd.f32 %v827, 1.0
  %v956 = vadd.f32 %v828, 1.0
  %v957 = vadd.f32 %v829, 1.0
  %v958 = vadd.f32 %v830, 1.0
  %v959 = vadd.f32 %v831, 1.0
  %v960 = vadd.f32 %v832, 1.0
  %v961 = vadd.f32 %v833, 1.0
  %v962 = vadd.f32 %v834, 1.0
  %v963 = vmul.f32 %v835, 0.5
  %v964 = vmul.f32 %v836, 0.5
  %v965 = vmul.f32 %v837, 0.5
  %v966 = vmul.f32 %v838, 0.5
  %v967 = vmul.f32 %v839, 0.5
  %v968 = vmul.f32 %v840, 0.5
  %v969 = vmul.f32 %v841, 0.5
  %v970 = vmul.f32 %v842, 0.5
  %v971 = vmul.f32 %v843, 0.5
  %v972 = vmul.f32 %v844, 0.5
  %v973 = vmul.f32 %v845, 0.5
  %v974 = vmul.f32 %v846, 0.5
  %v975 = vmul.f32 %v847, 0.5
  %v976 = vmul.f32 %v848, 0.5
  %v977 = vmul.f32 %v849, 0.5
  %v978 = vmul.f32 %v850, 0.5
  %v979 = vmul.f32 %v851, 0.5
  %v980 = vmul.f32 %v852, 0.5
  %v981 = vmul.f32 %v853, 0.5
  %v982 = vmul.f32 %v854, 0.5
  %v983 = vmul.f32 %v855, 0.5
  %v984 = vmul.f32 %v856, 0.5
  %v985 = vmul.f32 %v857, 0.5
  %v986 = vmul.f32 %v858, 0.5
  %v987 = vmul.f32 %v859, 0.5
  %v988 = vmul.f32 %v860, 0.5
  %v989 = vmul.f32 %v861, 0.5
  %v990 = vmul.f32 %v862, 0.5
  %v991 = vmul.f32 %v863, 0.5
  %v992 = vmul.f32 %v864, 0.5
  %v993 = vmul.f32 %v865, 0.5
  %v994 = vmul.f32 %v866, 0.5
  %v995 = vmul.f32 %v867, 0.5
  %v996 = vmul.f32 %v868, 0.5
  %v997 = vmul.f32 %v869, 0.5
  %v998 = vmul.f32 %v870, 0.5
  %v999 = vmul.f32 %v871, 0.5
  %v1000 = vmul.f32 %v872, 0.5
  %v1001 = vmul.f32 %v873, 0.5
  %v1002 = vmul.f32 %v874, 0.5
  %v1003 = vmul.f32 %v875, 0.5
  %v1004 = vmul.f32 %v876, 0.5
  %v1005 = vmul.f32 %v877, 0.5
  %v1006 = vmul.f32 %v878, 0.5
  %v1007 = vmul.f32 %v879, 0.5
  %v1008 = vmul.f32 %v880, 0.5
  %v1009 = vmul.f32 %v881, 0.5
  %v1010 = vmul.f32 %v882, 0.5
  %v1011 = vmul.f32 %v883, 0.5
  %v1012 = vmul.f32 %v884, 0.5
  %v1013 = vmul.f32 %v885, 0.5
  %v1014 = vmul.f32 %v886, 0.5
  %v1015 = vmul.f32 %v887, 0.5
  %v1016 = vmul.f32 %v888, 0.5
  %v1017 = vmul.f32 %v889, 0.5
  %v1018 = vmul.f32 %v890, 0.5
  %v1019 = vmul.f32 %v891, 0.5
  %v1020 = vmul.f32 %v892, 0.5
  %v1021 = vmul.f32 %v893, 0.5
  %v1022 = vmul.f32 %v894, 0.5
  %v1023 = vmul.f32 %v895, 0.5
  %v1024 = vmul.f32 %v896, 0.5
  %v1025 = vmul.f32 %v897, 0.5
  %v1026 = vmul.f32 %v898, 0.5
  %v1027 = vmul.f32 %v899, 0.5
  %v1028 = vmul.f32 %v900, 0.5
  %v1029 = vmul.f32 %v901, 0.5
  %v1030 = vmul.f32 %v902, 0.5
  %v1031 = vmul.f32 %v903, 0.5
  %v1032 = vmul.f32 %v904, 0.5
  %v1033 = vmul.f32 %v905, 0.5
  %v1034 = vmul.f32 %v906, 0.5
  %v1035 = vmul.f32 %v907, 0.5
  %v1036 = vmul.f32 %v908, 0.5
  %v1037 = vmul.f32 %v909, 0.5
  %v1038 = vmul.f32 %v910, 0.5
  %v1039 = vmul.f32 %v911, 0.5
  %v1040 = vmul.f32 %v912, 0.5
  %v1041 = vmul.f32 %v913, 0.5
  %v1042 = vmul.f32 %v914, 0.5
  %v1043 = vmul.f32 %v915, 0.5
  %v1044 = vmul.f32 %v916, 0.5
  %v1045 = vmul.f32 %v917, 0.5
  %v1046 = vmul.f32 %v918, 0.5
  %v1047 = vmul.f32 %v919, 0.5
  %v1048 = vmul.f32 %v920, 0.5
  %v1049 = vmul.f32 %v921, 0.5
  %v1050 = vmul.f32 %v922, 0.5
  %v1051 = vmul.f32 %v923, 0.5
  %v1052 = vmul.f32 %v924, 0.5
  %v1053 = vmul.f32 %v925, 0.5
  %v1054 = vmul.f32 %v926, 0.5
  %v1055 = vmul.f32 %v927, 0.5
  %v1056 = vmul.f32 %v928, 0.5
  %v1057 = vmul.f32 %v929, 0.5
  %v1058 = vmul.f32 %v930, 0.5
  %v1059 = vmul.f32 %v931, 0.5
  %v1060 = vmul.f32 %v932, 0.5
  %v1061 = vmul.f32 %v933, 0.5
  %v1062 = vmul.f32 %v934, 0.5
  %v1063 = vmul.f32 %v935, 0.5
  %v1064 = vmul.f32 %v936, 0.5
  %v1065 = vmul.f32 %v937, 0.5
  %v1066 = vmul.f32 %v938, 0.5
  %v1067 = vmul.f32 %v939, 0.5
  %v1068 = vmul.f32 %v940, 0.5
  %v1069 = vmul.f32 %v941, 0.5
  %v1070 = vmul.f32 %v942, 0.5
  %v1071 = vmul.f32 %v943, 0.5
  %v1072 = vmul.f32 %v944, 0.5
  %v1073 = vmul.f32 %v945, 0.5
  %v1074 = vmul.f32 %v946, 0.5
  %v1075 = vmul.f32 %v947, 0.5
  %v1076 = vmul.f32 %v948, 0.5
  %v1077 = vmul.f32 %v949, 0.5
  %v1078 = vmul.f32 %v950, 0.5
  %v1079 = vmul.f32 %v951, 0.5
  %v1080 = vmul.f32 %v952, 0.5
  %v1081 = vmul.f32 %v953, 0.5
  %v1082 = vmul.f32 %v954, 0.5
  %v1083 = vmul.f32 %v955, 0.5
  %v1084 = vmul.f32 %v956, 0.5
  %v1085 = vmul.f32 %v957, 0.5
  %v1086 = vmul.f32 %v958, 0.5
  %v1087 = vmul.f32 %v959, 0.5
  %v1088 = vmul.f32 %v960, 0.5
  %v1089 = vmul.f32 %v961, 0.5
  %v1090 = vmul.f32 %v962, 0.5
  %v1091 = vld [vmem:[%s3] sm:$0x1]
  %v1092 = vsub.f32 0.0, %v1091
  %v1094 = vlaneseq
  %v1095 = vshrl.u32 %v1094, 7
  %v1096 = vsub.s32 0, %v1095
  %v1097 = vrot.slane %v1092, %v1096
  %v1099 = vmul.f32 %v1097, %v963
  %v1100 = vmul.f32 %v1097, %v965
  %v1101 = vmul.f32 %v1097, %v967
  %v1102 = vmul.f32 %v1097, %v969
  %v1103 = vmul.f32 %v1097, %v971
  %v1104 = vmul.f32 %v1097, %v973
  %v1105 = vmul.f32 %v1097, %v975
  %v1106 = vmul.f32 %v1097, %v977
  %v1107 = vmul.f32 %v1097, %v979
  %v1108 = vmul.f32 %v1097, %v981
  %v1109 = vmul.f32 %v1097, %v983
  %v1110 = vmul.f32 %v1097, %v985
  %v1111 = vmul.f32 %v1097, %v987
  %v1112 = vmul.f32 %v1097, %v989
  %v1113 = vmul.f32 %v1097, %v991
  %v1114 = vmul.f32 %v1097, %v993
  %v1115 = vmul.f32 %v1097, %v995
  %v1116 = vmul.f32 %v1097, %v997
  %v1117 = vmul.f32 %v1097, %v999
  %v1118 = vmul.f32 %v1097, %v1001
  %v1119 = vmul.f32 %v1097, %v1003
  %v1120 = vmul.f32 %v1097, %v1005
  %v1121 = vmul.f32 %v1097, %v1007
  %v1122 = vmul.f32 %v1097, %v1009
  %v1123 = vmul.f32 %v1097, %v1011
  %v1124 = vmul.f32 %v1097, %v1013
  %v1125 = vmul.f32 %v1097, %v1015
  %v1126 = vmul.f32 %v1097, %v1017
  %v1127 = vmul.f32 %v1097, %v1019
  %v1128 = vmul.f32 %v1097, %v1021
  %v1129 = vmul.f32 %v1097, %v1023
  %v1130 = vmul.f32 %v1097, %v1025
  %v1131 = vmul.f32 %v1097, %v1027
  %v1132 = vmul.f32 %v1097, %v1029
  %v1133 = vmul.f32 %v1097, %v1031
  %v1134 = vmul.f32 %v1097, %v1033
  %v1135 = vmul.f32 %v1097, %v1035
  %v1136 = vmul.f32 %v1097, %v1037
  %v1137 = vmul.f32 %v1097, %v1039
  %v1138 = vmul.f32 %v1097, %v1041
  %v1139 = vmul.f32 %v1097, %v1043
  %v1140 = vmul.f32 %v1097, %v1045
  %v1141 = vmul.f32 %v1097, %v1047
  %v1142 = vmul.f32 %v1097, %v1049
  %v1143 = vmul.f32 %v1097, %v1051
  %v1144 = vmul.f32 %v1097, %v1053
  %v1145 = vmul.f32 %v1097, %v1055
  %v1146 = vmul.f32 %v1097, %v1057
  %v1147 = vmul.f32 %v1097, %v1059
  %v1148 = vmul.f32 %v1097, %v1061
  %v1149 = vmul.f32 %v1097, %v1063
  %v1150 = vmul.f32 %v1097, %v1065
  %v1151 = vmul.f32 %v1097, %v1067
  %v1152 = vmul.f32 %v1097, %v1069
  %v1153 = vmul.f32 %v1097, %v1071
  %v1154 = vmul.f32 %v1097, %v1073
  %v1155 = vmul.f32 %v1097, %v1075
  %v1156 = vmul.f32 %v1097, %v1077
  %v1157 = vmul.f32 %v1097, %v1079
  %v1158 = vmul.f32 %v1097, %v1081
  %v1159 = vmul.f32 %v1097, %v1083
  %v1160 = vmul.f32 %v1097, %v1085
  %v1161 = vmul.f32 %v1097, %v1087
  %v1162 = vmul.f32 %v1097, %v1089
  %v1163 = vmul.f32 %v1099, 1.442695
  %v1164 = vpow.pop %v1163
  %v1165 = vmul.f32 %v1100, 1.442695
  %v1166 = vpow.pop %v1165
  %v1167 = vmul.f32 %v1101, 1.442695
  %v1168 = vpow.pop %v1167
  %v1169 = vmul.f32 %v1102, 1.442695
  %v1170 = vpow.pop %v1169
  %v1171 = vmul.f32 %v1103, 1.442695
  %v1172 = vpow.pop %v1171
  %v1173 = vmul.f32 %v1104, 1.442695
  %v1174 = vpow.pop %v1173
  %v1175 = vmul.f32 %v1105, 1.442695
  %v1176 = vpow.pop %v1175
  %v1177 = vmul.f32 %v1106, 1.442695
  %v1178 = vpow.pop %v1177
  %v1179 = vmul.f32 %v1107, 1.442695
  %v1180 = vpow.pop %v1179
  %v1181 = vmul.f32 %v1108, 1.442695
  %v1182 = vpow.pop %v1181
  %v1183 = vmul.f32 %v1109, 1.442695
  %v1184 = vpow.pop %v1183
  %v1185 = vmul.f32 %v1110, 1.442695
  %v1186 = vpow.pop %v1185
  %v1187 = vmul.f32 %v1111, 1.442695
  %v1188 = vpow.pop %v1187
  %v1189 = vmul.f32 %v1112, 1.442695
  %v1190 = vpow.pop %v1189
  %v1191 = vmul.f32 %v1113, 1.442695
  %v1192 = vpow.pop %v1191
  %v1193 = vmul.f32 %v1114, 1.442695
  %v1194 = vpow.pop %v1193
  %v1195 = vmul.f32 %v1115, 1.442695
  %v1196 = vpow.pop %v1195
  %v1197 = vmul.f32 %v1116, 1.442695
  %v1198 = vpow.pop %v1197
  %v1199 = vmul.f32 %v1117, 1.442695
  %v1200 = vpow.pop %v1199
  %v1201 = vmul.f32 %v1118, 1.442695
  %v1202 = vpow.pop %v1201
  %v1203 = vmul.f32 %v1119, 1.442695
  %v1204 = vpow.pop %v1203
  %v1205 = vmul.f32 %v1120, 1.442695
  %v1206 = vpow.pop %v1205
  %v1207 = vmul.f32 %v1121, 1.442695
  %v1208 = vpow.pop %v1207
  %v1209 = vmul.f32 %v1122, 1.442695
  %v1210 = vpow.pop %v1209
  %v1211 = vmul.f32 %v1123, 1.442695
  %v1212 = vpow.pop %v1211
  %v1213 = vmul.f32 %v1124, 1.442695
  %v1214 = vpow.pop %v1213
  %v1215 = vmul.f32 %v1125, 1.442695
  %v1216 = vpow.pop %v1215
  %v1217 = vmul.f32 %v1126, 1.442695
  %v1218 = vpow.pop %v1217
  %v1219 = vmul.f32 %v1127, 1.442695
  %v1220 = vpow.pop %v1219
  %v1221 = vmul.f32 %v1128, 1.442695
  %v1222 = vpow.pop %v1221
  %v1223 = vmul.f32 %v1129, 1.442695
  %v1224 = vpow.pop %v1223
  %v1225 = vmul.f32 %v1130, 1.442695
  %v1226 = vpow.pop %v1225
  %v1227 = vmul.f32 %v1131, 1.442695
  %v1228 = vpow.pop %v1227
  %v1229 = vmul.f32 %v1132, 1.442695
  %v1230 = vpow.pop %v1229
  %v1231 = vmul.f32 %v1133, 1.442695
  %v1232 = vpow.pop %v1231
  %v1233 = vmul.f32 %v1134, 1.442695
  %v1234 = vpow.pop %v1233
  %v1235 = vmul.f32 %v1135, 1.442695
  %v1236 = vpow.pop %v1235
  %v1237 = vmul.f32 %v1136, 1.442695
  %v1238 = vpow.pop %v1237
  %v1239 = vmul.f32 %v1137, 1.442695
  %v1240 = vpow.pop %v1239
  %v1241 = vmul.f32 %v1138, 1.442695
  %v1242 = vpow.pop %v1241
  %v1243 = vmul.f32 %v1139, 1.442695
  %v1244 = vpow.pop %v1243
  %v1245 = vmul.f32 %v1140, 1.442695
  %v1246 = vpow.pop %v1245
  %v1247 = vmul.f32 %v1141, 1.442695
  %v1248 = vpow.pop %v1247
  %v1249 = vmul.f32 %v1142, 1.442695
  %v1250 = vpow.pop %v1249
  %v1251 = vmul.f32 %v1143, 1.442695
  %v1252 = vpow.pop %v1251
  %v1253 = vmul.f32 %v1144, 1.442695
  %v1254 = vpow.pop %v1253
  %v1255 = vmul.f32 %v1145, 1.442695
  %v1256 = vpow.pop %v1255
  %v1257 = vmul.f32 %v1146, 1.442695
  %v1258 = vpow.pop %v1257
  %v1259 = vmul.f32 %v1147, 1.442695
  %v1260 = vpow.pop %v1259
  %v1261 = vmul.f32 %v1148, 1.442695
  %v1262 = vpow.pop %v1261
  %v1263 = vmul.f32 %v1149, 1.442695
  %v1264 = vpow.pop %v1263
  %v1265 = vmul.f32 %v1150, 1.442695
  %v1266 = vpow.pop %v1265
  %v1267 = vmul.f32 %v1151, 1.442695
  %v1268 = vpow.pop %v1267
  %v1269 = vmul.f32 %v1152, 1.442695
  %v1270 = vpow.pop %v1269
  %v1271 = vmul.f32 %v1153, 1.442695
  %v1272 = vpow.pop %v1271
  %v1273 = vmul.f32 %v1154, 1.442695
  %v1274 = vpow.pop %v1273
  %v1275 = vmul.f32 %v1155, 1.442695
  %v1276 = vpow.pop %v1275
  %v1277 = vmul.f32 %v1156, 1.442695
  %v1278 = vpow.pop %v1277
  %v1279 = vmul.f32 %v1157, 1.442695
  %v1280 = vpow.pop %v1279
  %v1281 = vmul.f32 %v1158, 1.442695
  %v1282 = vpow.pop %v1281
  %v1283 = vmul.f32 %v1159, 1.442695
  %v1284 = vpow.pop %v1283
  %v1285 = vmul.f32 %v1160, 1.442695
  %v1286 = vpow.pop %v1285
  %v1287 = vmul.f32 %v1161, 1.442695
  %v1288 = vpow.pop %v1287
  %v1289 = vmul.f32 %v1162, 1.442695
  %v1290 = vpow.pop %v1289
  %v1291 = vmul.f32 %v1164, %v1164
  %v1292 = vmul.f32 %v1166, %v1166
  %v1293 = vmul.f32 %v1168, %v1168
  %v1294 = vmul.f32 %v1170, %v1170
  %v1295 = vmul.f32 %v1172, %v1172
  %v1296 = vmul.f32 %v1174, %v1174
  %v1297 = vmul.f32 %v1176, %v1176
  %v1298 = vmul.f32 %v1178, %v1178
  %v1299 = vmul.f32 %v1180, %v1180
  %v1300 = vmul.f32 %v1182, %v1182
  %v1301 = vmul.f32 %v1184, %v1184
  %v1302 = vmul.f32 %v1186, %v1186
  %v1303 = vmul.f32 %v1188, %v1188
  %v1304 = vmul.f32 %v1190, %v1190
  %v1305 = vmul.f32 %v1192, %v1192
  %v1306 = vmul.f32 %v1194, %v1194
  %v1307 = vmul.f32 %v1196, %v1196
  %v1308 = vmul.f32 %v1198, %v1198
  %v1309 = vmul.f32 %v1200, %v1200
  %v1310 = vmul.f32 %v1202, %v1202
  %v1311 = vmul.f32 %v1204, %v1204
  %v1312 = vmul.f32 %v1206, %v1206
  %v1313 = vmul.f32 %v1208, %v1208
  %v1314 = vmul.f32 %v1210, %v1210
  %v1315 = vmul.f32 %v1212, %v1212
  %v1316 = vmul.f32 %v1214, %v1214
  %v1317 = vmul.f32 %v1216, %v1216
  %v1318 = vmul.f32 %v1218, %v1218
  %v1319 = vmul.f32 %v1220, %v1220
  %v1320 = vmul.f32 %v1222, %v1222
  %v1321 = vmul.f32 %v1224, %v1224
  %v1322 = vmul.f32 %v1226, %v1226
  %v1323 = vmul.f32 %v1228, %v1228
  %v1324 = vmul.f32 %v1230, %v1230
  %v1325 = vmul.f32 %v1232, %v1232
  %v1326 = vmul.f32 %v1234, %v1234
  %v1327 = vmul.f32 %v1236, %v1236
  %v1328 = vmul.f32 %v1238, %v1238
  %v1329 = vmul.f32 %v1240, %v1240
  %v1330 = vmul.f32 %v1242, %v1242
  %v1331 = vmul.f32 %v1244, %v1244
  %v1332 = vmul.f32 %v1246, %v1246
  %v1333 = vmul.f32 %v1248, %v1248
  %v1334 = vmul.f32 %v1250, %v1250
  %v1335 = vmul.f32 %v1252, %v1252
  %v1336 = vmul.f32 %v1254, %v1254
  %v1337 = vmul.f32 %v1256, %v1256
  %v1338 = vmul.f32 %v1258, %v1258
  %v1339 = vmul.f32 %v1260, %v1260
  %v1340 = vmul.f32 %v1262, %v1262
  %v1341 = vmul.f32 %v1264, %v1264
  %v1342 = vmul.f32 %v1266, %v1266
  %v1343 = vmul.f32 %v1268, %v1268
  %v1344 = vmul.f32 %v1270, %v1270
  %v1345 = vmul.f32 %v1272, %v1272
  %v1346 = vmul.f32 %v1274, %v1274
  %v1347 = vmul.f32 %v1276, %v1276
  %v1348 = vmul.f32 %v1278, %v1278
  %v1349 = vmul.f32 %v1280, %v1280
  %v1350 = vmul.f32 %v1282, %v1282
  %v1351 = vmul.f32 %v1284, %v1284
  %v1352 = vmul.f32 %v1286, %v1286
  %v1353 = vmul.f32 %v1288, %v1288
  %v1354 = vmul.f32 %v1290, %v1290
  %v1355 = vsub.f32 1.0, %v1291
  %v1356 = vsub.f32 1.0, %v1292
  %v1357 = vsub.f32 1.0, %v1293
  %v1358 = vsub.f32 1.0, %v1294
  %v1359 = vsub.f32 1.0, %v1295
  %v1360 = vsub.f32 1.0, %v1296
  %v1361 = vsub.f32 1.0, %v1297
  %v1362 = vsub.f32 1.0, %v1298
  %v1363 = vsub.f32 1.0, %v1299
  %v1364 = vsub.f32 1.0, %v1300
  %v1365 = vsub.f32 1.0, %v1301
  %v1366 = vsub.f32 1.0, %v1302
  %v1367 = vsub.f32 1.0, %v1303
  %v1368 = vsub.f32 1.0, %v1304
  %v1369 = vsub.f32 1.0, %v1305
  %v1370 = vsub.f32 1.0, %v1306
  %v1371 = vsub.f32 1.0, %v1307
  %v1372 = vsub.f32 1.0, %v1308
  %v1373 = vsub.f32 1.0, %v1309
  %v1374 = vsub.f32 1.0, %v1310
  %v1375 = vsub.f32 1.0, %v1311
  %v1376 = vsub.f32 1.0, %v1312
  %v1377 = vsub.f32 1.0, %v1313
  %v1378 = vsub.f32 1.0, %v1314
  %v1379 = vsub.f32 1.0, %v1315
  %v1380 = vsub.f32 1.0, %v1316
  %v1381 = vsub.f32 1.0, %v1317
  %v1382 = vsub.f32 1.0, %v1318
  %v1383 = vsub.f32 1.0, %v1319
  %v1384 = vsub.f32 1.0, %v1320
  %v1385 = vsub.f32 1.0, %v1321
  %v1386 = vsub.f32 1.0, %v1322
  %v1387 = vsub.f32 1.0, %v1323
  %v1388 = vsub.f32 1.0, %v1324
  %v1389 = vsub.f32 1.0, %v1325
  %v1390 = vsub.f32 1.0, %v1326
  %v1391 = vsub.f32 1.0, %v1327
  %v1392 = vsub.f32 1.0, %v1328
  %v1393 = vsub.f32 1.0, %v1329
  %v1394 = vsub.f32 1.0, %v1330
  %v1395 = vsub.f32 1.0, %v1331
  %v1396 = vsub.f32 1.0, %v1332
  %v1397 = vsub.f32 1.0, %v1333
  %v1398 = vsub.f32 1.0, %v1334
  %v1399 = vsub.f32 1.0, %v1335
  %v1400 = vsub.f32 1.0, %v1336
  %v1401 = vsub.f32 1.0, %v1337
  %v1402 = vsub.f32 1.0, %v1338
  %v1403 = vsub.f32 1.0, %v1339
  %v1404 = vsub.f32 1.0, %v1340
  %v1405 = vsub.f32 1.0, %v1341
  %v1406 = vsub.f32 1.0, %v1342
  %v1407 = vsub.f32 1.0, %v1343
  %v1408 = vsub.f32 1.0, %v1344
  %v1409 = vsub.f32 1.0, %v1345
  %v1410 = vsub.f32 1.0, %v1346
  %v1411 = vsub.f32 1.0, %v1347
  %v1412 = vsub.f32 1.0, %v1348
  %v1413 = vsub.f32 1.0, %v1349
  %v1414 = vsub.f32 1.0, %v1350
  %v1415 = vsub.f32 1.0, %v1351
  %v1416 = vsub.f32 1.0, %v1352
  %v1417 = vsub.f32 1.0, %v1353
  %v1418 = vsub.f32 1.0, %v1354
  %v1419 = vmax.f32 %v1355, 0.0
  %v1420 = vmax.f32 %v1356, 0.0
  %v1421 = vmax.f32 %v1357, 0.0
  %v1422 = vmax.f32 %v1358, 0.0
  %v1423 = vmax.f32 %v1359, 0.0
  %v1424 = vmax.f32 %v1360, 0.0
  %v1425 = vmax.f32 %v1361, 0.0
  %v1426 = vmax.f32 %v1362, 0.0
  %v1427 = vmax.f32 %v1363, 0.0
  %v1428 = vmax.f32 %v1364, 0.0
  %v1429 = vmax.f32 %v1365, 0.0
  %v1430 = vmax.f32 %v1366, 0.0
  %v1431 = vmax.f32 %v1367, 0.0
  %v1432 = vmax.f32 %v1368, 0.0
  %v1433 = vmax.f32 %v1369, 0.0
  %v1434 = vmax.f32 %v1370, 0.0
  %v1435 = vmax.f32 %v1371, 0.0
  %v1436 = vmax.f32 %v1372, 0.0
  %v1437 = vmax.f32 %v1373, 0.0
  %v1438 = vmax.f32 %v1374, 0.0
  %v1439 = vmax.f32 %v1375, 0.0
  %v1440 = vmax.f32 %v1376, 0.0
  %v1441 = vmax.f32 %v1377, 0.0
  %v1442 = vmax.f32 %v1378, 0.0
  %v1443 = vmax.f32 %v1379, 0.0
  %v1444 = vmax.f32 %v1380, 0.0
  %v1445 = vmax.f32 %v1381, 0.0
  %v1446 = vmax.f32 %v1382, 0.0
  %v1447 = vmax.f32 %v1383, 0.0
  %v1448 = vmax.f32 %v1384, 0.0
  %v1449 = vmax.f32 %v1385, 0.0
  %v1450 = vmax.f32 %v1386, 0.0
  %v1451 = vmax.f32 %v1387, 0.0
  %v1452 = vmax.f32 %v1388, 0.0
  %v1453 = vmax.f32 %v1389, 0.0
  %v1454 = vmax.f32 %v1390, 0.0
  %v1455 = vmax.f32 %v1391, 0.0
  %v1456 = vmax.f32 %v1392, 0.0
  %v1457 = vmax.f32 %v1393, 0.0
  %v1458 = vmax.f32 %v1394, 0.0
  %v1459 = vmax.f32 %v1395, 0.0
  %v1460 = vmax.f32 %v1396, 0.0
  %v1461 = vmax.f32 %v1397, 0.0
  %v1462 = vmax.f32 %v1398, 0.0
  %v1463 = vmax.f32 %v1399, 0.0
  %v1464 = vmax.f32 %v1400, 0.0
  %v1465 = vmax.f32 %v1401, 0.0
  %v1466 = vmax.f32 %v1402, 0.0
  %v1467 = vmax.f32 %v1403, 0.0
  %v1468 = vmax.f32 %v1404, 0.0
  %v1469 = vmax.f32 %v1405, 0.0
  %v1470 = vmax.f32 %v1406, 0.0
  %v1471 = vmax.f32 %v1407, 0.0
  %v1472 = vmax.f32 %v1408, 0.0
  %v1473 = vmax.f32 %v1409, 0.0
  %v1474 = vmax.f32 %v1410, 0.0
  %v1475 = vmax.f32 %v1411, 0.0
  %v1476 = vmax.f32 %v1412, 0.0
  %v1477 = vmax.f32 %v1413, 0.0
  %v1478 = vmax.f32 %v1414, 0.0
  %v1479 = vmax.f32 %v1415, 0.0
  %v1480 = vmax.f32 %v1416, 0.0
  %v1481 = vmax.f32 %v1417, 0.0
  %v1482 = vmax.f32 %v1418, 0.0
  %v1483 = vrsqrt.pop %v1419
  %v1484 = vmul.f32 %v1419, %v1483
  %vm1485 = vcmp.eq.f32.partialorder %v1419, inf
  %v1486 = vsel %vm1485, %v1419, %v1484
  %vm1487 = vcmp.eq.f32.partialorder %v1419, 0.0
  %v1488 = vand.u32 %v1419, 2147483648
  %v1489 = vsel %vm1487, %v1488, %v1486
  %v1490 = vrsqrt.pop %v1420
  %v1491 = vmul.f32 %v1420, %v1490
  %vm1492 = vcmp.eq.f32.partialorder %v1420, inf
  %v1493 = vsel %vm1492, %v1420, %v1491
  %vm1494 = vcmp.eq.f32.partialorder %v1420, 0.0
  %v1495 = vand.u32 %v1420, 2147483648
  %v1496 = vsel %vm1494, %v1495, %v1493
  %v1497 = vrsqrt.pop %v1421
  %v1498 = vmul.f32 %v1421, %v1497
  %vm1499 = vcmp.eq.f32.partialorder %v1421, inf
  %v1500 = vsel %vm1499, %v1421, %v1498
  %vm1501 = vcmp.eq.f32.partialorder %v1421, 0.0
  %v1502 = vand.u32 %v1421, 2147483648
  %v1503 = vsel %vm1501, %v1502, %v1500
  %v1504 = vrsqrt.pop %v1422
  %v1505 = vmul.f32 %v1422, %v1504
  %vm1506 = vcmp.eq.f32.partialorder %v1422, inf
  %v1507 = vsel %vm1506, %v1422, %v1505
  %vm1508 = vcmp.eq.f32.partialorder %v1422, 0.0
  %v1509 = vand.u32 %v1422, 2147483648
  %v1510 = vsel %vm1508, %v1509, %v1507
  %v1511 = vrsqrt.pop %v1423
  %v1512 = vmul.f32 %v1423, %v1511
  %vm1513 = vcmp.eq.f32.partialorder %v1423, inf
  %v1514 = vsel %vm1513, %v1423, %v1512
  %vm1515 = vcmp.eq.f32.partialorder %v1423, 0.0
  %v1516 = vand.u32 %v1423, 2147483648
  %v1517 = vsel %vm1515, %v1516, %v1514
  %v1518 = vrsqrt.pop %v1424
  %v1519 = vmul.f32 %v1424, %v1518
  %vm1520 = vcmp.eq.f32.partialorder %v1424, inf
  %v1521 = vsel %vm1520, %v1424, %v1519
  %vm1522 = vcmp.eq.f32.partialorder %v1424, 0.0
  %v1523 = vand.u32 %v1424, 2147483648
  %v1524 = vsel %vm1522, %v1523, %v1521
  %v1525 = vrsqrt.pop %v1425
  %v1526 = vmul.f32 %v1425, %v1525
  %vm1527 = vcmp.eq.f32.partialorder %v1425, inf
  %v1528 = vsel %vm1527, %v1425, %v1526
  %vm1529 = vcmp.eq.f32.partialorder %v1425, 0.0
  %v1530 = vand.u32 %v1425, 2147483648
  %v1531 = vsel %vm1529, %v1530, %v1528
  %v1532 = vrsqrt.pop %v1426
  %v1533 = vmul.f32 %v1426, %v1532
  %vm1534 = vcmp.eq.f32.partialorder %v1426, inf
  %v1535 = vsel %vm1534, %v1426, %v1533
  %vm1536 = vcmp.eq.f32.partialorder %v1426, 0.0
  %v1537 = vand.u32 %v1426, 2147483648
  %v1538 = vsel %vm1536, %v1537, %v1535
  %v1539 = vrsqrt.pop %v1427
  %v1540 = vmul.f32 %v1427, %v1539
  %vm1541 = vcmp.eq.f32.partialorder %v1427, inf
  %v1542 = vsel %vm1541, %v1427, %v1540
  %vm1543 = vcmp.eq.f32.partialorder %v1427, 0.0
  %v1544 = vand.u32 %v1427, 2147483648
  %v1545 = vsel %vm1543, %v1544, %v1542
  %v1546 = vrsqrt.pop %v1428
  %v1547 = vmul.f32 %v1428, %v1546
  %vm1548 = vcmp.eq.f32.partialorder %v1428, inf
  %v1549 = vsel %vm1548, %v1428, %v1547
  %vm1550 = vcmp.eq.f32.partialorder %v1428, 0.0
  %v1551 = vand.u32 %v1428, 2147483648
  %v1552 = vsel %vm1550, %v1551, %v1549
  %v1553 = vrsqrt.pop %v1429
  %v1554 = vmul.f32 %v1429, %v1553
  %vm1555 = vcmp.eq.f32.partialorder %v1429, inf
  %v1556 = vsel %vm1555, %v1429, %v1554
  %vm1557 = vcmp.eq.f32.partialorder %v1429, 0.0
  %v1558 = vand.u32 %v1429, 2147483648
  %v1559 = vsel %vm1557, %v1558, %v1556
  %v1560 = vrsqrt.pop %v1430
  %v1561 = vmul.f32 %v1430, %v1560
  %vm1562 = vcmp.eq.f32.partialorder %v1430, inf
  %v1563 = vsel %vm1562, %v1430, %v1561
  %vm1564 = vcmp.eq.f32.partialorder %v1430, 0.0
  %v1565 = vand.u32 %v1430, 2147483648
  %v1566 = vsel %vm1564, %v1565, %v1563
  %v1567 = vrsqrt.pop %v1431
  %v1568 = vmul.f32 %v1431, %v1567
  %vm1569 = vcmp.eq.f32.partialorder %v1431, inf
  %v1570 = vsel %vm1569, %v1431, %v1568
  %vm1571 = vcmp.eq.f32.partialorder %v1431, 0.0
  %v1572 = vand.u32 %v1431, 2147483648
  %v1573 = vsel %vm1571, %v1572, %v1570
  %v1574 = vrsqrt.pop %v1432
  %v1575 = vmul.f32 %v1432, %v1574
  %vm1576 = vcmp.eq.f32.partialorder %v1432, inf
  %v1577 = vsel %vm1576, %v1432, %v1575
  %vm1578 = vcmp.eq.f32.partialorder %v1432, 0.0
  %v1579 = vand.u32 %v1432, 2147483648
  %v1580 = vsel %vm1578, %v1579, %v1577
  %v1581 = vrsqrt.pop %v1433
  %v1582 = vmul.f32 %v1433, %v1581
  %vm1583 = vcmp.eq.f32.partialorder %v1433, inf
  %v1584 = vsel %vm1583, %v1433, %v1582
  %vm1585 = vcmp.eq.f32.partialorder %v1433, 0.0
  %v1586 = vand.u32 %v1433, 2147483648
  %v1587 = vsel %vm1585, %v1586, %v1584
  %v1588 = vrsqrt.pop %v1434
  %v1589 = vmul.f32 %v1434, %v1588
  %vm1590 = vcmp.eq.f32.partialorder %v1434, inf
  %v1591 = vsel %vm1590, %v1434, %v1589
  %vm1592 = vcmp.eq.f32.partialorder %v1434, 0.0
  %v1593 = vand.u32 %v1434, 2147483648
  %v1594 = vsel %vm1592, %v1593, %v1591
  %v1595 = vrsqrt.pop %v1435
  %v1596 = vmul.f32 %v1435, %v1595
  %vm1597 = vcmp.eq.f32.partialorder %v1435, inf
  %v1598 = vsel %vm1597, %v1435, %v1596
  %vm1599 = vcmp.eq.f32.partialorder %v1435, 0.0
  %v1600 = vand.u32 %v1435, 2147483648
  %v1601 = vsel %vm1599, %v1600, %v1598
  %v1602 = vrsqrt.pop %v1436
  %v1603 = vmul.f32 %v1436, %v1602
  %vm1604 = vcmp.eq.f32.partialorder %v1436, inf
  %v1605 = vsel %vm1604, %v1436, %v1603
  %vm1606 = vcmp.eq.f32.partialorder %v1436, 0.0
  %v1607 = vand.u32 %v1436, 2147483648
  %v1608 = vsel %vm1606, %v1607, %v1605
  %v1609 = vrsqrt.pop %v1437
  %v1610 = vmul.f32 %v1437, %v1609
  %vm1611 = vcmp.eq.f32.partialorder %v1437, inf
  %v1612 = vsel %vm1611, %v1437, %v1610
  %vm1613 = vcmp.eq.f32.partialorder %v1437, 0.0
  %v1614 = vand.u32 %v1437, 2147483648
  %v1615 = vsel %vm1613, %v1614, %v1612
  %v1616 = vrsqrt.pop %v1438
  %v1617 = vmul.f32 %v1438, %v1616
  %vm1618 = vcmp.eq.f32.partialorder %v1438, inf
  %v1619 = vsel %vm1618, %v1438, %v1617
  %vm1620 = vcmp.eq.f32.partialorder %v1438, 0.0
  %v1621 = vand.u32 %v1438, 2147483648
  %v1622 = vsel %vm1620, %v1621, %v1619
  %v1623 = vrsqrt.pop %v1439
  %v1624 = vmul.f32 %v1439, %v1623
  %vm1625 = vcmp.eq.f32.partialorder %v1439, inf
  %v1626 = vsel %vm1625, %v1439, %v1624
  %vm1627 = vcmp.eq.f32.partialorder %v1439, 0.0
  %v1628 = vand.u32 %v1439, 2147483648
  %v1629 = vsel %vm1627, %v1628, %v1626
  %v1630 = vrsqrt.pop %v1440
  %v1631 = vmul.f32 %v1440, %v1630
  %vm1632 = vcmp.eq.f32.partialorder %v1440, inf
  %v1633 = vsel %vm1632, %v1440, %v1631
  %vm1634 = vcmp.eq.f32.partialorder %v1440, 0.0
  %v1635 = vand.u32 %v1440, 2147483648
  %v1636 = vsel %vm1634, %v1635, %v1633
  %v1637 = vrsqrt.pop %v1441
  %v1638 = vmul.f32 %v1441, %v1637
  %vm1639 = vcmp.eq.f32.partialorder %v1441, inf
  %v1640 = vsel %vm1639, %v1441, %v1638
  %vm1641 = vcmp.eq.f32.partialorder %v1441, 0.0
  %v1642 = vand.u32 %v1441, 2147483648
  %v1643 = vsel %vm1641, %v1642, %v1640
  %v1644 = vrsqrt.pop %v1442
  %v1645 = vmul.f32 %v1442, %v1644
  %vm1646 = vcmp.eq.f32.partialorder %v1442, inf
  %v1647 = vsel %vm1646, %v1442, %v1645
  %vm1648 = vcmp.eq.f32.partialorder %v1442, 0.0
  %v1649 = vand.u32 %v1442, 2147483648
  %v1650 = vsel %vm1648, %v1649, %v1647
  %v1651 = vrsqrt.pop %v1443
  %v1652 = vmul.f32 %v1443, %v1651
  %vm1653 = vcmp.eq.f32.partialorder %v1443, inf
  %v1654 = vsel %vm1653, %v1443, %v1652
  %vm1655 = vcmp.eq.f32.partialorder %v1443, 0.0
  %v1656 = vand.u32 %v1443, 2147483648
  %v1657 = vsel %vm1655, %v1656, %v1654
  %v1658 = vrsqrt.pop %v1444
  %v1659 = vmul.f32 %v1444, %v1658
  %vm1660 = vcmp.eq.f32.partialorder %v1444, inf
  %v1661 = vsel %vm1660, %v1444, %v1659
  %vm1662 = vcmp.eq.f32.partialorder %v1444, 0.0
  %v1663 = vand.u32 %v1444, 2147483648
  %v1664 = vsel %vm1662, %v1663, %v1661
  %v1665 = vrsqrt.pop %v1445
  %v1666 = vmul.f32 %v1445, %v1665
  %vm1667 = vcmp.eq.f32.partialorder %v1445, inf
  %v1668 = vsel %vm1667, %v1445, %v1666
  %vm1669 = vcmp.eq.f32.partialorder %v1445, 0.0
  %v1670 = vand.u32 %v1445, 2147483648
  %v1671 = vsel %vm1669, %v1670, %v1668
  %v1672 = vrsqrt.pop %v1446
  %v1673 = vmul.f32 %v1446, %v1672
  %vm1674 = vcmp.eq.f32.partialorder %v1446, inf
  %v1675 = vsel %vm1674, %v1446, %v1673
  %vm1676 = vcmp.eq.f32.partialorder %v1446, 0.0
  %v1677 = vand.u32 %v1446, 2147483648
  %v1678 = vsel %vm1676, %v1677, %v1675
  %v1679 = vrsqrt.pop %v1447
  %v1680 = vmul.f32 %v1447, %v1679
  %vm1681 = vcmp.eq.f32.partialorder %v1447, inf
  %v1682 = vsel %vm1681, %v1447, %v1680
  %vm1683 = vcmp.eq.f32.partialorder %v1447, 0.0
  %v1684 = vand.u32 %v1447, 2147483648
  %v1685 = vsel %vm1683, %v1684, %v1682
  %v1686 = vrsqrt.pop %v1448
  %v1687 = vmul.f32 %v1448, %v1686
  %vm1688 = vcmp.eq.f32.partialorder %v1448, inf
  %v1689 = vsel %vm1688, %v1448, %v1687
  %vm1690 = vcmp.eq.f32.partialorder %v1448, 0.0
  %v1691 = vand.u32 %v1448, 2147483648
  %v1692 = vsel %vm1690, %v1691, %v1689
  %v1693 = vrsqrt.pop %v1449
  %v1694 = vmul.f32 %v1449, %v1693
  %vm1695 = vcmp.eq.f32.partialorder %v1449, inf
  %v1696 = vsel %vm1695, %v1449, %v1694
  %vm1697 = vcmp.eq.f32.partialorder %v1449, 0.0
  %v1698 = vand.u32 %v1449, 2147483648
  %v1699 = vsel %vm1697, %v1698, %v1696
  %v1700 = vrsqrt.pop %v1450
  %v1701 = vmul.f32 %v1450, %v1700
  %vm1702 = vcmp.eq.f32.partialorder %v1450, inf
  %v1703 = vsel %vm1702, %v1450, %v1701
  %vm1704 = vcmp.eq.f32.partialorder %v1450, 0.0
  %v1705 = vand.u32 %v1450, 2147483648
  %v1706 = vsel %vm1704, %v1705, %v1703
  %v1707 = vrsqrt.pop %v1451
  %v1708 = vmul.f32 %v1451, %v1707
  %vm1709 = vcmp.eq.f32.partialorder %v1451, inf
  %v1710 = vsel %vm1709, %v1451, %v1708
  %vm1711 = vcmp.eq.f32.partialorder %v1451, 0.0
  %v1712 = vand.u32 %v1451, 2147483648
  %v1713 = vsel %vm1711, %v1712, %v1710
  %v1714 = vrsqrt.pop %v1452
  %v1715 = vmul.f32 %v1452, %v1714
  %vm1716 = vcmp.eq.f32.partialorder %v1452, inf
  %v1717 = vsel %vm1716, %v1452, %v1715
  %vm1718 = vcmp.eq.f32.partialorder %v1452, 0.0
  %v1719 = vand.u32 %v1452, 2147483648
  %v1720 = vsel %vm1718, %v1719, %v1717
  %v1721 = vrsqrt.pop %v1453
  %v1722 = vmul.f32 %v1453, %v1721
  %vm1723 = vcmp.eq.f32.partialorder %v1453, inf
  %v1724 = vsel %vm1723, %v1453, %v1722
  %vm1725 = vcmp.eq.f32.partialorder %v1453, 0.0
  %v1726 = vand.u32 %v1453, 2147483648
  %v1727 = vsel %vm1725, %v1726, %v1724
  %v1728 = vrsqrt.pop %v1454
  %v1729 = vmul.f32 %v1454, %v1728
  %vm1730 = vcmp.eq.f32.partialorder %v1454, inf
  %v1731 = vsel %vm1730, %v1454, %v1729
  %vm1732 = vcmp.eq.f32.partialorder %v1454, 0.0
  %v1733 = vand.u32 %v1454, 2147483648
  %v1734 = vsel %vm1732, %v1733, %v1731
  %v1735 = vrsqrt.pop %v1455
  %v1736 = vmul.f32 %v1455, %v1735
  %vm1737 = vcmp.eq.f32.partialorder %v1455, inf
  %v1738 = vsel %vm1737, %v1455, %v1736
  %vm1739 = vcmp.eq.f32.partialorder %v1455, 0.0
  %v1740 = vand.u32 %v1455, 2147483648
  %v1741 = vsel %vm1739, %v1740, %v1738
  %v1742 = vrsqrt.pop %v1456
  %v1743 = vmul.f32 %v1456, %v1742
  %vm1744 = vcmp.eq.f32.partialorder %v1456, inf
  %v1745 = vsel %vm1744, %v1456, %v1743
  %vm1746 = vcmp.eq.f32.partialorder %v1456, 0.0
  %v1747 = vand.u32 %v1456, 2147483648
  %v1748 = vsel %vm1746, %v1747, %v1745
  %v1749 = vrsqrt.pop %v1457
  %v1750 = vmul.f32 %v1457, %v1749
  %vm1751 = vcmp.eq.f32.partialorder %v1457, inf
  %v1752 = vsel %vm1751, %v1457, %v1750
  %vm1753 = vcmp.eq.f32.partialorder %v1457, 0.0
  %v1754 = vand.u32 %v1457, 2147483648
  %v1755 = vsel %vm1753, %v1754, %v1752
  %v1756 = vrsqrt.pop %v1458
  %v1757 = vmul.f32 %v1458, %v1756
  %vm1758 = vcmp.eq.f32.partialorder %v1458, inf
  %v1759 = vsel %vm1758, %v1458, %v1757
  %vm1760 = vcmp.eq.f32.partialorder %v1458, 0.0
  %v1761 = vand.u32 %v1458, 2147483648
  %v1762 = vsel %vm1760, %v1761, %v1759
  %v1763 = vrsqrt.pop %v1459
  %v1764 = vmul.f32 %v1459, %v1763
  %vm1765 = vcmp.eq.f32.partialorder %v1459, inf
  %v1766 = vsel %vm1765, %v1459, %v1764
  %vm1767 = vcmp.eq.f32.partialorder %v1459, 0.0
  %v1768 = vand.u32 %v1459, 2147483648
  %v1769 = vsel %vm1767, %v1768, %v1766
  %v1770 = vrsqrt.pop %v1460
  %v1771 = vmul.f32 %v1460, %v1770
  %vm1772 = vcmp.eq.f32.partialorder %v1460, inf
  %v1773 = vsel %vm1772, %v1460, %v1771
  %vm1774 = vcmp.eq.f32.partialorder %v1460, 0.0
  %v1775 = vand.u32 %v1460, 2147483648
  %v1776 = vsel %vm1774, %v1775, %v1773
  %v1777 = vrsqrt.pop %v1461
  %v1778 = vmul.f32 %v1461, %v1777
  %vm1779 = vcmp.eq.f32.partialorder %v1461, inf
  %v1780 = vsel %vm1779, %v1461, %v1778
  %vm1781 = vcmp.eq.f32.partialorder %v1461, 0.0
  %v1782 = vand.u32 %v1461, 2147483648
  %v1783 = vsel %vm1781, %v1782, %v1780
  %v1784 = vrsqrt.pop %v1462
  %v1785 = vmul.f32 %v1462, %v1784
  %vm1786 = vcmp.eq.f32.partialorder %v1462, inf
  %v1787 = vsel %vm1786, %v1462, %v1785
  %vm1788 = vcmp.eq.f32.partialorder %v1462, 0.0
  %v1789 = vand.u32 %v1462, 2147483648
  %v1790 = vsel %vm1788, %v1789, %v1787
  %v1791 = vrsqrt.pop %v1463
  %v1792 = vmul.f32 %v1463, %v1791
  %vm1793 = vcmp.eq.f32.partialorder %v1463, inf
  %v1794 = vsel %vm1793, %v1463, %v1792
  %vm1795 = vcmp.eq.f32.partialorder %v1463, 0.0
  %v1796 = vand.u32 %v1463, 2147483648
  %v1797 = vsel %vm1795, %v1796, %v1794
  %v1798 = vrsqrt.pop %v1464
  %v1799 = vmul.f32 %v1464, %v1798
  %vm1800 = vcmp.eq.f32.partialorder %v1464, inf
  %v1801 = vsel %vm1800, %v1464, %v1799
  %vm1802 = vcmp.eq.f32.partialorder %v1464, 0.0
  %v1803 = vand.u32 %v1464, 2147483648
  %v1804 = vsel %vm1802, %v1803, %v1801
  %v1805 = vrsqrt.pop %v1465
  %v1806 = vmul.f32 %v1465, %v1805
  %vm1807 = vcmp.eq.f32.partialorder %v1465, inf
  %v1808 = vsel %vm1807, %v1465, %v1806
  %vm1809 = vcmp.eq.f32.partialorder %v1465, 0.0
  %v1810 = vand.u32 %v1465, 2147483648
  %v1811 = vsel %vm1809, %v1810, %v1808
  %v1812 = vrsqrt.pop %v1466
  %v1813 = vmul.f32 %v1466, %v1812
  %vm1814 = vcmp.eq.f32.partialorder %v1466, inf
  %v1815 = vsel %vm1814, %v1466, %v1813
  %vm1816 = vcmp.eq.f32.partialorder %v1466, 0.0
  %v1817 = vand.u32 %v1466, 2147483648
  %v1818 = vsel %vm1816, %v1817, %v1815
  %v1819 = vrsqrt.pop %v1467
  %v1820 = vmul.f32 %v1467, %v1819
  %vm1821 = vcmp.eq.f32.partialorder %v1467, inf
  %v1822 = vsel %vm1821, %v1467, %v1820
  %vm1823 = vcmp.eq.f32.partialorder %v1467, 0.0
  %v1824 = vand.u32 %v1467, 2147483648
  %v1825 = vsel %vm1823, %v1824, %v1822
  %v1826 = vrsqrt.pop %v1468
  %v1827 = vmul.f32 %v1468, %v1826
  %vm1828 = vcmp.eq.f32.partialorder %v1468, inf
  %v1829 = vsel %vm1828, %v1468, %v1827
  %vm1830 = vcmp.eq.f32.partialorder %v1468, 0.0
  %v1831 = vand.u32 %v1468, 2147483648
  %v1832 = vsel %vm1830, %v1831, %v1829
  %v1833 = vrsqrt.pop %v1469
  %v1834 = vmul.f32 %v1469, %v1833
  %vm1835 = vcmp.eq.f32.partialorder %v1469, inf
  %v1836 = vsel %vm1835, %v1469, %v1834
  %vm1837 = vcmp.eq.f32.partialorder %v1469, 0.0
  %v1838 = vand.u32 %v1469, 2147483648
  %v1839 = vsel %vm1837, %v1838, %v1836
  %v1840 = vrsqrt.pop %v1470
  %v1841 = vmul.f32 %v1470, %v1840
  %vm1842 = vcmp.eq.f32.partialorder %v1470, inf
  %v1843 = vsel %vm1842, %v1470, %v1841
  %vm1844 = vcmp.eq.f32.partialorder %v1470, 0.0
  %v1845 = vand.u32 %v1470, 2147483648
  %v1846 = vsel %vm1844, %v1845, %v1843
  %v1847 = vrsqrt.pop %v1471
  %v1848 = vmul.f32 %v1471, %v1847
  %vm1849 = vcmp.eq.f32.partialorder %v1471, inf
  %v1850 = vsel %vm1849, %v1471, %v1848
  %vm1851 = vcmp.eq.f32.partialorder %v1471, 0.0
  %v1852 = vand.u32 %v1471, 2147483648
  %v1853 = vsel %vm1851, %v1852, %v1850
  %v1854 = vrsqrt.pop %v1472
  %v1855 = vmul.f32 %v1472, %v1854
  %vm1856 = vcmp.eq.f32.partialorder %v1472, inf
  %v1857 = vsel %vm1856, %v1472, %v1855
  %vm1858 = vcmp.eq.f32.partialorder %v1472, 0.0
  %v1859 = vand.u32 %v1472, 2147483648
  %v1860 = vsel %vm1858, %v1859, %v1857
  %v1861 = vrsqrt.pop %v1473
  %v1862 = vmul.f32 %v1473, %v1861
  %vm1863 = vcmp.eq.f32.partialorder %v1473, inf
  %v1864 = vsel %vm1863, %v1473, %v1862
  %vm1865 = vcmp.eq.f32.partialorder %v1473, 0.0
  %v1866 = vand.u32 %v1473, 2147483648
  %v1867 = vsel %vm1865, %v1866, %v1864
  %v1868 = vrsqrt.pop %v1474
  %v1869 = vmul.f32 %v1474, %v1868
  %vm1870 = vcmp.eq.f32.partialorder %v1474, inf
  %v1871 = vsel %vm1870, %v1474, %v1869
  %vm1872 = vcmp.eq.f32.partialorder %v1474, 0.0
  %v1873 = vand.u32 %v1474, 2147483648
  %v1874 = vsel %vm1872, %v1873, %v1871
  %v1875 = vrsqrt.pop %v1475
  %v1876 = vmul.f32 %v1475, %v1875
  %vm1877 = vcmp.eq.f32.partialorder %v1475, inf
  %v1878 = vsel %vm1877, %v1475, %v1876
  %vm1879 = vcmp.eq.f32.partialorder %v1475, 0.0
  %v1880 = vand.u32 %v1475, 2147483648
  %v1881 = vsel %vm1879, %v1880, %v1878
  %v1882 = vrsqrt.pop %v1476
  %v1883 = vmul.f32 %v1476, %v1882
  %vm1884 = vcmp.eq.f32.partialorder %v1476, inf
  %v1885 = vsel %vm1884, %v1476, %v1883
  %vm1886 = vcmp.eq.f32.partialorder %v1476, 0.0
  %v1887 = vand.u32 %v1476, 2147483648
  %v1888 = vsel %vm1886, %v1887, %v1885
  %v1889 = vrsqrt.pop %v1477
  %v1890 = vmul.f32 %v1477, %v1889
  %vm1891 = vcmp.eq.f32.partialorder %v1477, inf
  %v1892 = vsel %vm1891, %v1477, %v1890
  %vm1893 = vcmp.eq.f32.partialorder %v1477, 0.0
  %v1894 = vand.u32 %v1477, 2147483648
  %v1895 = vsel %vm1893, %v1894, %v1892
  %v1896 = vrsqrt.pop %v1478
  %v1897 = vmul.f32 %v1478, %v1896
  %vm1898 = vcmp.eq.f32.partialorder %v1478, inf
  %v1899 = vsel %vm1898, %v1478, %v1897
  %vm1900 = vcmp.eq.f32.partialorder %v1478, 0.0
  %v1901 = vand.u32 %v1478, 2147483648
  %v1902 = vsel %vm1900, %v1901, %v1899
  %v1903 = vrsqrt.pop %v1479
  %v1904 = vmul.f32 %v1479, %v1903
  %vm1905 = vcmp.eq.f32.partialorder %v1479, inf
  %v1906 = vsel %vm1905, %v1479, %v1904
  %vm1907 = vcmp.eq.f32.partialorder %v1479, 0.0
  %v1908 = vand.u32 %v1479, 2147483648
  %v1909 = vsel %vm1907, %v1908, %v1906
  %v1910 = vrsqrt.pop %v1480
  %v1911 = vmul.f32 %v1480, %v1910
  %vm1912 = vcmp.eq.f32.partialorder %v1480, inf
  %v1913 = vsel %vm1912, %v1480, %v1911
  %vm1914 = vcmp.eq.f32.partialorder %v1480, 0.0
  %v1915 = vand.u32 %v1480, 2147483648
  %v1916 = vsel %vm1914, %v1915, %v1913
  %v1917 = vrsqrt.pop %v1481
  %v1918 = vmul.f32 %v1481, %v1917
  %vm1919 = vcmp.eq.f32.partialorder %v1481, inf
  %v1920 = vsel %vm1919, %v1481, %v1918
  %vm1921 = vcmp.eq.f32.partialorder %v1481, 0.0
  %v1922 = vand.u32 %v1481, 2147483648
  %v1923 = vsel %vm1921, %v1922, %v1920
  %v1924 = vrsqrt.pop %v1482
  %v1925 = vmul.f32 %v1482, %v1924
  %vm1926 = vcmp.eq.f32.partialorder %v1482, inf
  %v1927 = vsel %vm1926, %v1482, %v1925
  %vm1928 = vcmp.eq.f32.partialorder %v1482, 0.0
  %v1929 = vand.u32 %v1482, 2147483648
  %v1930 = vsel %vm1928, %v1929, %v1927
  %v1931 = vmul.f32 %v964, %v22
  %v1932 = vmul.f32 %v966, %v23
  %v1933 = vmul.f32 %v968, %v24
  %v1934 = vmul.f32 %v970, %v25
  %v1935 = vmul.f32 %v972, %v26
  %v1936 = vmul.f32 %v974, %v27
  %v1937 = vmul.f32 %v976, %v28
  %v1938 = vmul.f32 %v978, %v29
  %v1939 = vmul.f32 %v980, %v30
  %v1940 = vmul.f32 %v982, %v31
  %v1941 = vmul.f32 %v984, %v32
  %v1942 = vmul.f32 %v986, %v33
  %v1943 = vmul.f32 %v988, %v34
  %v1944 = vmul.f32 %v990, %v35
  %v1945 = vmul.f32 %v992, %v36
  %v1946 = vmul.f32 %v994, %v37
  %v1947 = vmul.f32 %v996, %v38
  %v1948 = vmul.f32 %v998, %v39
  %v1949 = vmul.f32 %v1000, %v40
  %v1950 = vmul.f32 %v1002, %v41
  %v1951 = vmul.f32 %v1004, %v42
  %v1952 = vmul.f32 %v1006, %v43
  %v1953 = vmul.f32 %v1008, %v44
  %v1954 = vmul.f32 %v1010, %v45
  %v1955 = vmul.f32 %v1012, %v46
  %v1956 = vmul.f32 %v1014, %v47
  %v1957 = vmul.f32 %v1016, %v48
  %v1958 = vmul.f32 %v1018, %v49
  %v1959 = vmul.f32 %v1020, %v50
  %v1960 = vmul.f32 %v1022, %v51
  %v1961 = vmul.f32 %v1024, %v52
  %v1962 = vmul.f32 %v1026, %v53
  %v1963 = vmul.f32 %v1028, %v54
  %v1964 = vmul.f32 %v1030, %v55
  %v1965 = vmul.f32 %v1032, %v56
  %v1966 = vmul.f32 %v1034, %v57
  %v1967 = vmul.f32 %v1036, %v58
  %v1968 = vmul.f32 %v1038, %v59
  %v1969 = vmul.f32 %v1040, %v60
  %v1970 = vmul.f32 %v1042, %v61
  %v1971 = vmul.f32 %v1044, %v62
  %v1972 = vmul.f32 %v1046, %v63
  %v1973 = vmul.f32 %v1048, %v64
  %v1974 = vmul.f32 %v1050, %v65
  %v1975 = vmul.f32 %v1052, %v66
  %v1976 = vmul.f32 %v1054, %v67
  %v1977 = vmul.f32 %v1056, %v68
  %v1978 = vmul.f32 %v1058, %v69
  %v1979 = vmul.f32 %v1060, %v70
  %v1980 = vmul.f32 %v1062, %v71
  %v1981 = vmul.f32 %v1064, %v72
  %v1982 = vmul.f32 %v1066, %v73
  %v1983 = vmul.f32 %v1068, %v74
  %v1984 = vmul.f32 %v1070, %v75
  %v1985 = vmul.f32 %v1072, %v76
  %v1986 = vmul.f32 %v1074, %v77
  %v1987 = vmul.f32 %v1076, %v78
  %v1988 = vmul.f32 %v1078, %v79
  %v1989 = vmul.f32 %v1080, %v80
  %v1990 = vmul.f32 %v1082, %v81
  %v1991 = vmul.f32 %v1084, %v82
  %v1992 = vmul.f32 %v1086, %v83
  %v1993 = vmul.f32 %v1088, %v84
  %v1994 = vmul.f32 %v1090, %v85
  %v1995 = vmul.f32 %v1489, %v1931
  %v1996 = vmul.f32 %v1496, %v1932
  %v1997 = vmul.f32 %v1503, %v1933
  %v1998 = vmul.f32 %v1510, %v1934
  %v1999 = vmul.f32 %v1517, %v1935
  %v2000 = vmul.f32 %v1524, %v1936
  %v2001 = vmul.f32 %v1531, %v1937
  %v2002 = vmul.f32 %v1538, %v1938
  %v2003 = vmul.f32 %v1545, %v1939
  %v2004 = vmul.f32 %v1552, %v1940
  %v2005 = vmul.f32 %v1559, %v1941
  %v2006 = vmul.f32 %v1566, %v1942
  %v2007 = vmul.f32 %v1573, %v1943
  %v2008 = vmul.f32 %v1580, %v1944
  %v2009 = vmul.f32 %v1587, %v1945
  %v2010 = vmul.f32 %v1594, %v1946
  %v2011 = vmul.f32 %v1601, %v1947
  %v2012 = vmul.f32 %v1608, %v1948
  %v2013 = vmul.f32 %v1615, %v1949
  %v2014 = vmul.f32 %v1622, %v1950
  %v2015 = vmul.f32 %v1629, %v1951
  %v2016 = vmul.f32 %v1636, %v1952
  %v2017 = vmul.f32 %v1643, %v1953
  %v2018 = vmul.f32 %v1650, %v1954
  %v2019 = vmul.f32 %v1657, %v1955
  %v2020 = vmul.f32 %v1664, %v1956
  %v2021 = vmul.f32 %v1671, %v1957
  %v2022 = vmul.f32 %v1678, %v1958
  %v2023 = vmul.f32 %v1685, %v1959
  %v2024 = vmul.f32 %v1692, %v1960
  %v2025 = vmul.f32 %v1699, %v1961
  %v2026 = vmul.f32 %v1706, %v1962
  %v2027 = vmul.f32 %v1713, %v1963
  %v2028 = vmul.f32 %v1720, %v1964
  %v2029 = vmul.f32 %v1727, %v1965
  %v2030 = vmul.f32 %v1734, %v1966
  %v2031 = vmul.f32 %v1741, %v1967
  %v2032 = vmul.f32 %v1748, %v1968
  %v2033 = vmul.f32 %v1755, %v1969
  %v2034 = vmul.f32 %v1762, %v1970
  %v2035 = vmul.f32 %v1769, %v1971
  %v2036 = vmul.f32 %v1776, %v1972
  %v2037 = vmul.f32 %v1783, %v1973
  %v2038 = vmul.f32 %v1790, %v1974
  %v2039 = vmul.f32 %v1797, %v1975
  %v2040 = vmul.f32 %v1804, %v1976
  %v2041 = vmul.f32 %v1811, %v1977
  %v2042 = vmul.f32 %v1818, %v1978
  %v2043 = vmul.f32 %v1825, %v1979
  %v2044 = vmul.f32 %v1832, %v1980
  %v2045 = vmul.f32 %v1839, %v1981
  %v2046 = vmul.f32 %v1846, %v1982
  %v2047 = vmul.f32 %v1853, %v1983
  %v2048 = vmul.f32 %v1860, %v1984
  %v2049 = vmul.f32 %v1867, %v1985
  %v2050 = vmul.f32 %v1874, %v1986
  %v2051 = vmul.f32 %v1881, %v1987
  %v2052 = vmul.f32 %v1888, %v1988
  %v2053 = vmul.f32 %v1895, %v1989
  %v2054 = vmul.f32 %v1902, %v1990
  %v2055 = vmul.f32 %v1909, %v1991
  %v2056 = vmul.f32 %v1916, %v1992
  %v2057 = vmul.f32 %v1923, %v1993
  %v2058 = vmul.f32 %v1930, %v1994
  %v2059 = vmul.f32 %v1166, %v1164
  %v2060 = vmul.f32 %v1168, %v1166
  %v2061 = vmul.f32 %v1170, %v1168
  %v2062 = vmul.f32 %v1172, %v1170
  %v2063 = vmul.f32 %v1174, %v1172
  %v2064 = vmul.f32 %v1176, %v1174
  %v2065 = vmul.f32 %v1178, %v1176
  %v2066 = vmul.f32 %v1180, %v1178
  %v2067 = vmul.f32 %v1182, %v1180
  %v2068 = vmul.f32 %v1184, %v1182
  %v2069 = vmul.f32 %v1186, %v1184
  %v2070 = vmul.f32 %v1188, %v1186
  %v2071 = vmul.f32 %v1190, %v1188
  %v2072 = vmul.f32 %v1192, %v1190
  %v2073 = vmul.f32 %v1194, %v1192
  %v2074 = vmul.f32 %v1196, %v1194
  %v2075 = vmul.f32 %v1198, %v1196
  %v2076 = vmul.f32 %v1200, %v1198
  %v2077 = vmul.f32 %v1202, %v1200
  %v2078 = vmul.f32 %v1204, %v1202
  %v2079 = vmul.f32 %v1206, %v1204
  %v2080 = vmul.f32 %v1208, %v1206
  %v2081 = vmul.f32 %v1210, %v1208
  %v2082 = vmul.f32 %v1212, %v1210
  %v2083 = vmul.f32 %v1214, %v1212
  %v2084 = vmul.f32 %v1216, %v1214
  %v2085 = vmul.f32 %v1218, %v1216
  %v2086 = vmul.f32 %v1220, %v1218
  %v2087 = vmul.f32 %v1222, %v1220
  %v2088 = vmul.f32 %v1224, %v1222
  %v2089 = vmul.f32 %v1226, %v1224
  %v2090 = vmul.f32 %v1228, %v1226
  %v2091 = vmul.f32 %v1230, %v1228
  %v2092 = vmul.f32 %v1232, %v1230
  %v2093 = vmul.f32 %v1234, %v1232
  %v2094 = vmul.f32 %v1236, %v1234
  %v2095 = vmul.f32 %v1238, %v1236
  %v2096 = vmul.f32 %v1240, %v1238
  %v2097 = vmul.f32 %v1242, %v1240
  %v2098 = vmul.f32 %v1244, %v1242
  %v2099 = vmul.f32 %v1246, %v1244
  %v2100 = vmul.f32 %v1248, %v1246
  %v2101 = vmul.f32 %v1250, %v1248
  %v2102 = vmul.f32 %v1252, %v1250
  %v2103 = vmul.f32 %v1254, %v1252
  %v2104 = vmul.f32 %v1256, %v1254
  %v2105 = vmul.f32 %v1258, %v1256
  %v2106 = vmul.f32 %v1260, %v1258
  %v2107 = vmul.f32 %v1262, %v1260
  %v2108 = vmul.f32 %v1264, %v1262
  %v2109 = vmul.f32 %v1266, %v1264
  %v2110 = vmul.f32 %v1268, %v1266
  %v2111 = vmul.f32 %v1270, %v1268
  %v2112 = vmul.f32 %v1272, %v1270
  %v2113 = vmul.f32 %v1274, %v1272
  %v2114 = vmul.f32 %v1276, %v1274
  %v2115 = vmul.f32 %v1278, %v1276
  %v2116 = vmul.f32 %v1280, %v1278
  %v2117 = vmul.f32 %v1282, %v1280
  %v2118 = vmul.f32 %v1284, %v1282
  %v2119 = vmul.f32 %v1286, %v1284
  %v2120 = vmul.f32 %v1288, %v1286
  %v2121 = vmul.f32 %v1290, %v1288
  %v2122 = vmul.f32 %v1164, 0.0
  %v2123 = vmul.f32 %v1166, %v1995
  %v2124 = vmul.f32 %v1168, %v1996
  %v2125 = vmul.f32 %v1170, %v1997
  %v2126 = vmul.f32 %v1172, %v1998
  %v2127 = vmul.f32 %v1174, %v1999
  %v2128 = vmul.f32 %v1176, %v2000
  %v2129 = vmul.f32 %v1178, %v2001
  %v2130 = vmul.f32 %v1180, %v2002
  %v2131 = vmul.f32 %v1182, %v2003
  %v2132 = vmul.f32 %v1184, %v2004
  %v2133 = vmul.f32 %v1186, %v2005
  %v2134 = vmul.f32 %v1188, %v2006
  %v2135 = vmul.f32 %v1190, %v2007
  %v2136 = vmul.f32 %v1192, %v2008
  %v2137 = vmul.f32 %v1194, %v2009
  %v2138 = vmul.f32 %v1196, %v2010
  %v2139 = vmul.f32 %v1198, %v2011
  %v2140 = vmul.f32 %v1200, %v2012
  %v2141 = vmul.f32 %v1202, %v2013
  %v2142 = vmul.f32 %v1204, %v2014
  %v2143 = vmul.f32 %v1206, %v2015
  %v2144 = vmul.f32 %v1208, %v2016
  %v2145 = vmul.f32 %v1210, %v2017
  %v2146 = vmul.f32 %v1212, %v2018
  %v2147 = vmul.f32 %v1214, %v2019
  %v2148 = vmul.f32 %v1216, %v2020
  %v2149 = vmul.f32 %v1218, %v2021
  %v2150 = vmul.f32 %v1220, %v2022
  %v2151 = vmul.f32 %v1222, %v2023
  %v2152 = vmul.f32 %v1224, %v2024
  %v2153 = vmul.f32 %v1226, %v2025
  %v2154 = vmul.f32 %v1228, %v2026
  %v2155 = vmul.f32 %v1230, %v2027
  %v2156 = vmul.f32 %v1232, %v2028
  %v2157 = vmul.f32 %v1234, %v2029
  %v2158 = vmul.f32 %v1236, %v2030
  %v2159 = vmul.f32 %v1238, %v2031
  %v2160 = vmul.f32 %v1240, %v2032
  %v2161 = vmul.f32 %v1242, %v2033
  %v2162 = vmul.f32 %v1244, %v2034
  %v2163 = vmul.f32 %v1246, %v2035
  %v2164 = vmul.f32 %v1248, %v2036
  %v2165 = vmul.f32 %v1250, %v2037
  %v2166 = vmul.f32 %v1252, %v2038
  %v2167 = vmul.f32 %v1254, %v2039
  %v2168 = vmul.f32 %v1256, %v2040
  %v2169 = vmul.f32 %v1258, %v2041
  %v2170 = vmul.f32 %v1260, %v2042
  %v2171 = vmul.f32 %v1262, %v2043
  %v2172 = vmul.f32 %v1264, %v2044
  %v2173 = vmul.f32 %v1266, %v2045
  %v2174 = vmul.f32 %v1268, %v2046
  %v2175 = vmul.f32 %v1270, %v2047
  %v2176 = vmul.f32 %v1272, %v2048
  %v2177 = vmul.f32 %v1274, %v2049
  %v2178 = vmul.f32 %v1276, %v2050
  %v2179 = vmul.f32 %v1278, %v2051
  %v2180 = vmul.f32 %v1280, %v2052
  %v2181 = vmul.f32 %v1282, %v2053
  %v2182 = vmul.f32 %v1284, %v2054
  %v2183 = vmul.f32 %v1286, %v2055
  %v2184 = vmul.f32 %v1288, %v2056
  %v2185 = vmul.f32 %v1290, %v2057
  %v2186 = vadd.f32 %v2122, %v1995
  %v2187 = vadd.f32 %v2123, %v1996
  %v2188 = vadd.f32 %v2124, %v1997
  %v2189 = vadd.f32 %v2125, %v1998
  %v2190 = vadd.f32 %v2126, %v1999
  %v2191 = vadd.f32 %v2127, %v2000
  %v2192 = vadd.f32 %v2128, %v2001
  %v2193 = vadd.f32 %v2129, %v2002
  %v2194 = vadd.f32 %v2130, %v2003
  %v2195 = vadd.f32 %v2131, %v2004
  %v2196 = vadd.f32 %v2132, %v2005
  %v2197 = vadd.f32 %v2133, %v2006
  %v2198 = vadd.f32 %v2134, %v2007
  %v2199 = vadd.f32 %v2135, %v2008
  %v2200 = vadd.f32 %v2136, %v2009
  %v2201 = vadd.f32 %v2137, %v2010
  %v2202 = vadd.f32 %v2138, %v2011
  %v2203 = vadd.f32 %v2139, %v2012
  %v2204 = vadd.f32 %v2140, %v2013
  %v2205 = vadd.f32 %v2141, %v2014
  %v2206 = vadd.f32 %v2142, %v2015
  %v2207 = vadd.f32 %v2143, %v2016
  %v2208 = vadd.f32 %v2144, %v2017
  %v2209 = vadd.f32 %v2145, %v2018
  %v2210 = vadd.f32 %v2146, %v2019
  %v2211 = vadd.f32 %v2147, %v2020
  %v2212 = vadd.f32 %v2148, %v2021
  %v2213 = vadd.f32 %v2149, %v2022
  %v2214 = vadd.f32 %v2150, %v2023
  %v2215 = vadd.f32 %v2151, %v2024
  %v2216 = vadd.f32 %v2152, %v2025
  %v2217 = vadd.f32 %v2153, %v2026
  %v2218 = vadd.f32 %v2154, %v2027
  %v2219 = vadd.f32 %v2155, %v2028
  %v2220 = vadd.f32 %v2156, %v2029
  %v2221 = vadd.f32 %v2157, %v2030
  %v2222 = vadd.f32 %v2158, %v2031
  %v2223 = vadd.f32 %v2159, %v2032
  %v2224 = vadd.f32 %v2160, %v2033
  %v2225 = vadd.f32 %v2161, %v2034
  %v2226 = vadd.f32 %v2162, %v2035
  %v2227 = vadd.f32 %v2163, %v2036
  %v2228 = vadd.f32 %v2164, %v2037
  %v2229 = vadd.f32 %v2165, %v2038
  %v2230 = vadd.f32 %v2166, %v2039
  %v2231 = vadd.f32 %v2167, %v2040
  %v2232 = vadd.f32 %v2168, %v2041
  %v2233 = vadd.f32 %v2169, %v2042
  %v2234 = vadd.f32 %v2170, %v2043
  %v2235 = vadd.f32 %v2171, %v2044
  %v2236 = vadd.f32 %v2172, %v2045
  %v2237 = vadd.f32 %v2173, %v2046
  %v2238 = vadd.f32 %v2174, %v2047
  %v2239 = vadd.f32 %v2175, %v2048
  %v2240 = vadd.f32 %v2176, %v2049
  %v2241 = vadd.f32 %v2177, %v2050
  %v2242 = vadd.f32 %v2178, %v2051
  %v2243 = vadd.f32 %v2179, %v2052
  %v2244 = vadd.f32 %v2180, %v2053
  %v2245 = vadd.f32 %v2181, %v2054
  %v2246 = vadd.f32 %v2182, %v2055
  %v2247 = vadd.f32 %v2183, %v2056
  %v2248 = vadd.f32 %v2184, %v2057
  %v2249 = vadd.f32 %v2185, %v2058
  %v2250 = vmul.f32 %v2060, %v1164
  %v2251 = vmul.f32 %v2061, %v2059
  %v2252 = vmul.f32 %v2062, %v2060
  %v2253 = vmul.f32 %v2063, %v2061
  %v2254 = vmul.f32 %v2064, %v2062
  %v2255 = vmul.f32 %v2065, %v2063
  %v2256 = vmul.f32 %v2066, %v2064
  %v2257 = vmul.f32 %v2067, %v2065
  %v2258 = vmul.f32 %v2068, %v2066
  %v2259 = vmul.f32 %v2069, %v2067
  %v2260 = vmul.f32 %v2070, %v2068
  %v2261 = vmul.f32 %v2071, %v2069
  %v2262 = vmul.f32 %v2072, %v2070
  %v2263 = vmul.f32 %v2073, %v2071
  %v2264 = vmul.f32 %v2074, %v2072
  %v2265 = vmul.f32 %v2075, %v2073
  %v2266 = vmul.f32 %v2076, %v2074
  %v2267 = vmul.f32 %v2077, %v2075
  %v2268 = vmul.f32 %v2078, %v2076
  %v2269 = vmul.f32 %v2079, %v2077
  %v2270 = vmul.f32 %v2080, %v2078
  %v2271 = vmul.f32 %v2081, %v2079
  %v2272 = vmul.f32 %v2082, %v2080
  %v2273 = vmul.f32 %v2083, %v2081
  %v2274 = vmul.f32 %v2084, %v2082
  %v2275 = vmul.f32 %v2085, %v2083
  %v2276 = vmul.f32 %v2086, %v2084
  %v2277 = vmul.f32 %v2087, %v2085
  %v2278 = vmul.f32 %v2088, %v2086
  %v2279 = vmul.f32 %v2089, %v2087
  %v2280 = vmul.f32 %v2090, %v2088
  %v2281 = vmul.f32 %v2091, %v2089
  %v2282 = vmul.f32 %v2092, %v2090
  %v2283 = vmul.f32 %v2093, %v2091
  %v2284 = vmul.f32 %v2094, %v2092
  %v2285 = vmul.f32 %v2095, %v2093
  %v2286 = vmul.f32 %v2096, %v2094
  %v2287 = vmul.f32 %v2097, %v2095
  %v2288 = vmul.f32 %v2098, %v2096
  %v2289 = vmul.f32 %v2099, %v2097
  %v2290 = vmul.f32 %v2100, %v2098
  %v2291 = vmul.f32 %v2101, %v2099
  %v2292 = vmul.f32 %v2102, %v2100
  %v2293 = vmul.f32 %v2103, %v2101
  %v2294 = vmul.f32 %v2104, %v2102
  %v2295 = vmul.f32 %v2105, %v2103
  %v2296 = vmul.f32 %v2106, %v2104
  %v2297 = vmul.f32 %v2107, %v2105
  %v2298 = vmul.f32 %v2108, %v2106
  %v2299 = vmul.f32 %v2109, %v2107
  %v2300 = vmul.f32 %v2110, %v2108
  %v2301 = vmul.f32 %v2111, %v2109
  %v2302 = vmul.f32 %v2112, %v2110
  %v2303 = vmul.f32 %v2113, %v2111
  %v2304 = vmul.f32 %v2114, %v2112
  %v2305 = vmul.f32 %v2115, %v2113
  %v2306 = vmul.f32 %v2116, %v2114
  %v2307 = vmul.f32 %v2117, %v2115
  %v2308 = vmul.f32 %v2118, %v2116
  %v2309 = vmul.f32 %v2119, %v2117
  %v2310 = vmul.f32 %v2120, %v2118
  %v2311 = vmul.f32 %v2121, %v2119
  %v2312 = vmul.f32 %v2059, 0.0
  %v2313 = vmul.f32 %v2060, %v2186
  %v2314 = vmul.f32 %v2061, %v2187
  %v2315 = vmul.f32 %v2062, %v2188
  %v2316 = vmul.f32 %v2063, %v2189
  %v2317 = vmul.f32 %v2064, %v2190
  %v2318 = vmul.f32 %v2065, %v2191
  %v2319 = vmul.f32 %v2066, %v2192
  %v2320 = vmul.f32 %v2067, %v2193
  %v2321 = vmul.f32 %v2068, %v2194
  %v2322 = vmul.f32 %v2069, %v2195
  %v2323 = vmul.f32 %v2070, %v2196
  %v2324 = vmul.f32 %v2071, %v2197
  %v2325 = vmul.f32 %v2072, %v2198
  %v2326 = vmul.f32 %v2073, %v2199
  %v2327 = vmul.f32 %v2074, %v2200
  %v2328 = vmul.f32 %v2075, %v2201
  %v2329 = vmul.f32 %v2076, %v2202
  %v2330 = vmul.f32 %v2077, %v2203
  %v2331 = vmul.f32 %v2078, %v2204
  %v2332 = vmul.f32 %v2079, %v2205
  %v2333 = vmul.f32 %v2080, %v2206
  %v2334 = vmul.f32 %v2081, %v2207
  %v2335 = vmul.f32 %v2082, %v2208
  %v2336 = vmul.f32 %v2083, %v2209
  %v2337 = vmul.f32 %v2084, %v2210
  %v2338 = vmul.f32 %v2085, %v2211
  %v2339 = vmul.f32 %v2086, %v2212
  %v2340 = vmul.f32 %v2087, %v2213
  %v2341 = vmul.f32 %v2088, %v2214
  %v2342 = vmul.f32 %v2089, %v2215
  %v2343 = vmul.f32 %v2090, %v2216
  %v2344 = vmul.f32 %v2091, %v2217
  %v2345 = vmul.f32 %v2092, %v2218
  %v2346 = vmul.f32 %v2093, %v2219
  %v2347 = vmul.f32 %v2094, %v2220
  %v2348 = vmul.f32 %v2095, %v2221
  %v2349 = vmul.f32 %v2096, %v2222
  %v2350 = vmul.f32 %v2097, %v2223
  %v2351 = vmul.f32 %v2098, %v2224
  %v2352 = vmul.f32 %v2099, %v2225
  %v2353 = vmul.f32 %v2100, %v2226
  %v2354 = vmul.f32 %v2101, %v2227
  %v2355 = vmul.f32 %v2102, %v2228
  %v2356 = vmul.f32 %v2103, %v2229
  %v2357 = vmul.f32 %v2104, %v2230
  %v2358 = vmul.f32 %v2105, %v2231
  %v2359 = vmul.f32 %v2106, %v2232
  %v2360 = vmul.f32 %v2107, %v2233
  %v2361 = vmul.f32 %v2108, %v2234
  %v2362 = vmul.f32 %v2109, %v2235
  %v2363 = vmul.f32 %v2110, %v2236
  %v2364 = vmul.f32 %v2111, %v2237
  %v2365 = vmul.f32 %v2112, %v2238
  %v2366 = vmul.f32 %v2113, %v2239
  %v2367 = vmul.f32 %v2114, %v2240
  %v2368 = vmul.f32 %v2115, %v2241
  %v2369 = vmul.f32 %v2116, %v2242
  %v2370 = vmul.f32 %v2117, %v2243
  %v2371 = vmul.f32 %v2118, %v2244
  %v2372 = vmul.f32 %v2119, %v2245
  %v2373 = vmul.f32 %v2120, %v2246
  %v2374 = vmul.f32 %v2121, %v2247
  %v2375 = vadd.f32 %v2122, %v2186
  %v2376 = vadd.f32 %v2312, %v2187
  %v2377 = vadd.f32 %v2313, %v2188
  %v2378 = vadd.f32 %v2314, %v2189
  %v2379 = vadd.f32 %v2315, %v2190
  %v2380 = vadd.f32 %v2316, %v2191
  %v2381 = vadd.f32 %v2317, %v2192
  %v2382 = vadd.f32 %v2318, %v2193
  %v2383 = vadd.f32 %v2319, %v2194
  %v2384 = vadd.f32 %v2320, %v2195
  %v2385 = vadd.f32 %v2321, %v2196
  %v2386 = vadd.f32 %v2322, %v2197
  %v2387 = vadd.f32 %v2323, %v2198
  %v2388 = vadd.f32 %v2324, %v2199
  %v2389 = vadd.f32 %v2325, %v2200
  %v2390 = vadd.f32 %v2326, %v2201
  %v2391 = vadd.f32 %v2327, %v2202
  %v2392 = vadd.f32 %v2328, %v2203
  %v2393 = vadd.f32 %v2329, %v2204
  %v2394 = vadd.f32 %v2330, %v2205
  %v2395 = vadd.f32 %v2331, %v2206
  %v2396 = vadd.f32 %v2332, %v2207
  %v2397 = vadd.f32 %v2333, %v2208
  %v2398 = vadd.f32 %v2334, %v2209
  %v2399 = vadd.f32 %v2335, %v2210
  %v2400 = vadd.f32 %v2336, %v2211
  %v2401 = vadd.f32 %v2337, %v2212
  %v2402 = vadd.f32 %v2338, %v2213
  %v2403 = vadd.f32 %v2339, %v2214
  %v2404 = vadd.f32 %v2340, %v2215
  %v2405 = vadd.f32 %v2341, %v2216
  %v2406 = vadd.f32 %v2342, %v2217
  %v2407 = vadd.f32 %v2343, %v2218
  %v2408 = vadd.f32 %v2344, %v2219
  %v2409 = vadd.f32 %v2345, %v2220
  %v2410 = vadd.f32 %v2346, %v2221
  %v2411 = vadd.f32 %v2347, %v2222
  %v2412 = vadd.f32 %v2348, %v2223
  %v2413 = vadd.f32 %v2349, %v2224
  %v2414 = vadd.f32 %v2350, %v2225
  %v2415 = vadd.f32 %v2351, %v2226
  %v2416 = vadd.f32 %v2352, %v2227
  %v2417 = vadd.f32 %v2353, %v2228
  %v2418 = vadd.f32 %v2354, %v2229
  %v2419 = vadd.f32 %v2355, %v2230
  %v2420 = vadd.f32 %v2356, %v2231
  %v2421 = vadd.f32 %v2357, %v2232
  %v2422 = vadd.f32 %v2358, %v2233
  %v2423 = vadd.f32 %v2359, %v2234
  %v2424 = vadd.f32 %v2360, %v2235
  %v2425 = vadd.f32 %v2361, %v2236
  %v2426 = vadd.f32 %v2362, %v2237
  %v2427 = vadd.f32 %v2363, %v2238
  %v2428 = vadd.f32 %v2364, %v2239
  %v2429 = vadd.f32 %v2365, %v2240
  %v2430 = vadd.f32 %v2366, %v2241
  %v2431 = vadd.f32 %v2367, %v2242
  %v2432 = vadd.f32 %v2368, %v2243
  %v2433 = vadd.f32 %v2369, %v2244
  %v2434 = vadd.f32 %v2370, %v2245
  %v2435 = vadd.f32 %v2371, %v2246
  %v2436 = vadd.f32 %v2372, %v2247
  %v2437 = vadd.f32 %v2373, %v2248
  %v2438 = vadd.f32 %v2374, %v2249
  %v2439 = vmul.f32 %v2252, %v1164
  %v2440 = vmul.f32 %v2253, %v2059
  %v2441 = vmul.f32 %v2254, %v2250
  %v2442 = vmul.f32 %v2255, %v2251
  %v2443 = vmul.f32 %v2256, %v2252
  %v2444 = vmul.f32 %v2257, %v2253
  %v2445 = vmul.f32 %v2258, %v2254
  %v2446 = vmul.f32 %v2259, %v2255
  %v2447 = vmul.f32 %v2260, %v2256
  %v2448 = vmul.f32 %v2261, %v2257
  %v2449 = vmul.f32 %v2262, %v2258
  %v2450 = vmul.f32 %v2263, %v2259
  %v2451 = vmul.f32 %v2264, %v2260
  %v2452 = vmul.f32 %v2265, %v2261
  %v2453 = vmul.f32 %v2266, %v2262
  %v2454 = vmul.f32 %v2267, %v2263
  %v2455 = vmul.f32 %v2268, %v2264
  %v2456 = vmul.f32 %v2269, %v2265
  %v2457 = vmul.f32 %v2270, %v2266
  %v2458 = vmul.f32 %v2271, %v2267
  %v2459 = vmul.f32 %v2272, %v2268
  %v2460 = vmul.f32 %v2273, %v2269
  %v2461 = vmul.f32 %v2274, %v2270
  %v2462 = vmul.f32 %v2275, %v2271
  %v2463 = vmul.f32 %v2276, %v2272
  %v2464 = vmul.f32 %v2277, %v2273
  %v2465 = vmul.f32 %v2278, %v2274
  %v2466 = vmul.f32 %v2279, %v2275
  %v2467 = vmul.f32 %v2280, %v2276
  %v2468 = vmul.f32 %v2281, %v2277
  %v2469 = vmul.f32 %v2282, %v2278
  %v2470 = vmul.f32 %v2283, %v2279
  %v2471 = vmul.f32 %v2284, %v2280
  %v2472 = vmul.f32 %v2285, %v2281
  %v2473 = vmul.f32 %v2286, %v2282
  %v2474 = vmul.f32 %v2287, %v2283
  %v2475 = vmul.f32 %v2288, %v2284
  %v2476 = vmul.f32 %v2289, %v2285
  %v2477 = vmul.f32 %v2290, %v2286
  %v2478 = vmul.f32 %v2291, %v2287
  %v2479 = vmul.f32 %v2292, %v2288
  %v2480 = vmul.f32 %v2293, %v2289
  %v2481 = vmul.f32 %v2294, %v2290
  %v2482 = vmul.f32 %v2295, %v2291
  %v2483 = vmul.f32 %v2296, %v2292
  %v2484 = vmul.f32 %v2297, %v2293
  %v2485 = vmul.f32 %v2298, %v2294
  %v2486 = vmul.f32 %v2299, %v2295
  %v2487 = vmul.f32 %v2300, %v2296
  %v2488 = vmul.f32 %v2301, %v2297
  %v2489 = vmul.f32 %v2302, %v2298
  %v2490 = vmul.f32 %v2303, %v2299
  %v2491 = vmul.f32 %v2304, %v2300
  %v2492 = vmul.f32 %v2305, %v2301
  %v2493 = vmul.f32 %v2306, %v2302
  %v2494 = vmul.f32 %v2307, %v2303
  %v2495 = vmul.f32 %v2308, %v2304
  %v2496 = vmul.f32 %v2309, %v2305
  %v2497 = vmul.f32 %v2310, %v2306
  %v2498 = vmul.f32 %v2311, %v2307
  %v2499 = vmul.f32 %v2250, 0.0
  %v2500 = vmul.f32 %v2251, 0.0
  %v2501 = vmul.f32 %v2252, %v2375
  %v2502 = vmul.f32 %v2253, %v2376
  %v2503 = vmul.f32 %v2254, %v2377
  %v2504 = vmul.f32 %v2255, %v2378
  %v2505 = vmul.f32 %v2256, %v2379
  %v2506 = vmul.f32 %v2257, %v2380
  %v2507 = vmul.f32 %v2258, %v2381
  %v2508 = vmul.f32 %v2259, %v2382
  %v2509 = vmul.f32 %v2260, %v2383
  %v2510 = vmul.f32 %v2261, %v2384
  %v2511 = vmul.f32 %v2262, %v2385
  %v2512 = vmul.f32 %v2263, %v2386
  %v2513 = vmul.f32 %v2264, %v2387
  %v2514 = vmul.f32 %v2265, %v2388
  %v2515 = vmul.f32 %v2266, %v2389
  %v2516 = vmul.f32 %v2267, %v2390
  %v2517 = vmul.f32 %v2268, %v2391
  %v2518 = vmul.f32 %v2269, %v2392
  %v2519 = vmul.f32 %v2270, %v2393
  %v2520 = vmul.f32 %v2271, %v2394
  %v2521 = vmul.f32 %v2272, %v2395
  %v2522 = vmul.f32 %v2273, %v2396
  %v2523 = vmul.f32 %v2274, %v2397
  %v2524 = vmul.f32 %v2275, %v2398
  %v2525 = vmul.f32 %v2276, %v2399
  %v2526 = vmul.f32 %v2277, %v2400
  %v2527 = vmul.f32 %v2278, %v2401
  %v2528 = vmul.f32 %v2279, %v2402
  %v2529 = vmul.f32 %v2280, %v2403
  %v2530 = vmul.f32 %v2281, %v2404
  %v2531 = vmul.f32 %v2282, %v2405
  %v2532 = vmul.f32 %v2283, %v2406
  %v2533 = vmul.f32 %v2284, %v2407
  %v2534 = vmul.f32 %v2285, %v2408
  %v2535 = vmul.f32 %v2286, %v2409
  %v2536 = vmul.f32 %v2287, %v2410
  %v2537 = vmul.f32 %v2288, %v2411
  %v2538 = vmul.f32 %v2289, %v2412
  %v2539 = vmul.f32 %v2290, %v2413
  %v2540 = vmul.f32 %v2291, %v2414
  %v2541 = vmul.f32 %v2292, %v2415
  %v2542 = vmul.f32 %v2293, %v2416
  %v2543 = vmul.f32 %v2294, %v2417
  %v2544 = vmul.f32 %v2295, %v2418
  %v2545 = vmul.f32 %v2296, %v2419
  %v2546 = vmul.f32 %v2297, %v2420
  %v2547 = vmul.f32 %v2298, %v2421
  %v2548 = vmul.f32 %v2299, %v2422
  %v2549 = vmul.f32 %v2300, %v2423
  %v2550 = vmul.f32 %v2301, %v2424
  %v2551 = vmul.f32 %v2302, %v2425
  %v2552 = vmul.f32 %v2303, %v2426
  %v2553 = vmul.f32 %v2304, %v2427
  %v2554 = vmul.f32 %v2305, %v2428
  %v2555 = vmul.f32 %v2306, %v2429
  %v2556 = vmul.f32 %v2307, %v2430
  %v2557 = vmul.f32 %v2308, %v2431
  %v2558 = vmul.f32 %v2309, %v2432
  %v2559 = vmul.f32 %v2310, %v2433
  %v2560 = vmul.f32 %v2311, %v2434
  %v2561 = vadd.f32 %v2122, %v2375
  %v2562 = vadd.f32 %v2312, %v2376
  %v2563 = vadd.f32 %v2499, %v2377
  %v2564 = vadd.f32 %v2500, %v2378
  %v2565 = vadd.f32 %v2501, %v2379
  %v2566 = vadd.f32 %v2502, %v2380
  %v2567 = vadd.f32 %v2503, %v2381
  %v2568 = vadd.f32 %v2504, %v2382
  %v2569 = vadd.f32 %v2505, %v2383
  %v2570 = vadd.f32 %v2506, %v2384
  %v2571 = vadd.f32 %v2507, %v2385
  %v2572 = vadd.f32 %v2508, %v2386
  %v2573 = vadd.f32 %v2509, %v2387
  %v2574 = vadd.f32 %v2510, %v2388
  %v2575 = vadd.f32 %v2511, %v2389
  %v2576 = vadd.f32 %v2512, %v2390
  %v2577 = vadd.f32 %v2513, %v2391
  %v2578 = vadd.f32 %v2514, %v2392
  %v2579 = vadd.f32 %v2515, %v2393
  %v2580 = vadd.f32 %v2516, %v2394
  %v2581 = vadd.f32 %v2517, %v2395
  %v2582 = vadd.f32 %v2518, %v2396
  %v2583 = vadd.f32 %v2519, %v2397
  %v2584 = vadd.f32 %v2520, %v2398
  %v2585 = vadd.f32 %v2521, %v2399
  %v2586 = vadd.f32 %v2522, %v2400
  %v2587 = vadd.f32 %v2523, %v2401
  %v2588 = vadd.f32 %v2524, %v2402
  %v2589 = vadd.f32 %v2525, %v2403
  %v2590 = vadd.f32 %v2526, %v2404
  %v2591 = vadd.f32 %v2527, %v2405
  %v2592 = vadd.f32 %v2528, %v2406
  %v2593 = vadd.f32 %v2529, %v2407
  %v2594 = vadd.f32 %v2530, %v2408
  %v2595 = vadd.f32 %v2531, %v2409
  %v2596 = vadd.f32 %v2532, %v2410
  %v2597 = vadd.f32 %v2533, %v2411
  %v2598 = vadd.f32 %v2534, %v2412
  %v2599 = vadd.f32 %v2535, %v2413
  %v2600 = vadd.f32 %v2536, %v2414
  %v2601 = vadd.f32 %v2537, %v2415
  %v2602 = vadd.f32 %v2538, %v2416
  %v2603 = vadd.f32 %v2539, %v2417
  %v2604 = vadd.f32 %v2540, %v2418
  %v2605 = vadd.f32 %v2541, %v2419
  %v2606 = vadd.f32 %v2542, %v2420
  %v2607 = vadd.f32 %v2543, %v2421
  %v2608 = vadd.f32 %v2544, %v2422
  %v2609 = vadd.f32 %v2545, %v2423
  %v2610 = vadd.f32 %v2546, %v2424
  %v2611 = vadd.f32 %v2547, %v2425
  %v2612 = vadd.f32 %v2548, %v2426
  %v2613 = vadd.f32 %v2549, %v2427
  %v2614 = vadd.f32 %v2550, %v2428
  %v2615 = vadd.f32 %v2551, %v2429
  %v2616 = vadd.f32 %v2552, %v2430
  %v2617 = vadd.f32 %v2553, %v2431
  %v2618 = vadd.f32 %v2554, %v2432
  %v2619 = vadd.f32 %v2555, %v2433
  %v2620 = vadd.f32 %v2556, %v2434
  %v2621 = vadd.f32 %v2557, %v2435
  %v2622 = vadd.f32 %v2558, %v2436
  %v2623 = vadd.f32 %v2559, %v2437
  %v2624 = vadd.f32 %v2560, %v2438
  %v2625 = vmul.f32 %v2443, %v1164
  %v2626 = vmul.f32 %v2444, %v2059
  %v2627 = vmul.f32 %v2445, %v2250
  %v2628 = vmul.f32 %v2446, %v2251
  %v2629 = vmul.f32 %v2447, %v2439
  %v2630 = vmul.f32 %v2448, %v2440
  %v2631 = vmul.f32 %v2449, %v2441
  %v2632 = vmul.f32 %v2450, %v2442
  %v2633 = vmul.f32 %v2451, %v2443
  %v2634 = vmul.f32 %v2452, %v2444
  %v2635 = vmul.f32 %v2453, %v2445
  %v2636 = vmul.f32 %v2454, %v2446
  %v2637 = vmul.f32 %v2455, %v2447
  %v2638 = vmul.f32 %v2456, %v2448
  %v2639 = vmul.f32 %v2457, %v2449
  %v2640 = vmul.f32 %v2458, %v2450
  %v2641 = vmul.f32 %v2459, %v2451
  %v2642 = vmul.f32 %v2460, %v2452
  %v2643 = vmul.f32 %v2461, %v2453
  %v2644 = vmul.f32 %v2462, %v2454
  %v2645 = vmul.f32 %v2463, %v2455
  %v2646 = vmul.f32 %v2464, %v2456
  %v2647 = vmul.f32 %v2465, %v2457
  %v2648 = vmul.f32 %v2466, %v2458
  %v2649 = vmul.f32 %v2467, %v2459
  %v2650 = vmul.f32 %v2468, %v2460
  %v2651 = vmul.f32 %v2469, %v2461
  %v2652 = vmul.f32 %v2470, %v2462
  %v2653 = vmul.f32 %v2471, %v2463
  %v2654 = vmul.f32 %v2472, %v2464
  %v2655 = vmul.f32 %v2473, %v2465
  %v2656 = vmul.f32 %v2474, %v2466
  %v2657 = vmul.f32 %v2475, %v2467
  %v2658 = vmul.f32 %v2476, %v2468
  %v2659 = vmul.f32 %v2477, %v2469
  %v2660 = vmul.f32 %v2478, %v2470
  %v2661 = vmul.f32 %v2479, %v2471
  %v2662 = vmul.f32 %v2480, %v2472
  %v2663 = vmul.f32 %v2481, %v2473
  %v2664 = vmul.f32 %v2482, %v2474
  %v2665 = vmul.f32 %v2483, %v2475
  %v2666 = vmul.f32 %v2484, %v2476
  %v2667 = vmul.f32 %v2485, %v2477
  %v2668 = vmul.f32 %v2486, %v2478
  %v2669 = vmul.f32 %v2487, %v2479
  %v2670 = vmul.f32 %v2488, %v2480
  %v2671 = vmul.f32 %v2489, %v2481
  %v2672 = vmul.f32 %v2490, %v2482
  %v2673 = vmul.f32 %v2491, %v2483
  %v2674 = vmul.f32 %v2492, %v2484
  %v2675 = vmul.f32 %v2493, %v2485
  %v2676 = vmul.f32 %v2494, %v2486
  %v2677 = vmul.f32 %v2495, %v2487
  %v2678 = vmul.f32 %v2496, %v2488
  %v2679 = vmul.f32 %v2497, %v2489
  %v2680 = vmul.f32 %v2498, %v2490
  %v2681 = vmul.f32 %v2439, 0.0
  %v2682 = vmul.f32 %v2440, 0.0
  %v2683 = vmul.f32 %v2441, 0.0
  %v2684 = vmul.f32 %v2442, 0.0
  %v2685 = vmul.f32 %v2443, %v2561
  %v2686 = vmul.f32 %v2444, %v2562
  %v2687 = vmul.f32 %v2445, %v2563
  %v2688 = vmul.f32 %v2446, %v2564
  %v2689 = vmul.f32 %v2447, %v2565
  %v2690 = vmul.f32 %v2448, %v2566
  %v2691 = vmul.f32 %v2449, %v2567
  %v2692 = vmul.f32 %v2450, %v2568
  %v2693 = vmul.f32 %v2451, %v2569
  %v2694 = vmul.f32 %v2452, %v2570
  %v2695 = vmul.f32 %v2453, %v2571
  %v2696 = vmul.f32 %v2454, %v2572
  %v2697 = vmul.f32 %v2455, %v2573
  %v2698 = vmul.f32 %v2456, %v2574
  %v2699 = vmul.f32 %v2457, %v2575
  %v2700 = vmul.f32 %v2458, %v2576
  %v2701 = vmul.f32 %v2459, %v2577
  %v2702 = vmul.f32 %v2460, %v2578
  %v2703 = vmul.f32 %v2461, %v2579
  %v2704 = vmul.f32 %v2462, %v2580
  %v2705 = vmul.f32 %v2463, %v2581
  %v2706 = vmul.f32 %v2464, %v2582
  %v2707 = vmul.f32 %v2465, %v2583
  %v2708 = vmul.f32 %v2466, %v2584
  %v2709 = vmul.f32 %v2467, %v2585
  %v2710 = vmul.f32 %v2468, %v2586
  %v2711 = vmul.f32 %v2469, %v2587
  %v2712 = vmul.f32 %v2470, %v2588
  %v2713 = vmul.f32 %v2471, %v2589
  %v2714 = vmul.f32 %v2472, %v2590
  %v2715 = vmul.f32 %v2473, %v2591
  %v2716 = vmul.f32 %v2474, %v2592
  %v2717 = vmul.f32 %v2475, %v2593
  %v2718 = vmul.f32 %v2476, %v2594
  %v2719 = vmul.f32 %v2477, %v2595
  %v2720 = vmul.f32 %v2478, %v2596
  %v2721 = vmul.f32 %v2479, %v2597
  %v2722 = vmul.f32 %v2480, %v2598
  %v2723 = vmul.f32 %v2481, %v2599
  %v2724 = vmul.f32 %v2482, %v2600
  %v2725 = vmul.f32 %v2483, %v2601
  %v2726 = vmul.f32 %v2484, %v2602
  %v2727 = vmul.f32 %v2485, %v2603
  %v2728 = vmul.f32 %v2486, %v2604
  %v2729 = vmul.f32 %v2487, %v2605
  %v2730 = vmul.f32 %v2488, %v2606
  %v2731 = vmul.f32 %v2489, %v2607
  %v2732 = vmul.f32 %v2490, %v2608
  %v2733 = vmul.f32 %v2491, %v2609
  %v2734 = vmul.f32 %v2492, %v2610
  %v2735 = vmul.f32 %v2493, %v2611
  %v2736 = vmul.f32 %v2494, %v2612
  %v2737 = vmul.f32 %v2495, %v2613
  %v2738 = vmul.f32 %v2496, %v2614
  %v2739 = vmul.f32 %v2497, %v2615
  %v2740 = vmul.f32 %v2498, %v2616
  %v2741 = vadd.f32 %v2122, %v2561
  %v2742 = vadd.f32 %v2312, %v2562
  %v2743 = vadd.f32 %v2499, %v2563
  %v2744 = vadd.f32 %v2500, %v2564
  %v2745 = vadd.f32 %v2681, %v2565
  %v2746 = vadd.f32 %v2682, %v2566
  %v2747 = vadd.f32 %v2683, %v2567
  %v2748 = vadd.f32 %v2684, %v2568
  %v2749 = vadd.f32 %v2685, %v2569
  %v2750 = vadd.f32 %v2686, %v2570
  %v2751 = vadd.f32 %v2687, %v2571
  %v2752 = vadd.f32 %v2688, %v2572
  %v2753 = vadd.f32 %v2689, %v2573
  %v2754 = vadd.f32 %v2690, %v2574
  %v2755 = vadd.f32 %v2691, %v2575
  %v2756 = vadd.f32 %v2692, %v2576
  %v2757 = vadd.f32 %v2693, %v2577
  %v2758 = vadd.f32 %v2694, %v2578
  %v2759 = vadd.f32 %v2695, %v2579
  %v2760 = vadd.f32 %v2696, %v2580
  %v2761 = vadd.f32 %v2697, %v2581
  %v2762 = vadd.f32 %v2698, %v2582
  %v2763 = vadd.f32 %v2699, %v2583
  %v2764 = vadd.f32 %v2700, %v2584
  %v2765 = vadd.f32 %v2701, %v2585
  %v2766 = vadd.f32 %v2702, %v2586
  %v2767 = vadd.f32 %v2703, %v2587
  %v2768 = vadd.f32 %v2704, %v2588
  %v2769 = vadd.f32 %v2705, %v2589
  %v2770 = vadd.f32 %v2706, %v2590
  %v2771 = vadd.f32 %v2707, %v2591
  %v2772 = vadd.f32 %v2708, %v2592
  %v2773 = vadd.f32 %v2709, %v2593
  %v2774 = vadd.f32 %v2710, %v2594
  %v2775 = vadd.f32 %v2711, %v2595
  %v2776 = vadd.f32 %v2712, %v2596
  %v2777 = vadd.f32 %v2713, %v2597
  %v2778 = vadd.f32 %v2714, %v2598
  %v2779 = vadd.f32 %v2715, %v2599
  %v2780 = vadd.f32 %v2716, %v2600
  %v2781 = vadd.f32 %v2717, %v2601
  %v2782 = vadd.f32 %v2718, %v2602
  %v2783 = vadd.f32 %v2719, %v2603
  %v2784 = vadd.f32 %v2720, %v2604
  %v2785 = vadd.f32 %v2721, %v2605
  %v2786 = vadd.f32 %v2722, %v2606
  %v2787 = vadd.f32 %v2723, %v2607
  %v2788 = vadd.f32 %v2724, %v2608
  %v2789 = vadd.f32 %v2725, %v2609
  %v2790 = vadd.f32 %v2726, %v2610
  %v2791 = vadd.f32 %v2727, %v2611
  %v2792 = vadd.f32 %v2728, %v2612
  %v2793 = vadd.f32 %v2729, %v2613
  %v2794 = vadd.f32 %v2730, %v2614
  %v2795 = vadd.f32 %v2731, %v2615
  %v2796 = vadd.f32 %v2732, %v2616
  %v2797 = vadd.f32 %v2733, %v2617
  %v2798 = vadd.f32 %v2734, %v2618
  %v2799 = vadd.f32 %v2735, %v2619
  %v2800 = vadd.f32 %v2736, %v2620
  %v2801 = vadd.f32 %v2737, %v2621
  %v2802 = vadd.f32 %v2738, %v2622
  %v2803 = vadd.f32 %v2739, %v2623
  %v2804 = vadd.f32 %v2740, %v2624
  %v2805 = vmul.f32 %v2633, %v1164
  %v2806 = vmul.f32 %v2634, %v2059
  %v2807 = vmul.f32 %v2635, %v2250
  %v2808 = vmul.f32 %v2636, %v2251
  %v2809 = vmul.f32 %v2637, %v2439
  %v2810 = vmul.f32 %v2638, %v2440
  %v2811 = vmul.f32 %v2639, %v2441
  %v2812 = vmul.f32 %v2640, %v2442
  %v2813 = vmul.f32 %v2641, %v2625
  %v2814 = vmul.f32 %v2642, %v2626
  %v2815 = vmul.f32 %v2643, %v2627
  %v2816 = vmul.f32 %v2644, %v2628
  %v2817 = vmul.f32 %v2645, %v2629
  %v2818 = vmul.f32 %v2646, %v2630
  %v2819 = vmul.f32 %v2647, %v2631
  %v2820 = vmul.f32 %v2648, %v2632
  %v2821 = vmul.f32 %v2649, %v2633
  %v2822 = vmul.f32 %v2650, %v2634
  %v2823 = vmul.f32 %v2651, %v2635
  %v2824 = vmul.f32 %v2652, %v2636
  %v2825 = vmul.f32 %v2653, %v2637
  %v2826 = vmul.f32 %v2654, %v2638
  %v2827 = vmul.f32 %v2655, %v2639
  %v2828 = vmul.f32 %v2656, %v2640
  %v2829 = vmul.f32 %v2657, %v2641
  %v2830 = vmul.f32 %v2658, %v2642
  %v2831 = vmul.f32 %v2659, %v2643
  %v2832 = vmul.f32 %v2660, %v2644
  %v2833 = vmul.f32 %v2661, %v2645
  %v2834 = vmul.f32 %v2662, %v2646
  %v2835 = vmul.f32 %v2663, %v2647
  %v2836 = vmul.f32 %v2664, %v2648
  %v2837 = vmul.f32 %v2665, %v2649
  %v2838 = vmul.f32 %v2666, %v2650
  %v2839 = vmul.f32 %v2667, %v2651
  %v2840 = vmul.f32 %v2668, %v2652
  %v2841 = vmul.f32 %v2669, %v2653
  %v2842 = vmul.f32 %v2670, %v2654
  %v2843 = vmul.f32 %v2671, %v2655
  %v2844 = vmul.f32 %v2672, %v2656
  %v2845 = vmul.f32 %v2673, %v2657
  %v2846 = vmul.f32 %v2674, %v2658
  %v2847 = vmul.f32 %v2675, %v2659
  %v2848 = vmul.f32 %v2676, %v2660
  %v2849 = vmul.f32 %v2677, %v2661
  %v2850 = vmul.f32 %v2678, %v2662
  %v2851 = vmul.f32 %v2679, %v2663
  %v2852 = vmul.f32 %v2680, %v2664
  %v2853 = vmul.f32 %v2625, 0.0
  %v2854 = vmul.f32 %v2626, 0.0
  %v2855 = vmul.f32 %v2627, 0.0
  %v2856 = vmul.f32 %v2628, 0.0
  %v2857 = vmul.f32 %v2629, 0.0
  %v2858 = vmul.f32 %v2630, 0.0
  %v2859 = vmul.f32 %v2631, 0.0
  %v2860 = vmul.f32 %v2632, 0.0
  %v2861 = vmul.f32 %v2633, %v2741
  %v2862 = vmul.f32 %v2634, %v2742
  %v2863 = vmul.f32 %v2635, %v2743
  %v2864 = vmul.f32 %v2636, %v2744
  %v2865 = vmul.f32 %v2637, %v2745
  %v2866 = vmul.f32 %v2638, %v2746
  %v2867 = vmul.f32 %v2639, %v2747
  %v2868 = vmul.f32 %v2640, %v2748
  %v2869 = vmul.f32 %v2641, %v2749
  %v2870 = vmul.f32 %v2642, %v2750
  %v2871 = vmul.f32 %v2643, %v2751
  %v2872 = vmul.f32 %v2644, %v2752
  %v2873 = vmul.f32 %v2645, %v2753
  %v2874 = vmul.f32 %v2646, %v2754
  %v2875 = vmul.f32 %v2647, %v2755
  %v2876 = vmul.f32 %v2648, %v2756
  %v2877 = vmul.f32 %v2649, %v2757
  %v2878 = vmul.f32 %v2650, %v2758
  %v2879 = vmul.f32 %v2651, %v2759
  %v2880 = vmul.f32 %v2652, %v2760
  %v2881 = vmul.f32 %v2653, %v2761
  %v2882 = vmul.f32 %v2654, %v2762
  %v2883 = vmul.f32 %v2655, %v2763
  %v2884 = vmul.f32 %v2656, %v2764
  %v2885 = vmul.f32 %v2657, %v2765
  %v2886 = vmul.f32 %v2658, %v2766
  %v2887 = vmul.f32 %v2659, %v2767
  %v2888 = vmul.f32 %v2660, %v2768
  %v2889 = vmul.f32 %v2661, %v2769
  %v2890 = vmul.f32 %v2662, %v2770
  %v2891 = vmul.f32 %v2663, %v2771
  %v2892 = vmul.f32 %v2664, %v2772
  %v2893 = vmul.f32 %v2665, %v2773
  %v2894 = vmul.f32 %v2666, %v2774
  %v2895 = vmul.f32 %v2667, %v2775
  %v2896 = vmul.f32 %v2668, %v2776
  %v2897 = vmul.f32 %v2669, %v2777
  %v2898 = vmul.f32 %v2670, %v2778
  %v2899 = vmul.f32 %v2671, %v2779
  %v2900 = vmul.f32 %v2672, %v2780
  %v2901 = vmul.f32 %v2673, %v2781
  %v2902 = vmul.f32 %v2674, %v2782
  %v2903 = vmul.f32 %v2675, %v2783
  %v2904 = vmul.f32 %v2676, %v2784
  %v2905 = vmul.f32 %v2677, %v2785
  %v2906 = vmul.f32 %v2678, %v2786
  %v2907 = vmul.f32 %v2679, %v2787
  %v2908 = vmul.f32 %v2680, %v2788
  %v2909 = vadd.f32 %v2122, %v2741
  %v2910 = vadd.f32 %v2312, %v2742
  %v2911 = vadd.f32 %v2499, %v2743
  %v2912 = vadd.f32 %v2500, %v2744
  %v2913 = vadd.f32 %v2681, %v2745
  %v2914 = vadd.f32 %v2682, %v2746
  %v2915 = vadd.f32 %v2683, %v2747
  %v2916 = vadd.f32 %v2684, %v2748
  %v2917 = vadd.f32 %v2853, %v2749
  %v2918 = vadd.f32 %v2854, %v2750
  %v2919 = vadd.f32 %v2855, %v2751
  %v2920 = vadd.f32 %v2856, %v2752
  %v2921 = vadd.f32 %v2857, %v2753
  %v2922 = vadd.f32 %v2858, %v2754
  %v2923 = vadd.f32 %v2859, %v2755
  %v2924 = vadd.f32 %v2860, %v2756
  %v2925 = vadd.f32 %v2861, %v2757
  %v2926 = vadd.f32 %v2862, %v2758
  %v2927 = vadd.f32 %v2863, %v2759
  %v2928 = vadd.f32 %v2864, %v2760
  %v2929 = vadd.f32 %v2865, %v2761
  %v2930 = vadd.f32 %v2866, %v2762
  %v2931 = vadd.f32 %v2867, %v2763
  %v2932 = vadd.f32 %v2868, %v2764
  %v2933 = vadd.f32 %v2869, %v2765
  %v2934 = vadd.f32 %v2870, %v2766
  %v2935 = vadd.f32 %v2871, %v2767
  %v2936 = vadd.f32 %v2872, %v2768
  %v2937 = vadd.f32 %v2873, %v2769
  %v2938 = vadd.f32 %v2874, %v2770
  %v2939 = vadd.f32 %v2875, %v2771
  %v2940 = vadd.f32 %v2876, %v2772
  %v2941 = vadd.f32 %v2877, %v2773
  %v2942 = vadd.f32 %v2878, %v2774
  %v2943 = vadd.f32 %v2879, %v2775
  %v2944 = vadd.f32 %v2880, %v2776
  %v2945 = vadd.f32 %v2881, %v2777
  %v2946 = vadd.f32 %v2882, %v2778
  %v2947 = vadd.f32 %v2883, %v2779
  %v2948 = vadd.f32 %v2884, %v2780
  %v2949 = vadd.f32 %v2885, %v2781
  %v2950 = vadd.f32 %v2886, %v2782
  %v2951 = vadd.f32 %v2887, %v2783
  %v2952 = vadd.f32 %v2888, %v2784
  %v2953 = vadd.f32 %v2889, %v2785
  %v2954 = vadd.f32 %v2890, %v2786
  %v2955 = vadd.f32 %v2891, %v2787
  %v2956 = vadd.f32 %v2892, %v2788
  %v2957 = vadd.f32 %v2893, %v2789
  %v2958 = vadd.f32 %v2894, %v2790
  %v2959 = vadd.f32 %v2895, %v2791
  %v2960 = vadd.f32 %v2896, %v2792
  %v2961 = vadd.f32 %v2897, %v2793
  %v2962 = vadd.f32 %v2898, %v2794
  %v2963 = vadd.f32 %v2899, %v2795
  %v2964 = vadd.f32 %v2900, %v2796
  %v2965 = vadd.f32 %v2901, %v2797
  %v2966 = vadd.f32 %v2902, %v2798
  %v2967 = vadd.f32 %v2903, %v2799
  %v2968 = vadd.f32 %v2904, %v2800
  %v2969 = vadd.f32 %v2905, %v2801
  %v2970 = vadd.f32 %v2906, %v2802
  %v2971 = vadd.f32 %v2907, %v2803
  %v2972 = vadd.f32 %v2908, %v2804
  %v2973 = vmul.f32 %v2821, %v1164
  %v2974 = vmul.f32 %v2822, %v2059
  %v2975 = vmul.f32 %v2823, %v2250
  %v2976 = vmul.f32 %v2824, %v2251
  %v2977 = vmul.f32 %v2825, %v2439
  %v2978 = vmul.f32 %v2826, %v2440
  %v2979 = vmul.f32 %v2827, %v2441
  %v2980 = vmul.f32 %v2828, %v2442
  %v2981 = vmul.f32 %v2829, %v2625
  %v2982 = vmul.f32 %v2830, %v2626
  %v2983 = vmul.f32 %v2831, %v2627
  %v2984 = vmul.f32 %v2832, %v2628
  %v2985 = vmul.f32 %v2833, %v2629
  %v2986 = vmul.f32 %v2834, %v2630
  %v2987 = vmul.f32 %v2835, %v2631
  %v2988 = vmul.f32 %v2836, %v2632
  %v2989 = vmul.f32 %v2837, %v2805
  %v2990 = vmul.f32 %v2838, %v2806
  %v2991 = vmul.f32 %v2839, %v2807
  %v2992 = vmul.f32 %v2840, %v2808
  %v2993 = vmul.f32 %v2841, %v2809
  %v2994 = vmul.f32 %v2842, %v2810
  %v2995 = vmul.f32 %v2843, %v2811
  %v2996 = vmul.f32 %v2844, %v2812
  %v2997 = vmul.f32 %v2845, %v2813
  %v2998 = vmul.f32 %v2846, %v2814
  %v2999 = vmul.f32 %v2847, %v2815
  %v3000 = vmul.f32 %v2848, %v2816
  %v3001 = vmul.f32 %v2849, %v2817
  %v3002 = vmul.f32 %v2850, %v2818
  %v3003 = vmul.f32 %v2851, %v2819
  %v3004 = vmul.f32 %v2852, %v2820
  %v3005 = vmul.f32 %v2805, 0.0
  %v3006 = vmul.f32 %v2806, 0.0
  %v3007 = vmul.f32 %v2807, 0.0
  %v3008 = vmul.f32 %v2808, 0.0
  %v3009 = vmul.f32 %v2809, 0.0
  %v3010 = vmul.f32 %v2810, 0.0
  %v3011 = vmul.f32 %v2811, 0.0
  %v3012 = vmul.f32 %v2812, 0.0
  %v3013 = vmul.f32 %v2813, 0.0
  %v3014 = vmul.f32 %v2814, 0.0
  %v3015 = vmul.f32 %v2815, 0.0
  %v3016 = vmul.f32 %v2816, 0.0
  %v3017 = vmul.f32 %v2817, 0.0
  %v3018 = vmul.f32 %v2818, 0.0
  %v3019 = vmul.f32 %v2819, 0.0
  %v3020 = vmul.f32 %v2820, 0.0
  %v3021 = vmul.f32 %v2821, %v2909
  %v3022 = vmul.f32 %v2822, %v2910
  %v3023 = vmul.f32 %v2823, %v2911
  %v3024 = vmul.f32 %v2824, %v2912
  %v3025 = vmul.f32 %v2825, %v2913
  %v3026 = vmul.f32 %v2826, %v2914
  %v3027 = vmul.f32 %v2827, %v2915
  %v3028 = vmul.f32 %v2828, %v2916
  %v3029 = vmul.f32 %v2829, %v2917
  %v3030 = vmul.f32 %v2830, %v2918
  %v3031 = vmul.f32 %v2831, %v2919
  %v3032 = vmul.f32 %v2832, %v2920
  %v3033 = vmul.f32 %v2833, %v2921
  %v3034 = vmul.f32 %v2834, %v2922
  %v3035 = vmul.f32 %v2835, %v2923
  %v3036 = vmul.f32 %v2836, %v2924
  %v3037 = vmul.f32 %v2837, %v2925
  %v3038 = vmul.f32 %v2838, %v2926
  %v3039 = vmul.f32 %v2839, %v2927
  %v3040 = vmul.f32 %v2840, %v2928
  %v3041 = vmul.f32 %v2841, %v2929
  %v3042 = vmul.f32 %v2842, %v2930
  %v3043 = vmul.f32 %v2843, %v2931
  %v3044 = vmul.f32 %v2844, %v2932
  %v3045 = vmul.f32 %v2845, %v2933
  %v3046 = vmul.f32 %v2846, %v2934
  %v3047 = vmul.f32 %v2847, %v2935
  %v3048 = vmul.f32 %v2848, %v2936
  %v3049 = vmul.f32 %v2849, %v2937
  %v3050 = vmul.f32 %v2850, %v2938
  %v3051 = vmul.f32 %v2851, %v2939
  %v3052 = vmul.f32 %v2852, %v2940
  %v3053 = vadd.f32 %v2122, %v2909
  %v3054 = vadd.f32 %v2312, %v2910
  %v3055 = vadd.f32 %v2499, %v2911
  %v3056 = vadd.f32 %v2500, %v2912
  %v3057 = vadd.f32 %v2681, %v2913
  %v3058 = vadd.f32 %v2682, %v2914
  %v3059 = vadd.f32 %v2683, %v2915
  %v3060 = vadd.f32 %v2684, %v2916
  %v3061 = vadd.f32 %v2853, %v2917
  %v3062 = vadd.f32 %v2854, %v2918
  %v3063 = vadd.f32 %v2855, %v2919
  %v3064 = vadd.f32 %v2856, %v2920
  %v3065 = vadd.f32 %v2857, %v2921
  %v3066 = vadd.f32 %v2858, %v2922
  %v3067 = vadd.f32 %v2859, %v2923
  %v3068 = vadd.f32 %v2860, %v2924
  %v3069 = vadd.f32 %v3005, %v2925
  %v3070 = vadd.f32 %v3006, %v2926
  %v3071 = vadd.f32 %v3007, %v2927
  %v3072 = vadd.f32 %v3008, %v2928
  %v3073 = vadd.f32 %v3009, %v2929
  %v3074 = vadd.f32 %v3010, %v2930
  %v3075 = vadd.f32 %v3011, %v2931
  %v3076 = vadd.f32 %v3012, %v2932
  %v3077 = vadd.f32 %v3013, %v2933
  %v3078 = vadd.f32 %v3014, %v2934
  %v3079 = vadd.f32 %v3015, %v2935
  %v3080 = vadd.f32 %v3016, %v2936
  %v3081 = vadd.f32 %v3017, %v2937
  %v3082 = vadd.f32 %v3018, %v2938
  %v3083 = vadd.f32 %v3019, %v2939
  %v3084 = vadd.f32 %v3020, %v2940
  %v3085 = vadd.f32 %v3021, %v2941
  %v3086 = vadd.f32 %v3022, %v2942
  %v3087 = vadd.f32 %v3023, %v2943
  %v3088 = vadd.f32 %v3024, %v2944
  %v3089 = vadd.f32 %v3025, %v2945
  %v3090 = vadd.f32 %v3026, %v2946
  %v3091 = vadd.f32 %v3027, %v2947
  %v3092 = vadd.f32 %v3028, %v2948
  %v3093 = vadd.f32 %v3029, %v2949
  %v3094 = vadd.f32 %v3030, %v2950
  %v3095 = vadd.f32 %v3031, %v2951
  %v3096 = vadd.f32 %v3032, %v2952
  %v3097 = vadd.f32 %v3033, %v2953
  %v3098 = vadd.f32 %v3034, %v2954
  %v3099 = vadd.f32 %v3035, %v2955
  %v3100 = vadd.f32 %v3036, %v2956
  %v3101 = vadd.f32 %v3037, %v2957
  %v3102 = vadd.f32 %v3038, %v2958
  %v3103 = vadd.f32 %v3039, %v2959
  %v3104 = vadd.f32 %v3040, %v2960
  %v3105 = vadd.f32 %v3041, %v2961
  %v3106 = vadd.f32 %v3042, %v2962
  %v3107 = vadd.f32 %v3043, %v2963
  %v3108 = vadd.f32 %v3044, %v2964
  %v3109 = vadd.f32 %v3045, %v2965
  %v3110 = vadd.f32 %v3046, %v2966
  %v3111 = vadd.f32 %v3047, %v2967
  %v3112 = vadd.f32 %v3048, %v2968
  %v3113 = vadd.f32 %v3049, %v2969
  %v3114 = vadd.f32 %v3050, %v2970
  %v3115 = vadd.f32 %v3051, %v2971
  %v3116 = vadd.f32 %v3052, %v2972
  %v3117 = vld [vmem:[#allocation2] sm:$0xff]
  %v3118 = vmul.f32 %v1164, %v3117
  %v3119 = vmul.f32 %v2059, %v3117
  %v3120 = vmul.f32 %v2250, %v3117
  %v3121 = vmul.f32 %v2251, %v3117
  %v3122 = vmul.f32 %v2439, %v3117
  %v3123 = vmul.f32 %v2440, %v3117
  %v3124 = vmul.f32 %v2441, %v3117
  %v3125 = vmul.f32 %v2442, %v3117
  %v3126 = vmul.f32 %v2625, %v3117
  %v3127 = vmul.f32 %v2626, %v3117
  %v3128 = vmul.f32 %v2627, %v3117
  %v3129 = vmul.f32 %v2628, %v3117
  %v3130 = vmul.f32 %v2629, %v3117
  %v3131 = vmul.f32 %v2630, %v3117
  %v3132 = vmul.f32 %v2631, %v3117
  %v3133 = vmul.f32 %v2632, %v3117
  %v3134 = vmul.f32 %v2805, %v3117
  %v3135 = vmul.f32 %v2806, %v3117
  %v3136 = vmul.f32 %v2807, %v3117
  %v3137 = vmul.f32 %v2808, %v3117
  %v3138 = vmul.f32 %v2809, %v3117
  %v3139 = vmul.f32 %v2810, %v3117
  %v3140 = vmul.f32 %v2811, %v3117
  %v3141 = vmul.f32 %v2812, %v3117
  %v3142 = vmul.f32 %v2813, %v3117
  %v3143 = vmul.f32 %v2814, %v3117
  %v3144 = vmul.f32 %v2815, %v3117
  %v3145 = vmul.f32 %v2816, %v3117
  %v3146 = vmul.f32 %v2817, %v3117
  %v3147 = vmul.f32 %v2818, %v3117
  %v3148 = vmul.f32 %v2819, %v3117
  %v3149 = vmul.f32 %v2820, %v3117
  %v3150 = vmul.f32 %v2973, %v3117
  %v3151 = vmul.f32 %v2974, %v3117
  %v3152 = vmul.f32 %v2975, %v3117
  %v3153 = vmul.f32 %v2976, %v3117
  %v3154 = vmul.f32 %v2977, %v3117
  %v3155 = vmul.f32 %v2978, %v3117
  %v3156 = vmul.f32 %v2979, %v3117
  %v3157 = vmul.f32 %v2980, %v3117
  %v3158 = vmul.f32 %v2981, %v3117
  %v3159 = vmul.f32 %v2982, %v3117
  %v3160 = vmul.f32 %v2983, %v3117
  %v3161 = vmul.f32 %v2984, %v3117
  %v3162 = vmul.f32 %v2985, %v3117
  %v3163 = vmul.f32 %v2986, %v3117
  %v3164 = vmul.f32 %v2987, %v3117
  %v3165 = vmul.f32 %v2988, %v3117
  %v3166 = vmul.f32 %v2989, %v3117
  %v3167 = vmul.f32 %v2990, %v3117
  %v3168 = vmul.f32 %v2991, %v3117
  %v3169 = vmul.f32 %v2992, %v3117
  %v3170 = vmul.f32 %v2993, %v3117
  %v3171 = vmul.f32 %v2994, %v3117
  %v3172 = vmul.f32 %v2995, %v3117
  %v3173 = vmul.f32 %v2996, %v3117
  %v3174 = vmul.f32 %v2997, %v3117
  %v3175 = vmul.f32 %v2998, %v3117
  %v3176 = vmul.f32 %v2999, %v3117
  %v3177 = vmul.f32 %v3000, %v3117
  %v3178 = vmul.f32 %v3001, %v3117
  %v3179 = vmul.f32 %v3002, %v3117
  %v3180 = vmul.f32 %v3003, %v3117
  %v3181 = vmul.f32 %v3004, %v3117
  %v3182 = vadd.f32 %v3118, %v3053
  %v3183 = vadd.f32 %v3119, %v3054
  %v3184 = vadd.f32 %v3120, %v3055
  %v3185 = vadd.f32 %v3121, %v3056
  %v3186 = vadd.f32 %v3122, %v3057
  %v3187 = vadd.f32 %v3123, %v3058
  %v3188 = vadd.f32 %v3124, %v3059
  %v3189 = vadd.f32 %v3125, %v3060
  %v3190 = vadd.f32 %v3126, %v3061
  %v3191 = vadd.f32 %v3127, %v3062
  %v3192 = vadd.f32 %v3128, %v3063
  %v3193 = vadd.f32 %v3129, %v3064
  %v3194 = vadd.f32 %v3130, %v3065
  %v3195 = vadd.f32 %v3131, %v3066
  %v3196 = vadd.f32 %v3132, %v3067
  %v3197 = vadd.f32 %v3133, %v3068
  %v3198 = vadd.f32 %v3134, %v3069
  %v3199 = vadd.f32 %v3135, %v3070
  %v3200 = vadd.f32 %v3136, %v3071
  %v3201 = vadd.f32 %v3137, %v3072
  %v3202 = vadd.f32 %v3138, %v3073
  %v3203 = vadd.f32 %v3139, %v3074
  %v3204 = vadd.f32 %v3140, %v3075
  %v3205 = vadd.f32 %v3141, %v3076
  %v3206 = vadd.f32 %v3142, %v3077
  %v3207 = vadd.f32 %v3143, %v3078
  %v3208 = vadd.f32 %v3144, %v3079
  %v3209 = vadd.f32 %v3145, %v3080
  %v3210 = vadd.f32 %v3146, %v3081
  %v3211 = vadd.f32 %v3147, %v3082
  %v3212 = vadd.f32 %v3148, %v3083
  %v3213 = vadd.f32 %v3149, %v3084
  %v3214 = vadd.f32 %v3150, %v3085
  %v3215 = vadd.f32 %v3151, %v3086
  %v3216 = vadd.f32 %v3152, %v3087
  %v3217 = vadd.f32 %v3153, %v3088
  %v3218 = vadd.f32 %v3154, %v3089
  %v3219 = vadd.f32 %v3155, %v3090
  %v3220 = vadd.f32 %v3156, %v3091
  %v3221 = vadd.f32 %v3157, %v3092
  %v3222 = vadd.f32 %v3158, %v3093
  %v3223 = vadd.f32 %v3159, %v3094
  %v3224 = vadd.f32 %v3160, %v3095
  %v3225 = vadd.f32 %v3161, %v3096
  %v3226 = vadd.f32 %v3162, %v3097
  %v3227 = vadd.f32 %v3163, %v3098
  %v3228 = vadd.f32 %v3164, %v3099
  %v3229 = vadd.f32 %v3165, %v3100
  %v3230 = vadd.f32 %v3166, %v3101
  %v3231 = vadd.f32 %v3167, %v3102
  %v3232 = vadd.f32 %v3168, %v3103
  %v3233 = vadd.f32 %v3169, %v3104
  %v3234 = vadd.f32 %v3170, %v3105
  %v3235 = vadd.f32 %v3171, %v3106
  %v3236 = vadd.f32 %v3172, %v3107
  %v3237 = vadd.f32 %v3173, %v3108
  %v3238 = vadd.f32 %v3174, %v3109
  %v3239 = vadd.f32 %v3175, %v3110
  %v3240 = vadd.f32 %v3176, %v3111
  %v3241 = vadd.f32 %v3177, %v3112
  %v3242 = vadd.f32 %v3178, %v3113
  %v3243 = vadd.f32 %v3179, %v3114
  %v3244 = vadd.f32 %v3180, %v3115
  %v3245 = vadd.f32 %v3181, %v3116
  %3246 = vst [vmem:[%s4] sm:$0xff] %v3182
  %3247 = vst [vmem:[%s4 + $0x8] sm:$0xff] %v3183
  %3248 = vst [vmem:[%s4 + $0x10] sm:$0xff] %v3184
  %3249 = vst [vmem:[%s4 + $0x18] sm:$0xff] %v3185
  %3250 = vst [vmem:[%s4 + $0x20] sm:$0xff] %v3186
  %3251 = vst [vmem:[%s4 + $0x28] sm:$0xff] %v3187
  %3252 = vst [vmem:[%s4 + $0x30] sm:$0xff] %v3188
  %3253 = vst [vmem:[%s4 + $0x38] sm:$0xff] %v3189
  %3254 = vst [vmem:[%s4 + $0x40] sm:$0xff] %v3190
  %3255 = vst [vmem:[%s4 + $0x48] sm:$0xff] %v3191
  %3256 = vst [vmem:[%s4 + $0x50] sm:$0xff] %v3192
  %3257 = vst [vmem:[%s4 + $0x58] sm:$0xff] %v3193
  %3258 = vst [vmem:[%s4 + $0x60] sm:$0xff] %v3194
  %3259 = vst [vmem:[%s4 + $0x68] sm:$0xff] %v3195
  %3260 = vst [vmem:[%s4 + $0x70] sm:$0xff] %v3196
  %3261 = vst [vmem:[%s4 + $0x78] sm:$0xff] %v3197
  %3262 = vst [vmem:[%s4 + $0x80] sm:$0xff] %v3198
  %3263 = vst [vmem:[%s4 + $0x88] sm:$0xff] %v3199
  %3264 = vst [vmem:[%s4 + $0x90] sm:$0xff] %v3200
  %3265 = vst [vmem:[%s4 + $0x98] sm:$0xff] %v3201
  %3266 = vst [vmem:[%s4 + $0xa0] sm:$0xff] %v3202
  %3267 = vst [vmem:[%s4 + $0xa8] sm:$0xff] %v3203
  %3268 = vst [vmem:[%s4 + $0xb0] sm:$0xff] %v3204
  %3269 = vst [vmem:[%s4 + $0xb8] sm:$0xff] %v3205
  %3270 = vst [vmem:[%s4 + $0xc0] sm:$0xff] %v3206
  %3271 = vst [vmem:[%s4 + $0xc8] sm:$0xff] %v3207
  %3272 = vst [vmem:[%s4 + $0xd0] sm:$0xff] %v3208
  %3273 = vst [vmem:[%s4 + $0xd8] sm:$0xff] %v3209
  %3274 = vst [vmem:[%s4 + $0xe0] sm:$0xff] %v3210
  %3275 = vst [vmem:[%s4 + $0xe8] sm:$0xff] %v3211
  %3276 = vst [vmem:[%s4 + $0xf0] sm:$0xff] %v3212
  %3277 = vst [vmem:[%s4 + $0xf8] sm:$0xff] %v3213
  %3278 = vst [vmem:[%s4 + $0x100] sm:$0xff] %v3214
  %3279 = vst [vmem:[%s4 + $0x108] sm:$0xff] %v3215
  %3280 = vst [vmem:[%s4 + $0x110] sm:$0xff] %v3216
  %3281 = vst [vmem:[%s4 + $0x118] sm:$0xff] %v3217
  %3282 = vst [vmem:[%s4 + $0x120] sm:$0xff] %v3218
  %3283 = vst [vmem:[%s4 + $0x128] sm:$0xff] %v3219
  %3284 = vst [vmem:[%s4 + $0x130] sm:$0xff] %v3220
  %3285 = vst [vmem:[%s4 + $0x138] sm:$0xff] %v3221
  %3286 = vst [vmem:[%s4 + $0x140] sm:$0xff] %v3222
  %3287 = vst [vmem:[%s4 + $0x148] sm:$0xff] %v3223
  %3288 = vst [vmem:[%s4 + $0x150] sm:$0xff] %v3224
  %3289 = vst [vmem:[%s4 + $0x158] sm:$0xff] %v3225
  %3290 = vst [vmem:[%s4 + $0x160] sm:$0xff] %v3226
  %3291 = vst [vmem:[%s4 + $0x168] sm:$0xff] %v3227
  %3292 = vst [vmem:[%s4 + $0x170] sm:$0xff] %v3228
  %3293 = vst [vmem:[%s4 + $0x178] sm:$0xff] %v3229
  %3294 = vst [vmem:[%s4 + $0x180] sm:$0xff] %v3230
  %3295 = vst [vmem:[%s4 + $0x188] sm:$0xff] %v3231
  %3296 = vst [vmem:[%s4 + $0x190] sm:$0xff] %v3232
  %3297 = vst [vmem:[%s4 + $0x198] sm:$0xff] %v3233
  %3298 = vst [vmem:[%s4 + $0x1a0] sm:$0xff] %v3234
  %3299 = vst [vmem:[%s4 + $0x1a8] sm:$0xff] %v3235
  %3300 = vst [vmem:[%s4 + $0x1b0] sm:$0xff] %v3236
  %3301 = vst [vmem:[%s4 + $0x1b8] sm:$0xff] %v3237
  %3302 = vst [vmem:[%s4 + $0x1c0] sm:$0xff] %v3238
  %3303 = vst [vmem:[%s4 + $0x1c8] sm:$0xff] %v3239
  %3304 = vst [vmem:[%s4 + $0x1d0] sm:$0xff] %v3240
  %3305 = vst [vmem:[%s4 + $0x1d8] sm:$0xff] %v3241
  %3306 = vst [vmem:[%s4 + $0x1e0] sm:$0xff] %v3242
  %3307 = vst [vmem:[%s4 + $0x1e8] sm:$0xff] %v3243
  %3308 = vst [vmem:[%s4 + $0x1f0] sm:$0xff] %v3244
  %3309 = vst [vmem:[%s4 + $0x1f8] sm:$0xff] %v3245
  %3310 = vst [vmem:[#allocation2] sm:$0xff] %v3245
  // Predicated region
  $region22: #{rglru_forward.1} parent=0 // pred_check
    _
  $region23: #{rglru_forward.1} parent=0 // pred_check_branch
    %3312 = sbr.rel (0) target = $region25
  $region24: #{rglru_forward.1} parent=0 // pred_region
    _
  $region25: #{rglru_forward.1} parent=0 // pred_fallthru
    _
  // Predicated region
  $region26: #{rglru_forward.1} parent=0 // pred_check
    _
  $region27: #{rglru_forward.1} parent=0 // pred_check_branch
    %3314 = sbr.rel (0) target = $region29
  $region28: #{rglru_forward.1} parent=0 // pred_region
    _
  $region29: #{rglru_forward.1} parent=0 // pred_fallthru
    _

</llo_original>
